<compile_context>
chip_gen: v7x
topology: tpu7x:2x2x1
jax: 0.10.0
libtpu: 0.0.40
codegen_flags: <defaults>
</compile_context>

<pallas_src>
import functools

import jax
import jax.numpy as jnp
from jax.experimental import pallas as pl
from jax.experimental.pallas import tpu as pltpu


# ----------------------------------------------------------------------------
# Per-generation VMEM budget and tile selection
# ----------------------------------------------------------------------------
def _vmem_limit_bytes():
    """~3/4 of physical VMEM, capped at 96 MiB.

    v5e/v6e (128 MiB physical) -> 96 MiB, v7x (64 MiB) -> 48 MiB.  Falls back
    to the v7x-safe 48 MiB if the hardware query is unavailable.
    """
    cap = 64 * 1024 * 1024
    try:
        v = int(getattr(pltpu.get_tpu_info(), "vmem_capacity_bytes", 0))
        if v > 0:
            cap = v
    except Exception:
        pass
    return int(min(cap * 3 // 4, 96 * 1024 * 1024))


def _pick_time_tile(span, n_nodes, row_bytes, vmem_budget, target_rows=512):
    """Largest divisor `tt` of `span` whose (tt*n_nodes)-row slab fits the VMEM
    budget (double-buffered in/out + working set); stops growing once
    tt*n_nodes reaches `target_rows` (MXU M dim is saturated by then)."""
    if n_nodes % 8 != 0:
        return 1  # keeps the in-kernel (tt*Nn, F) reshape layout-free
    best = 1
    for tt in range(1, span + 1):
        if span % tt:
            continue
        if 6 * tt * n_nodes * row_bytes > vmem_budget:
            break
        best = tt
        if tt * n_nodes >= target_rows:
            break
    return best


# ----------------------------------------------------------------------------
# Pallas kernels
# ----------------------------------------------------------------------------
def _encoder_kernel(x_ref, w1_ref, b1_ref, w2_ref, b2_ref, wr_ref, br_ref,
                    emb_ref, out_ref):
    """Fused encoder MLP + node embedding on a time-folded (Tt*Nn, Fin) slab."""
    _, tt, n_nodes, f_in = x_ref.shape
    x = x_ref[0].reshape(tt * n_nodes, f_in)                    # M = Tt*Nn
    h = jnp.dot(x.astype(jnp.bfloat16), w1_ref[...],
                preferred_element_type=jnp.float32) + b1_ref[...]
    h = h * jax.nn.sigmoid(h)                                   # silu (EUP)
    h = jnp.dot(h.astype(jnp.bfloat16), w2_ref[...],
                preferred_element_type=jnp.float32) + b2_ref[...]
    h = h * jax.nn.sigmoid(h)
    h = jnp.dot(h.astype(jnp.bfloat16), wr_ref[...],
                preferred_element_type=jnp.float32) + br_ref[...]
    h = h.reshape(tt, n_nodes, -1) + emb_ref[...]               # node emb, bcast over t
    out_ref[0] = h.astype(out_ref.dtype)


def _spatial_adj_kernel(emb_ref, adj_ref):
    """adj = softmax(relu(E @ E.T), -1); adj = adj + adj.T   (fused, runs once)."""
    e = emb_ref[...]
    logits = jnp.maximum(
        jnp.dot(e, e.T, preferred_element_type=jnp.float32), 0.0)
    m = jnp.max(logits, axis=-1, keepdims=True)
    p = jnp.exp(logits - m)
    sm = p / jnp.sum(p, axis=-1, keepdims=True)   # exact divide (review fix)
    adj = sm + sm.T
    adj_ref[...] = adj.astype(adj_ref.dtype)


def _block_stack_kernel(res_ref, last_ref, adj_ref, ws_ref, bs_ref, wt_ref,
                        bt_ref, fc_ref):
    """All GraphNBeatsBlocks fused, on one (Tt, Nn, H) slab of the forecast
    window.  Residual slab and forecast accumulator stay in VMEM across the
    whole block stack (no HBM round trips between blocks).

    res_ref holds encoder output in NATURAL time order; forecast step j uses
    enc time horizon-1-j, realized by the tile-level index_map plus the
    reversed write at the end.
    """
    n_blocks, n_spatial = ws_ref.shape[0], ws_ref.shape[1]
    _, tt, n_nodes, hidden = res_ref.shape

    adj = adj_ref[...]                                     # (Nn, Nn) bf16
    init = last_ref[0, 0]                                  # (Nn, H) f32 = enc[:, T-1]
    r = res_ref[0].reshape(tt * n_nodes, hidden)           # residual slab, f32
    acc = jnp.zeros_like(r)                                # sum of block forecasts

    for blk in range(n_blocks):
        h = r
        for l in range(n_spatial):
            # Node mixing: per-time (Nn,Nn)@(Nn,H) dots (M=Nn fills the MXU at
            # real model sizes; tt is small).  Feature matmul below is batched
            # over time so its M = Tt*Nn.
            h3 = h.reshape(tt, n_nodes, hidden)
            mixed = jnp.concatenate(
                [jnp.dot(adj, h3[k].astype(jnp.bfloat16),
                         preferred_element_type=jnp.float32)
                 for k in range(tt)], axis=0)              # (Tt*Nn, H)
            h = jnp.dot(mixed.astype(jnp.bfloat16), ws_ref[blk, l],
                        preferred_element_type=jnp.float32) + bs_ref[blk, l]
            h = jnp.maximum(h, 0.0)
        theta = jnp.dot(h.astype(jnp.bfloat16), wt_ref[blk],
                        preferred_element_type=jnp.float32) + bt_ref[blk]
        r = r - theta                                      # backcast update
        acc = acc + theta                                  # forecast contribution

    out = acc.reshape(tt, n_nodes, hidden)
    # forecast[j] = enc[:, T-1] + sum_blocks theta(enc[:, horizon-1-j]):
    # local enc index k -> local forecast index tt-1-k (within-tile flip).
    for k in range(tt):
        fc_ref[0, tt - 1 - k] = (init + out[k]).astype(fc_ref.dtype)


def _decoder_kernel(x_ref, *refs, n_hidden):
    """Fused MLP decoder: n_hidden x Dense(relu) + linear readout on a row tile."""
    out_ref = refs[-1]
    wbs = refs[:-1]
    h = x_ref[...]
    for i in range(n_hidden):
        h = jnp.dot(h.astype(jnp.bfloat16), wbs[2 * i][...],
                    preferred_element_type=jnp.float32) + wbs[2 * i + 1][...]
        h = jnp.maximum(h, 0.0)
    y = jnp.dot(h.astype(jnp.bfloat16), wbs[2 * n_hidden][...],
                preferred_element_type=jnp.float32) + wbs[2 * n_hidden + 1][...]
    out_ref[...] = y.astype(out_ref.dtype)


# ----------------------------------------------------------------------------
# Wrappers (grid / BlockSpec plumbing)
# ----------------------------------------------------------------------------
def encoder_apply(x, enc_params, emb):
    """Fused encoder; output is enc(x)+emb in natural time order (B, T, Nn, H)."""
    B, T, Nn, Fin = x.shape
    (w1, b1), (w2, b2), (wr, br) = enc_params
    H = wr.shape[1]
    vmem = _vmem_limit_bytes()
    tt = _pick_time_tile(T, Nn, row_bytes=4 * (Fin + 2 * H), vmem_budget=vmem // 2)
    nT = T // tt
    cost = pl.CostEstimate(
        flops=int(2 * B * T * Nn * (Fin * H + 2 * H * H)),
        transcendentals=int(2 * B * T * Nn * H),
        bytes_accessed=int(4 * B * T * Nn * (Fin + H)
                           + 2 * (Fin * H + 2 * H * H) + 4 * (3 * H + Nn * H)),
    )
    return pl.pallas_call(
        _encoder_kernel,
        out_shape=jax.ShapeDtypeStruct((B, T, Nn, H), jnp.float32),
        grid=(B, nT),
        in_specs=[
            pl.BlockSpec((1, tt, Nn, Fin), lambda b, t: (b, t, 0, 0)),
            pl.BlockSpec((Fin, H), lambda b, t: (0, 0)),     # resident weights
            pl.BlockSpec((1, H), lambda b, t: (0, 0)),
            pl.BlockSpec((H, H), lambda b, t: (0, 0)),
            pl.BlockSpec((1, H), lambda b, t: (0, 0)),
            pl.BlockSpec((H, H), lambda b, t: (0, 0)),
            pl.BlockSpec((1, H), lambda b, t: (0, 0)),
            pl.BlockSpec((Nn, H), lambda b, t: (0, 0)),
        ],
        out_specs=pl.BlockSpec((1, tt, Nn, H), lambda b, t: (b, t, 0, 0)),
        compiler_params=pltpu.CompilerParams(
            dimension_semantics=("parallel", "parallel"),
            vmem_limit_bytes=vmem),
        cost_estimate=cost,
    )(x, w1, b1, w2, b2, wr, br, emb)


def pallas_spatial_adj(emb):
    Nn, H = emb.shape
    return pl.pallas_call(
        _spatial_adj_kernel,
        out_shape=jax.ShapeDtypeStruct((Nn, Nn), jnp.bfloat16),
        grid=(1,),
        in_specs=[pl.BlockSpec((Nn, H), lambda i: (0, 0))],
        out_specs=pl.BlockSpec((Nn, Nn), lambda i: (0, 0)),
        compiler_params=pltpu.CompilerParams(
            dimension_semantics=("arbitrary",),
            vmem_limit_bytes=_vmem_limit_bytes()),
    )(emb)


def block_stack_apply(enc, adj, blocks, horizon):
    """All GraphNBeatsBlocks in one pallas_call; returns forecast (B,horizon,Nn,H).

    Only the forecast window (flipped-time steps T-horizon..T-1, i.e. enc times
    0..horizon-1) is processed: the block stack has no temporal mixing and
    forward() only consumes `forecast`, so the remaining timesteps' backcast is
    dead code for this output and is skipped (result is identical).
    """
    B, T, Nn, H = enc.shape
    nb, L = blocks["ws"].shape[:2]
    vmem = _vmem_limit_bytes()
    resident = (blocks["ws"].size * 2 + blocks["bs"].size * 4 +
                blocks["wt"].size * 2 + blocks["bt"].size * 4 +
                Nn * Nn * 2 + Nn * H * 4)
    slab_budget = max(vmem - 2 * resident, vmem // 4)
    tt = _pick_time_tile(horizon, Nn, row_bytes=4 * 4 * H, vmem_budget=slab_budget)
    n_fc = horizon // tt

    cost = pl.CostEstimate(
        flops=int(2 * B * horizon * nb * (L * (Nn * Nn * H + Nn * H * H)
                                          + Nn * H * H)),
        transcendentals=0,
        bytes_accessed=int(4 * B * horizon * Nn * H * 2
                           + 4 * B * n_fc * Nn * H + resident),
    )
    return pl.pallas_call(
        _block_stack_kernel,
        out_shape=jax.ShapeDtypeStruct((B, horizon, Nn, H), jnp.float32),
        grid=(B, n_fc),
        in_specs=[
            # enc slab for forecast tile j: enc-time block (n_fc-1-j) -- time
            # flip at tile granularity; within-tile flip happens at the write.
            pl.BlockSpec((1, tt, Nn, H), lambda b, j: (b, n_fc - 1 - j, 0, 0)),
            # enc[:, T-1]: forecast initializer (replaces the HBM broadcast_to).
            pl.BlockSpec((1, 1, Nn, H), lambda b, j: (b, T - 1, 0, 0)),
            pl.BlockSpec((Nn, Nn), lambda b, j: (0, 0)),              # adj resident
            pl.BlockSpec((nb, L, H, H), lambda b, j: (0, 0, 0, 0)),   # all block Ws
            pl.BlockSpec((nb, L, 1, H), lambda b, j: (0, 0, 0, 0)),
            pl.BlockSpec((nb, H, H), lambda b, j: (0, 0, 0)),
            pl.BlockSpec((nb, 1, H), lambda b, j: (0, 0, 0)),
        ],
        # Disjoint forecast tiles -> no revisit; both grid axes are parallel.
        out_specs=pl.BlockSpec((1, tt, Nn, H), lambda b, j: (b, j, 0, 0)),
        compiler_params=pltpu.CompilerParams(
            dimension_semantics=("parallel", "parallel"),
            vmem_limit_bytes=vmem),
        cost_estimate=cost,
    )(enc, enc, adj, blocks["ws"], blocks["bs"], blocks["wt"], blocks["bt"])


def mlp_decoder(forecast, dec_params, horizon, out_features):
    B, _, Nn, H = forecast.shape
    # 'b t n f -> b n (t f)' on the last `horizon` steps (small wrapper-side op,
    # as in the reference module).
    h = forecast[:, -horizon:]
    h = jnp.transpose(h, (0, 2, 1, 3)).reshape(B * Nn, horizon * H)
    rows, DH = h.shape

    wbs = []
    for (w, b) in dec_params["mlp"]:
        wbs.extend([w, b])
    wr, br = dec_params["readout"]
    n_hidden = len(dec_params["mlp"])
    dout = wr.shape[1]
    # Pad readout columns to a multiple of 128 so the HBM store is lane-dense
    # (unmasked vst); padded columns are sliced off in the wrapper.
    dout_pad = max(128, pl.cdiv(dout, 128) * 128)
    if dout_pad != dout:
        wr = jnp.pad(wr, ((0, 0), (0, dout_pad - dout)))
        br = jnp.pad(br, ((0, 0), (0, dout_pad - dout)))
    wbs.extend([wr, br])

    # Row tiling capped at 512; ragged tail handled via a cdiv grid with a
    # masked final tile (no single-giant-tile fallback).
    row_tile = rows if rows <= 512 else 512
    grid = (pl.cdiv(rows, row_tile),)

    in_specs = [pl.BlockSpec((row_tile, DH), lambda i: (i, 0))]
    for p in wbs:
        in_specs.append(pl.BlockSpec(p.shape, lambda i: (0, 0)))  # resident

    flops = 0
    for j in range(0, len(wbs), 2):
        flops += 2 * rows * wbs[j].shape[0] * wbs[j].shape[1]
    cost = pl.CostEstimate(
        flops=int(flops), transcendentals=0,
        bytes_accessed=int(4 * rows * (DH + dout_pad)
                           + sum(2 * int(p.size) for p in wbs)))

    y = pl.pallas_call(
        functools.partial(_decoder_kernel, n_hidden=n_hidden),
        out_shape=jax.ShapeDtypeStruct((rows, dout_pad), jnp.float32),
        grid=grid,
        in_specs=in_specs,
        out_specs=pl.BlockSpec((row_tile, dout_pad), lambda i: (i, 0)),
        compiler_params=pltpu.CompilerParams(
            dimension_semantics=("parallel",),
            vmem_limit_bytes=_vmem_limit_bytes()),
        cost_estimate=cost,
    )(h, *wbs)

    y = y[:, :dout]
    # 'b n (h f) -> b h n f'
    return y.reshape(B, Nn, horizon, out_features).transpose(0, 2, 1, 3)


def graph_nbeats_forward(x, exog, params, *, horizon, out_features):
    del exog                                   # unused by the reference forward()
    B, T, Nn, _ = x.shape
    assert 1 <= horizon <= T, "horizon must lie within the input window"
    emb = params["emb"]                        # (Nn, H) f32

    # Encoder + node embedding, natural time order (no flipped copy is built).
    enc = encoder_apply(x, params["enc"], emb)                    # (B, T, Nn, H)
    adj = pallas_spatial_adj(emb)                                 # (Nn, Nn) bf16
    # Entire block stack fused; forecast init (enc[:, -1]) is read inside.
    forecast = block_stack_apply(enc, adj, params["blocks"], horizon)
    return mlp_decoder(forecast, params["readout"], horizon, out_features)


# ----------------------------------------------------------------------------
# Deterministic parameter construction
# ----------------------------------------------------------------------------
def _init_linear(key, fan_in, fan_out):
    kw, kb = jax.random.split(key)
    s = 1.0 / jnp.sqrt(jnp.float32(fan_in))
    w = jax.random.uniform(kw, (fan_in, fan_out), jnp.float32, -s, s)
    b = jax.random.uniform(kb, (1, fan_out), jnp.float32, -s, s)
    return w.astype(jnp.bfloat16), b           # bf16 MXU operands, f32 bias epilogue


def init_params(key, *, n_nodes, input_size, hidden_size, out_features,
                horizon, n_layers, spatial_block_size, dec_layers=5):
    keys = iter(jax.random.split(key, 256))
    params = {}
    # encoder MLP: Dense, Dense, Linear readout
    params["enc"] = [
        _init_linear(next(keys), input_size, hidden_size),
        _init_linear(next(keys), hidden_size, hidden_size),
        _init_linear(next(keys), hidden_size, hidden_size),
    ]
    # node embedding
    params["emb"] = jax.random.normal(next(keys), (n_nodes, hidden_size),
                                      jnp.float32) * 0.1
    # All block weights stacked along a leading "block" axis so the whole stack
    # rides one resident DMA into the fused block kernel.
    ws_all, bs_all, wt_all, bt_all = [], [], [], []
    for _ in range(n_layers):
        ws, bs = [], []
        for _ in range(spatial_block_size):
            w, b = _init_linear(next(keys), hidden_size, hidden_size)
            ws.append(w)
            bs.append(b)
        wt, bt = _init_linear(next(keys), hidden_size, hidden_size)
        ws_all.append(jnp.stack(ws, 0))
        bs_all.append(jnp.stack(bs, 0))
        wt_all.append(wt)
        bt_all.append(bt)
    params["blocks"] = {
        "ws": jnp.stack(ws_all, 0),            # (n_blocks, L, H, H) bf16
        "bs": jnp.stack(bs_all, 0),            # (n_blocks, L, 1, H) f32
        "wt": jnp.stack(wt_all, 0),            # (n_blocks, H, H) bf16
        "bt": jnp.stack(bt_all, 0),            # (n_blocks, 1, H) f32
    }
    # MLPDecoder readout
    dec_hidden = hidden_size * 2
    mlp = [_init_linear(next(keys), horizon * hidden_size, dec_hidden)]
    for _ in range(dec_layers - 1):
        mlp.append(_init_linear(next(keys), dec_hidden, dec_hidden))
    params["readout"] = {
        "mlp": mlp,
        "readout": _init_linear(next(keys), dec_hidden, horizon * out_features),
    }
    return params


# ----------------------------------------------------------------------------
# Demo
# ----------------------------------------------------------------------------
if __name__ == "__main__":
    # small, forward-consistent shapes
    B, T, Nn = 2, 8, 16          # batch, window, n_nodes
    Fin, H = 8, 32               # input_size, hidden_size
    out_features, horizon = 8, 4
    n_layers, spatial_block_size = 2, 2

    key = jax.random.PRNGKey(0)
    k_x, k_e, k_p = jax.random.split(key, 3)
    x = jax.random.normal(k_x, (B, T, Nn, Fin), jnp.float32)
    exog = jax.random.normal(k_e, (B, T, Nn, 2), jnp.float32)  # unused by forward

    params = init_params(
        k_p, n_nodes=Nn, input_size=Fin, hidden_size=H,
        out_features=out_features, horizon=horizon,
        n_layers=n_layers, spatial_block_size=spatial_block_size,
    )

    fwd = jax.jit(functools.partial(
        graph_nbeats_forward, horizon=horizon, out_features=out_features))
    out = jax.block_until_ready(fwd(x, exog, params))

    assert out.shape == (B, horizon, Nn, out_features), out.shape
    assert bool(jnp.all(jnp.isfinite(out)))
    print("KERNEL_OK")
</pallas_src>

<mosaic_0001>
module attributes {stable_mosaic.version = 11 : i64} {
  func.func @_spatial_adj_kernel(%arg0: i32, %arg1: memref<16x32xf32, #tpu.memory_space<vmem>>, %arg2: memref<16x16xbf16, #tpu.memory_space<vmem>>) attributes {dimension_semantics = [#tpu.dimension_semantics<arbitrary>], iteration_bounds = array<i64: 1>, scalar_prefetch = 0 : i64, scratch_operands = 0 : i64, tpu.core_type = #tpu.core_type<tc>, window_params = [{pipeline_mode = #tpu.pipeline_mode<synchronous>, transform_indices = @transform_0, window_bounds = array<i64: 16, 32>}, {pipeline_mode = #tpu.pipeline_mode<synchronous>, transform_indices = @transform_1, window_bounds = array<i64: 16, 16>}]} {
    %c0 = arith.constant 0 : index
    %c0_0 = arith.constant 0 : index
    %0 = vector.load %arg1[%c0, %c0_0] : memref<16x32xf32, #tpu.memory_space<vmem>>, vector<16x32xf32>
    %1 = tpu.transpose %0, [1, 0] : vector<16x32xf32> -> vector<32x16xf32>
    %cst = arith.constant dense<0.000000e+00> : vector<16x16xf32>
    %2 = tpu.matmul %0, %1, %cst {dimension_numbers = #tpu.dot_dimension_numbers<[1], [0], [0], [1], [0, 0, 1, 1], [], []>} : vector<16x32xf32>, vector<32x16xf32>, vector<16x16xf32> -> vector<16x16xf32>
    %cst_1 = arith.constant 0.000000e+00 : f32
    %3 = vector.broadcast %cst_1 : f32 to vector<16x16xf32>
    %4 = arith.maximumf %2, %3 : vector<16x16xf32>
    %cst_2 = arith.constant dense<0xFF800000> : vector<16xf32>
    %5 = vector.multi_reduction <maximumf>, %4, %cst_2 [1] : vector<16x16xf32> to vector<16xf32>
    %6 = vector.shape_cast %5 : vector<16xf32> to vector<16x1xf32>
    %7 = vector.broadcast %6 : vector<16x1xf32> to vector<16x16xf32>
    %8 = arith.subf %4, %7 : vector<16x16xf32>
    %9 = math.exp %8 : vector<16x16xf32>
    %cst_3 = arith.constant dense<0.000000e+00> : vector<16xf32>
    %10 = vector.multi_reduction <add>, %9, %cst_3 [1] : vector<16x16xf32> to vector<16xf32>
    %11 = vector.shape_cast %10 : vector<16xf32> to vector<16x1xf32>
    %12 = vector.broadcast %11 : vector<16x1xf32> to vector<16x16xf32>
    %13 = arith.divf %9, %12 : vector<16x16xf32>
    %14 = tpu.transpose %13, [1, 0] : vector<16x16xf32> -> vector<16x16xf32>
    %15 = arith.addf %13, %14 : vector<16x16xf32>
    %16 = arith.truncf %15 : vector<16x16xf32> to vector<16x16xbf16>
    %c0_4 = arith.constant 0 : index
    %c0_5 = arith.constant 0 : index
    %17 = vector.load %arg2[%c0_4, %c0_5] : memref<16x16xbf16, #tpu.memory_space<vmem>>, vector<16x16xbf16>
    tpu.vector_store %arg2[%c0_4, %c0_5], %16 {strides = array<i32>} : memref<16x16xbf16, #tpu.memory_space<vmem>>, vector<16x16xbf16>,
    return
  }
  func.func @transform_0(%arg0: i32) -> (i32, i32) {
    %c0_i32 = arith.constant 0 : i32
    %c0_i32_0 = arith.constant 0 : i32
    %c0_i32_1 = arith.constant 0 : i32
    return %c0_i32, %c0_i32_0 : i32, i32
  }
  func.func @transform_1(%arg0: i32) -> (i32, i32) {
    %c0_i32 = arith.constant 0 : i32
    %c0_i32_0 = arith.constant 0 : i32
    %c0_i32_1 = arith.constant 0 : i32
    return %c0_i32, %c0_i32_0 : i32, i32
  }
}

module attributes {stable_mosaic.version = 11 : i64} {
  func.func @_encoder_kernel(%arg0: i32, %arg1: i32, %arg2: memref<1x8x16x8xf32, #tpu.memory_space<vmem>>, %arg3: memref<8x32xbf16, #tpu.memory_space<vmem>>, %arg4: memref<1x32xf32, #tpu.memory_space<vmem>>, %arg5: memref<32x32xbf16, #tpu.memory_space<vmem>>, %arg6: memref<1x32xf32, #tpu.memory_space<vmem>>, %arg7: memref<32x32xbf16, #tpu.memory_space<vmem>>, %arg8: memref<1x32xf32, #tpu.memory_space<vmem>>, %arg9: memref<16x32xf32, #tpu.memory_space<vmem>>, %arg10: memref<1x8x16x32xf32, #tpu.memory_space<vmem>>) attributes {dimension_semantics = [#tpu.dimension_semantics<parallel>, #tpu.dimension_semantics<parallel>], iteration_bounds = array<i64: 2, 1>, scalar_prefetch = 0 : i64, scratch_operands = 0 : i64, tpu.core_type = #tpu.core_type<tc>, window_params = [{transform_indices = @transform_0, window_bounds = array<i64: 1, 8, 16, 8>}, {pipeline_mode = #tpu.pipeline_mode<synchronous>, transform_indices = @transform_1, window_bounds = array<i64: 8, 32>}, {pipeline_mode = #tpu.pipeline_mode<synchronous>, transform_indices = @transform_2, window_bounds = array<i64: 1, 32>}, {pipeline_mode = #tpu.pipeline_mode<synchronous>, transform_indices = @transform_3, window_bounds = array<i64: 32, 32>}, {pipeline_mode = #tpu.pipeline_mode<synchronous>, transform_indices = @transform_4, window_bounds = array<i64: 1, 32>}, {pipeline_mode = #tpu.pipeline_mode<synchronous>, transform_indices = @transform_5, window_bounds = array<i64: 32, 32>}, {pipeline_mode = #tpu.pipeline_mode<synchronous>, transform_indices = @transform_6, window_bounds = array<i64: 1, 32>}, {pipeline_mode = #tpu.pipeline_mode<synchronous>, transform_indices = @transform_7, window_bounds = array<i64: 16, 32>}, {transform_indices = @transform_8, window_bounds = array<i64: 1, 8, 16, 32>}]} {
    %c0 = arith.constant 0 : index
    %c0_0 = arith.constant 0 : index
    %c0_1 = arith.constant 0 : index
    %c0_2 = arith.constant 0 : index
    %0 = vector.load %arg2[%c0, %c0_0, %c0_1, %c0_2] : memref<1x8x16x8xf32, #tpu.memory_space<vmem>>, vector<1x8x16x8xf32>
    %1 = vector.shape_cast %0 : vector<1x8x16x8xf32> to vector<8x16x8xf32>
    %2 = vector.shape_cast %1 : vector<8x16x8xf32> to vector<128x8xf32>
    %3 = arith.truncf %2 : vector<128x8xf32> to vector<128x8xbf16>
    %c0_3 = arith.constant 0 : index
    %c0_4 = arith.constant 0 : index
    %4 = vector.load %arg3[%c0_3, %c0_4] : memref<8x32xbf16, #tpu.memory_space<vmem>>, vector<8x32xbf16>
    %cst = arith.constant dense<0.000000e+00> : vector<128x32xf32>
    %5 = tpu.matmul %3, %4, %cst {dimension_numbers = #tpu.dot_dimension_numbers<[1], [0], [0], [1], [0, 0, 1, 1], [], []>} : vector<128x8xbf16>, vector<8x32xbf16>, vector<128x32xf32> -> vector<128x32xf32>
    %c0_5 = arith.constant 0 : index
    %c0_6 = arith.constant 0 : index
    %6 = vector.load %arg4[%c0_5, %c0_6] : memref<1x32xf32, #tpu.memory_space<vmem>>, vector<1x32xf32>
    %7 = vector.broadcast %6 : vector<1x32xf32> to vector<128x32xf32>
    %8 = arith.addf %5, %7 : vector<128x32xf32>
    %9 = arith.negf %8 : vector<128x32xf32>
    %10 = math.exp %9 : vector<128x32xf32>
    %cst_7 = arith.constant 1.000000e+00 : f32
    %11 = vector.broadcast %cst_7 : f32 to vector<128x32xf32>
    %12 = arith.addf %11, %10 : vector<128x32xf32>
    %13 = arith.divf %11, %12 : vector<128x32xf32>
    %14 = arith.mulf %8, %13 : vector<128x32xf32>
    %15 = arith.truncf %14 : vector<128x32xf32> to vector<128x32xbf16>
    %c0_8 = arith.constant 0 : index
    %c0_9 = arith.constant 0 : index
    %16 = vector.load %arg5[%c0_8, %c0_9] : memref<32x32xbf16, #tpu.memory_space<vmem>>, vector<32x32xbf16>
    %cst_10 = arith.constant dense<0.000000e+00> : vector<128x32xf32>
    %17 = tpu.matmul %15, %16, %cst_10 {dimension_numbers = #tpu.dot_dimension_numbers<[1], [0], [0], [1], [0, 0, 1, 1], [], []>} : vector<128x32xbf16>, vector<32x32xbf16>, vector<128x32xf32> -> vector<128x32xf32>
    %c0_11 = arith.constant 0 : index
    %c0_12 = arith.constant 0 : index
    %18 = vector.load %arg6[%c0_11, %c0_12] : memref<1x32xf32, #tpu.memory_space<vmem>>, vector<1x32xf32>
    %19 = vector.broadcast %18 : vector<1x32xf32> to vector<128x32xf32>
    %20 = arith.addf %17, %19 : vector<128x32xf32>
    %21 = arith.negf %20 : vector<128x32xf32>
    %22 = math.exp %21 : vector<128x32xf32>
    %cst_13 = arith.constant 1.000000e+00 : f32
    %23 = vector.broadcast %cst_13 : f32 to vector<128x32xf32>
    %24 = arith.addf %23, %22 : vector<128x32xf32>
    %25 = arith.divf %23, %24 : vector<128x32xf32>
    %26 = arith.mulf %20, %25 : vector<128x32xf32>
    %27 = arith.truncf %26 : vector<128x32xf32> to vector<128x32xbf16>
    %c0_14 = arith.constant 0 : index
    %c0_15 = arith.constant 0 : index
    %28 = vector.load %arg7[%c0_14, %c0_15] : memref<32x32xbf16, #tpu.memory_space<vmem>>, vector<32x32xbf16>
    %cst_16 = arith.constant dense<0.000000e+00> : vector<128x32xf32>
    %29 = tpu.matmul %27, %28, %cst_16 {dimension_numbers = #tpu.dot_dimension_numbers<[1], [0], [0], [1], [0, 0, 1, 1], [], []>} : vector<128x32xbf16>, vector<32x32xbf16>, vector<128x32xf32> -> vector<128x32xf32>
    %c0_17 = arith.constant 0 : index
    %c0_18 = arith.constant 0 : index
    %30 = vector.load %arg8[%c0_17, %c0_18] : memref<1x32xf32, #tpu.memory_space<vmem>>, vector<1x32xf32>
    %31 = vector.broadcast %30 : vector<1x32xf32> to vector<128x32xf32>
    %32 = arith.addf %29, %31 : vector<128x32xf32>
    %33 = vector.shape_cast %32 : vector<128x32xf32> to vector<8x16x32xf32>
    %c0_19 = arith.constant 0 : index
    %c0_20 = arith.constant 0 : index
    %34 = vector.load %arg9[%c0_19, %c0_20] : memref<16x32xf32, #tpu.memory_space<vmem>>, vector<16x32xf32>
    %35 = vector.shape_cast %34 : vector<16x32xf32> to vector<1x16x32xf32>
    %36 = vector.broadcast %35 : vector<1x16x32xf32> to vector<8x16x32xf32>
    %37 = arith.addf %33, %36 : vector<8x16x32xf32>
    %c0_21 = arith.constant 0 : index
    %c0_22 = arith.constant 0 : index
    %c0_23 = arith.constant 0 : index
    %c0_24 = arith.constant 0 : index
    %38 = vector.load %arg10[%c0_21, %c0_22, %c0_23, %c0_24] : memref<1x8x16x32xf32, #tpu.memory_space<vmem>>, vector<1x8x16x32xf32>
    %39 = vector.shape_cast %38 : vector<1x8x16x32xf32> to vector<8x16x32xf32>
    %40 = vector.shape_cast %37 : vector<8x16x32xf32> to vector<1x8x16x32xf32>
    tpu.vector_store %arg10[%c0_21, %c0_22, %c0_23, %c0_24], %40 {strides = array<i32>} : memref<1x8x16x32xf32, #tpu.memory_space<vmem>>, vector<1x8x16x32xf32>,
    return
  }
  func.func @transform_0(%arg0: i32, %arg1: i32) -> (i32, i32, i32, i32) {
    %c0_i32 = arith.constant 0 : i32
    %c0_i32_0 = arith.constant 0 : i32
    %c0_i32_1 = arith.constant 0 : i32
    return %arg0, %arg1, %c0_i32, %c0_i32_0 : i32, i32, i32, i32
  }
  func.func @transform_1(%arg0: i32, %arg1: i32) -> (i32, i32) {
    %c0_i32 = arith.constant 0 : i32
    %c0_i32_0 = arith.constant 0 : i32
    %c0_i32_1 = arith.constant 0 : i32
    return %c0_i32, %c0_i32_0 : i32, i32
  }
  func.func @transform_2(%arg0: i32, %arg1: i32) -> (i32, i32) {
    %c0_i32 = arith.constant 0 : i32
    %c0_i32_0 = arith.constant 0 : i32
    %c0_i32_1 = arith.constant 0 : i32
    return %c0_i32, %c0_i32_0 : i32, i32
  }
  func.func @transform_3(%arg0: i32, %arg1: i32) -> (i32, i32) {
    %c0_i32 = arith.constant 0 : i32
    %c0_i32_0 = arith.constant 0 : i32
    %c0_i32_1 = arith.constant 0 : i32
    return %c0_i32, %c0_i32_0 : i32, i32
  }
  func.func @transform_4(%arg0: i32, %arg1: i32) -> (i32, i32) {
    %c0_i32 = arith.constant 0 : i32
    %c0_i32_0 = arith.constant 0 : i32
    %c0_i32_1 = arith.constant 0 : i32
    return %c0_i32, %c0_i32_0 : i32, i32
  }
  func.func @transform_5(%arg0: i32, %arg1: i32) -> (i32, i32) {
    %c0_i32 = arith.constant 0 : i32
    %c0_i32_0 = arith.constant 0 : i32
    %c0_i32_1 = arith.constant 0 : i32
    return %c0_i32, %c0_i32_0 : i32, i32
  }
  func.func @transform_6(%arg0: i32, %arg1: i32) -> (i32, i32) {
    %c0_i32 = arith.constant 0 : i32
    %c0_i32_0 = arith.constant 0 : i32
    %c0_i32_1 = arith.constant 0 : i32
    return %c0_i32, %c0_i32_0 : i32, i32
  }
  func.func @transform_7(%arg0: i32, %arg1: i32) -> (i32, i32) {
    %c0_i32 = arith.constant 0 : i32
    %c0_i32_0 = arith.constant 0 : i32
    %c0_i32_1 = arith.constant 0 : i32
    return %c0_i32, %c0_i32_0 : i32, i32
  }
  func.func @transform_8(%arg0: i32, %arg1: i32) -> (i32, i32, i32, i32) {
    %c0_i32 = arith.constant 0 : i32
    %c0_i32_0 = arith.constant 0 : i32
    %c0_i32_1 = arith.constant 0 : i32
    return %arg0, %arg1, %c0_i32, %c0_i32_0 : i32, i32, i32, i32
  }
}

module attributes {stable_mosaic.version = 11 : i64} {
  func.func @_block_stack_kernel(%arg0: i32, %arg1: i32, %arg2: memref<1x4x16x32xf32, #tpu.memory_space<vmem>>, %arg3: memref<1x1x16x32xf32, #tpu.memory_space<vmem>>, %arg4: memref<16x16xbf16, #tpu.memory_space<vmem>>, %arg5: memref<2x2x32x32xbf16, #tpu.memory_space<vmem>>, %arg6: memref<2x2x1x32xf32, #tpu.memory_space<vmem>>, %arg7: memref<2x32x32xbf16, #tpu.memory_space<vmem>>, %arg8: memref<2x1x32xf32, #tpu.memory_space<vmem>>, %arg9: memref<1x4x16x32xf32, #tpu.memory_space<vmem>>) attributes {dimension_semantics = [#tpu.dimension_semantics<parallel>, #tpu.dimension_semantics<parallel>], iteration_bounds = array<i64: 2, 1>, scalar_prefetch = 0 : i64, scratch_operands = 0 : i64, tpu.core_type = #tpu.core_type<tc>, window_params = [{transform_indices = @transform_0, window_bounds = array<i64: 1, 4, 16, 32>}, {transform_indices = @transform_1, window_bounds = array<i64: 1, 1, 16, 32>}, {pipeline_mode = #tpu.pipeline_mode<synchronous>, transform_indices = @transform_2, window_bounds = array<i64: 16, 16>}, {pipeline_mode = #tpu.pipeline_mode<synchronous>, transform_indices = @transform_3, window_bounds = array<i64: 2, 2, 32, 32>}, {pipeline_mode = #tpu.pipeline_mode<synchronous>, transform_indices = @transform_4, window_bounds = array<i64: 2, 2, 1, 32>}, {pipeline_mode = #tpu.pipeline_mode<synchronous>, transform_indices = @transform_5, window_bounds = array<i64: 2, 32, 32>}, {pipeline_mode = #tpu.pipeline_mode<synchronous>, transform_indices = @transform_6, window_bounds = array<i64: 2, 1, 32>}, {transform_indices = @transform_7, window_bounds = array<i64: 1, 4, 16, 32>}]} {
    %c0 = arith.constant 0 : index
    %c0_0 = arith.constant 0 : index
    %0 = vector.load %arg4[%c0, %c0_0] : memref<16x16xbf16, #tpu.memory_space<vmem>>, vector<16x16xbf16>
    %c0_1 = arith.constant 0 : index
    %c0_2 = arith.constant 0 : index
    %c0_3 = arith.constant 0 : index
    %c0_4 = arith.constant 0 : index
    %1 = vector.load %arg3[%c0_1, %c0_2, %c0_3, %c0_4] : memref<1x1x16x32xf32, #tpu.memory_space<vmem>>, vector<1x1x16x32xf32>
    %2 = vector.shape_cast %1 : vector<1x1x16x32xf32> to vector<16x32xf32>
    %c0_5 = arith.constant 0 : index
    %c0_6 = arith.constant 0 : index
    %c0_7 = arith.constant 0 : index
    %c0_8 = arith.constant 0 : index
    %3 = vector.load %arg2[%c0_5, %c0_6, %c0_7, %c0_8] : memref<1x4x16x32xf32, #tpu.memory_space<vmem>>, vector<1x4x16x32xf32>
    %4 = vector.shape_cast %3 : vector<1x4x16x32xf32> to vector<4x16x32xf32>
    %5 = vector.shape_cast %4 : vector<4x16x32xf32> to vector<64x32xf32>
    %cst = arith.constant 0.000000e+00 : f32
    %6 = vector.broadcast %cst : f32 to vector<64x32xf32>
    %7 = vector.shape_cast %5 : vector<64x32xf32> to vector<4x16x32xf32>
    %8 = vector.extract_strided_slice %7 {offsets = [0, 0, 0], sizes = [1, 16, 32], strides = [1, 1, 1]} : vector<4x16x32xf32> to vector<1x16x32xf32>
    %9 = vector.shape_cast %8 : vector<1x16x32xf32> to vector<16x32xf32>
    %10 = arith.truncf %9 : vector<16x32xf32> to vector<16x32xbf16>
    %cst_9 = arith.constant dense<0.000000e+00> : vector<16x32xf32>
    %11 = tpu.matmul %0, %10, %cst_9 {dimension_numbers = #tpu.dot_dimension_numbers<[1], [0], [0], [1], [0, 0, 1, 1], [], []>} : vector<16x16xbf16>, vector<16x32xbf16>, vector<16x32xf32> -> vector<16x32xf32>
    %12 = vector.extract_strided_slice %7 {offsets = [1, 0, 0], sizes = [1, 16, 32], strides = [1, 1, 1]} : vector<4x16x32xf32> to vector<1x16x32xf32>
    %13 = vector.shape_cast %12 : vector<1x16x32xf32> to vector<16x32xf32>
    %14 = arith.truncf %13 : vector<16x32xf32> to vector<16x32xbf16>
    %cst_10 = arith.constant dense<0.000000e+00> : vector<16x32xf32>
    %15 = tpu.matmul %0, %14, %cst_10 {dimension_numbers = #tpu.dot_dimension_numbers<[1], [0], [0], [1], [0, 0, 1, 1], [], []>} : vector<16x16xbf16>, vector<16x32xbf16>, vector<16x32xf32> -> vector<16x32xf32>
    %16 = vector.extract_strided_slice %7 {offsets = [2, 0, 0], sizes = [1, 16, 32], strides = [1, 1, 1]} : vector<4x16x32xf32> to vector<1x16x32xf32>
    %17 = vector.shape_cast %16 : vector<1x16x32xf32> to vector<16x32xf32>
    %18 = arith.truncf %17 : vector<16x32xf32> to vector<16x32xbf16>
    %cst_11 = arith.constant dense<0.000000e+00> : vector<16x32xf32>
    %19 = tpu.matmul %0, %18, %cst_11 {dimension_numbers = #tpu.dot_dimension_numbers<[1], [0], [0], [1], [0, 0, 1, 1], [], []>} : vector<16x16xbf16>, vector<16x32xbf16>, vector<16x32xf32> -> vector<16x32xf32>
    %20 = vector.extract_strided_slice %7 {offsets = [3, 0, 0], sizes = [1, 16, 32], strides = [1, 1, 1]} : vector<4x16x32xf32> to vector<1x16x32xf32>
    %21 = vector.shape_cast %20 : vector<1x16x32xf32> to vector<16x32xf32>
    %22 = arith.truncf %21 : vector<16x32xf32> to vector<16x32xbf16>
    %cst_12 = arith.constant dense<0.000000e+00> : vector<16x32xf32>
    %23 = tpu.matmul %0, %22, %cst_12 {dimension_numbers = #tpu.dot_dimension_numbers<[1], [0], [0], [1], [0, 0, 1, 1], [], []>} : vector<16x16xbf16>, vector<16x32xbf16>, vector<16x32xf32> -> vector<16x32xf32>
    %24 = tpu.concatenate %11, %15, %19, %23 in 0 : vector<16x32xf32>, vector<16x32xf32>, vector<16x32xf32>, vector<16x32xf32> -> vector<64x32xf32>
    %25 = arith.truncf %24 : vector<64x32xf32> to vector<64x32xbf16>
    %c0_13 = arith.constant 0 : index
    %c0_14 = arith.constant 0 : index
    %c0_15 = arith.constant 0 : index
    %c0_16 = arith.constant 0 : index
    %26 = vector.load %arg5[%c0_13, %c0_14, %c0_15, %c0_16] : memref<2x2x32x32xbf16, #tpu.memory_space<vmem>>, vector<1x1x32x32xbf16>
    %27 = vector.shape_cast %26 : vector<1x1x32x32xbf16> to vector<32x32xbf16>
    %cst_17 = arith.constant dense<0.000000e+00> : vector<64x32xf32>
    %28 = tpu.matmul %25, %27, %cst_17 {dimension_numbers = #tpu.dot_dimension_numbers<[1], [0], [0], [1], [0, 0, 1, 1], [], []>} : vector<64x32xbf16>, vector<32x32xbf16>, vector<64x32xf32> -> vector<64x32xf32>
    %c0_18 = arith.constant 0 : index
    %c0_19 = arith.constant 0 : index
    %c0_20 = arith.constant 0 : index
    %c0_21 = arith.constant 0 : index
    %29 = vector.load %arg6[%c0_18, %c0_19, %c0_20, %c0_21] : memref<2x2x1x32xf32, #tpu.memory_space<vmem>>, vector<1x1x1x32xf32>
    %30 = vector.shape_cast %29 : vector<1x1x1x32xf32> to vector<1x32xf32>
    %31 = vector.broadcast %30 : vector<1x32xf32> to vector<64x32xf32>
    %32 = arith.addf %28, %31 : vector<64x32xf32>
    %cst_22 = arith.constant 0.000000e+00 : f32
    %33 = vector.broadcast %cst_22 : f32 to vector<64x32xf32>
    %34 = arith.maximumf %32, %33 : vector<64x32xf32>
    %35 = vector.shape_cast %34 : vector<64x32xf32> to vector<4x16x32xf32>
    %36 = vector.extract_strided_slice %35 {offsets = [0, 0, 0], sizes = [1, 16, 32], strides = [1, 1, 1]} : vector<4x16x32xf32> to vector<1x16x32xf32>
    %37 = vector.shape_cast %36 : vector<1x16x32xf32> to vector<16x32xf32>
    %38 = arith.truncf %37 : vector<16x32xf32> to vector<16x32xbf16>
    %cst_23 = arith.constant dense<0.000000e+00> : vector<16x32xf32>
    %39 = tpu.matmul %0, %38, %cst_23 {dimension_numbers = #tpu.dot_dimension_numbers<[1], [0], [0], [1], [0, 0, 1, 1], [], []>} : vector<16x16xbf16>, vector<16x32xbf16>, vector<16x32xf32> -> vector<16x32xf32>
    %40 = vector.extract_strided_slice %35 {offsets = [1, 0, 0], sizes = [1, 16, 32], strides = [1, 1, 1]} : vector<4x16x32xf32> to vector<1x16x32xf32>
    %41 = vector.shape_cast %40 : vector<1x16x32xf32> to vector<16x32xf32>
    %42 = arith.truncf %41 : vector<16x32xf32> to vector<16x32xbf16>
    %cst_24 = arith.constant dense<0.000000e+00> : vector<16x32xf32>
    %43 = tpu.matmul %0, %42, %cst_24 {dimension_numbers = #tpu.dot_dimension_numbers<[1], [0], [0], [1], [0, 0, 1, 1], [], []>} : vector<16x16xbf16>, vector<16x32xbf16>, vector<16x32xf32> -> vector<16x32xf32>
    %44 = vector.extract_strided_slice %35 {offsets = [2, 0, 0], sizes = [1, 16, 32], strides = [1, 1, 1]} : vector<4x16x32xf32> to vector<1x16x32xf32>
    %45 = vector.shape_cast %44 : vector<1x16x32xf32> to vector<16x32xf32>
    %46 = arith.truncf %45 : vector<16x32xf32> to vector<16x32xbf16>
    %cst_25 = arith.constant dense<0.000000e+00> : vector<16x32xf32>
    %47 = tpu.matmul %0, %46, %cst_25 {dimension_numbers = #tpu.dot_dimension_numbers<[1], [0], [0], [1], [0, 0, 1, 1], [], []>} : vector<16x16xbf16>, vector<16x32xbf16>, vector<16x32xf32> -> vector<16x32xf32>
    %48 = vector.extract_strided_slice %35 {offsets = [3, 0, 0], sizes = [1, 16, 32], strides = [1, 1, 1]} : vector<4x16x32xf32> to vector<1x16x32xf32>
    %49 = vector.shape_cast %48 : vector<1x16x32xf32> to vector<16x32xf32>
    %50 = arith.truncf %49 : vector<16x32xf32> to vector<16x32xbf16>
    %cst_26 = arith.constant dense<0.000000e+00> : vector<16x32xf32>
    %51 = tpu.matmul %0, %50, %cst_26 {dimension_numbers = #tpu.dot_dimension_numbers<[1], [0], [0], [1], [0, 0, 1, 1], [], []>} : vector<16x16xbf16>, vector<16x32xbf16>, vector<16x32xf32> -> vector<16x32xf32>
    %52 = tpu.concatenate %39, %43, %47, %51 in 0 : vector<16x32xf32>, vector<16x32xf32>, vector<16x32xf32>, vector<16x32xf32> -> vector<64x32xf32>
    %53 = arith.truncf %52 : vector<64x32xf32> to vector<64x32xbf16>
    %c0_27 = arith.constant 0 : index
    %c1 = arith.constant 1 : index
    %c0_28 = arith.constant 0 : index
    %c0_29 = arith.constant 0 : index
    %54 = vector.load %arg5[%c0_27, %c1, %c0_28, %c0_29] : memref<2x2x32x32xbf16, #tpu.memory_space<vmem>>, vector<1x1x32x32xbf16>
    %55 = vector.shape_cast %54 : vector<1x1x32x32xbf16> to vector<32x32xbf16>
    %cst_30 = arith.constant dense<0.000000e+00> : vector<64x32xf32>
    %56 = tpu.matmul %53, %55, %cst_30 {dimension_numbers = #tpu.dot_dimension_numbers<[1], [0], [0], [1], [0, 0, 1, 1], [], []>} : vector<64x32xbf16>, vector<32x32xbf16>, vector<64x32xf32> -> vector<64x32xf32>
    %c0_31 = arith.constant 0 : index
    %c1_32 = arith.constant 1 : index
    %c0_33 = arith.constant 0 : index
    %c0_34 = arith.constant 0 : index
    %57 = vector.load %arg6[%c0_31, %c1_32, %c0_33, %c0_34] : memref<2x2x1x32xf32, #tpu.memory_space<vmem>>, vector<1x1x1x32xf32>
    %58 = vector.shape_cast %57 : vector<1x1x1x32xf32> to vector<1x32xf32>
    %59 = vector.broadcast %58 : vector<1x32xf32> to vector<64x32xf32>
    %60 = arith.addf %56, %59 : vector<64x32xf32>
    %cst_35 = arith.constant 0.000000e+00 : f32
    %61 = vector.broadcast %cst_35 : f32 to vector<64x32xf32>
    %62 = arith.maximumf %60, %61 : vector<64x32xf32>
    %63 = arith.truncf %62 : vector<64x32xf32> to vector<64x32xbf16>
    %c0_36 = arith.constant 0 : index
    %c0_37 = arith.constant 0 : index
    %c0_38 = arith.constant 0 : index
    %64 = vector.load %arg7[%c0_36, %c0_37, %c0_38] : memref<2x32x32xbf16, #tpu.memory_space<vmem>>, vector<1x32x32xbf16>
    %65 = vector.shape_cast %64 : vector<1x32x32xbf16> to vector<32x32xbf16>
    %cst_39 = arith.constant dense<0.000000e+00> : vector<64x32xf32>
    %66 = tpu.matmul %63, %65, %cst_39 {dimension_numbers = #tpu.dot_dimension_numbers<[1], [0], [0], [1], [0, 0, 1, 1], [], []>} : vector<64x32xbf16>, vector<32x32xbf16>, vector<64x32xf32> -> vector<64x32xf32>
    %c0_40 = arith.constant 0 : index
    %c0_41 = arith.constant 0 : index
    %c0_42 = arith.constant 0 : index
    %67 = vector.load %arg8[%c0_40, %c0_41, %c0_42] : memref<2x1x32xf32, #tpu.memory_space<vmem>>, vector<1x1x32xf32>
    %68 = vector.shape_cast %67 : vector<1x1x32xf32> to vector<1x32xf32>
    %69 = vector.broadcast %68 : vector<1x32xf32> to vector<64x32xf32>
    %70 = arith.addf %66, %69 : vector<64x32xf32>
    %71 = arith.subf %5, %70 : vector<64x32xf32>
    %72 = arith.addf %6, %70 : vector<64x32xf32>
    %73 = vector.shape_cast %71 : vector<64x32xf32> to vector<4x16x32xf32>
    %74 = vector.extract_strided_slice %73 {offsets = [0, 0, 0], sizes = [1, 16, 32], strides = [1, 1, 1]} : vector<4x16x32xf32> to vector<1x16x32xf32>
    %75 = vector.shape_cast %74 : vector<1x16x32xf32> to vector<16x32xf32>
    %76 = arith.truncf %75 : vector<16x32xf32> to vector<16x32xbf16>
    %cst_43 = arith.constant dense<0.000000e+00> : vector<16x32xf32>
    %77 = tpu.matmul %0, %76, %cst_43 {dimension_numbers = #tpu.dot_dimension_numbers<[1], [0], [0], [1], [0, 0, 1, 1], [], []>} : vector<16x16xbf16>, vector<16x32xbf16>, vector<16x32xf32> -> vector<16x32xf32>
    %78 = vector.extract_strided_slice %73 {offsets = [1, 0, 0], sizes = [1, 16, 32], strides = [1, 1, 1]} : vector<4x16x32xf32> to vector<1x16x32xf32>
    %79 = vector.shape_cast %78 : vector<1x16x32xf32> to vector<16x32xf32>
    %80 = arith.truncf %79 : vector<16x32xf32> to vector<16x32xbf16>
    %cst_44 = arith.constant dense<0.000000e+00> : vector<16x32xf32>
    %81 = tpu.matmul %0, %80, %cst_44 {dimension_numbers = #tpu.dot_dimension_numbers<[1], [0], [0], [1], [0, 0, 1, 1], [], []>} : vector<16x16xbf16>, vector<16x32xbf16>, vector<16x32xf32> -> vector<16x32xf32>
    %82 = vector.extract_strided_slice %73 {offsets = [2, 0, 0], sizes = [1, 16, 32], strides = [1, 1, 1]} : vector<4x16x32xf32> to vector<1x16x32xf32>
    %83 = vector.shape_cast %82 : vector<1x16x32xf32> to vector<16x32xf32>
    %84 = arith.truncf %83 : vector<16x32xf32> to vector<16x32xbf16>
    %cst_45 = arith.constant dense<0.000000e+00> : vector<16x32xf32>
    %85 = tpu.matmul %0, %84, %cst_45 {dimension_numbers = #tpu.dot_dimension_numbers<[1], [0], [0], [1], [0, 0, 1, 1], [], []>} : vector<16x16xbf16>, vector<16x32xbf16>, vector<16x32xf32> -> vector<16x32xf32>
    %86 = vector.extract_strided_slice %73 {offsets = [3, 0, 0], sizes = [1, 16, 32], strides = [1, 1, 1]} : vector<4x16x32xf32> to vector<1x16x32xf32>
    %87 = vector.shape_cast %86 : vector<1x16x32xf32> to vector<16x32xf32>
    %88 = arith.truncf %87 : vector<16x32xf32> to vector<16x32xbf16>
    %cst_46 = arith.constant dense<0.000000e+00> : vector<16x32xf32>
    %89 = tpu.matmul %0, %88, %cst_46 {dimension_numbers = #tpu.dot_dimension_numbers<[1], [0], [0], [1], [0, 0, 1, 1], [], []>} : vector<16x16xbf16>, vector<16x32xbf16>, vector<16x32xf32> -> vector<16x32xf32>
    %90 = tpu.concatenate %77, %81, %85, %89 in 0 : vector<16x32xf32>, vector<16x32xf32>, vector<16x32xf32>, vector<16x32xf32> -> vector<64x32xf32>
    %91 = arith.truncf %90 : vector<64x32xf32> to vector<64x32xbf16>
    %c1_47 = arith.constant 1 : index
    %c0_48 = arith.constant 0 : index
    %c0_49 = arith.constant 0 : index
    %c0_50 = arith.constant 0 : index
    %92 = vector.load %arg5[%c1_47, %c0_48, %c0_49, %c0_50] : memref<2x2x32x32xbf16, #tpu.memory_space<vmem>>, vector<1x1x32x32xbf16>
    %93 = vector.shape_cast %92 : vector<1x1x32x32xbf16> to vector<32x32xbf16>
    %cst_51 = arith.constant dense<0.000000e+00> : vector<64x32xf32>
    %94 = tpu.matmul %91, %93, %cst_51 {dimension_numbers = #tpu.dot_dimension_numbers<[1], [0], [0], [1], [0, 0, 1, 1], [], []>} : vector<64x32xbf16>, vector<32x32xbf16>, vector<64x32xf32> -> vector<64x32xf32>
    %c1_52 = arith.constant 1 : index
    %c0_53 = arith.constant 0 : index
    %c0_54 = arith.constant 0 : index
    %c0_55 = arith.constant 0 : index
    %95 = vector.load %arg6[%c1_52, %c0_53, %c0_54, %c0_55] : memref<2x2x1x32xf32, #tpu.memory_space<vmem>>, vector<1x1x1x32xf32>
    %96 = vector.shape_cast %95 : vector<1x1x1x32xf32> to vector<1x32xf32>
    %97 = vector.broadcast %96 : vector<1x32xf32> to vector<64x32xf32>
    %98 = arith.addf %94, %97 : vector<64x32xf32>
    %cst_56 = arith.constant 0.000000e+00 : f32
    %99 = vector.broadcast %cst_56 : f32 to vector<64x32xf32>
    %100 = arith.maximumf %98, %99 : vector<64x32xf32>
    %101 = vector.shape_cast %100 : vector<64x32xf32> to vector<4x16x32xf32>
    %102 = vector.extract_strided_slice %101 {offsets = [0, 0, 0], sizes = [1, 16, 32], strides = [1, 1, 1]} : vector<4x16x32xf32> to vector<1x16x32xf32>
    %103 = vector.shape_cast %102 : vector<1x16x32xf32> to vector<16x32xf32>
    %104 = arith.truncf %103 : vector<16x32xf32> to vector<16x32xbf16>
    %cst_57 = arith.constant dense<0.000000e+00> : vector<16x32xf32>
    %105 = tpu.matmul %0, %104, %cst_57 {dimension_numbers = #tpu.dot_dimension_numbers<[1], [0], [0], [1], [0, 0, 1, 1], [], []>} : vector<16x16xbf16>, vector<16x32xbf16>, vector<16x32xf32> -> vector<16x32xf32>
    %106 = vector.extract_strided_slice %101 {offsets = [1, 0, 0], sizes = [1, 16, 32], strides = [1, 1, 1]} : vector<4x16x32xf32> to vector<1x16x32xf32>
    %107 = vector.shape_cast %106 : vector<1x16x32xf32> to vector<16x32xf32>
    %108 = arith.truncf %107 : vector<16x32xf32> to vector<16x32xbf16>
    %cst_58 = arith.constant dense<0.000000e+00> : vector<16x32xf32>
    %109 = tpu.matmul %0, %108, %cst_58 {dimension_numbers = #tpu.dot_dimension_numbers<[1], [0], [0], [1], [0, 0, 1, 1], [], []>} : vector<16x16xbf16>, vector<16x32xbf16>, vector<16x32xf32> -> vector<16x32xf32>
    %110 = vector.extract_strided_slice %101 {offsets = [2, 0, 0], sizes = [1, 16, 32], strides = [1, 1, 1]} : vector<4x16x32xf32> to vector<1x16x32xf32>
    %111 = vector.shape_cast %110 : vector<1x16x32xf32> to vector<16x32xf32>
    %112 = arith.truncf %111 : vector<16x32xf32> to vector<16x32xbf16>
    %cst_59 = arith.constant dense<0.000000e+00> : vector<16x32xf32>
    %113 = tpu.matmul %0, %112, %cst_59 {dimension_numbers = #tpu.dot_dimension_numbers<[1], [0], [0], [1], [0, 0, 1, 1], [], []>} : vector<16x16xbf16>, vector<16x32xbf16>, vector<16x32xf32> -> vector<16x32xf32>
    %114 = vector.extract_strided_slice %101 {offsets = [3, 0, 0], sizes = [1, 16, 32], strides = [1, 1, 1]} : vector<4x16x32xf32> to vector<1x16x32xf32>
    %115 = vector.shape_cast %114 : vector<1x16x32xf32> to vector<16x32xf32>
    %116 = arith.truncf %115 : vector<16x32xf32> to vector<16x32xbf16>
    %cst_60 = arith.constant dense<0.000000e+00> : vector<16x32xf32>
    %117 = tpu.matmul %0, %116, %cst_60 {dimension_numbers = #tpu.dot_dimension_numbers<[1], [0], [0], [1], [0, 0, 1, 1], [], []>} : vector<16x16xbf16>, vector<16x32xbf16>, vector<16x32xf32> -> vector<16x32xf32>
    %118 = tpu.concatenate %105, %109, %113, %117 in 0 : vector<16x32xf32>, vector<16x32xf32>, vector<16x32xf32>, vector<16x32xf32> -> vector<64x32xf32>
    %119 = arith.truncf %118 : vector<64x32xf32> to vector<64x32xbf16>
    %c1_61 = arith.constant 1 : index
    %c1_62 = arith.constant 1 : index
    %c0_63 = arith.constant 0 : index
    %c0_64 = arith.constant 0 : index
    %120 = vector.load %arg5[%c1_61, %c1_62, %c0_63, %c0_64] : memref<2x2x32x32xbf16, #tpu.memory_space<vmem>>, vector<1x1x32x32xbf16>
    %121 = vector.shape_cast %120 : vector<1x1x32x32xbf16> to vector<32x32xbf16>
    %cst_65 = arith.constant dense<0.000000e+00> : vector<64x32xf32>
    %122 = tpu.matmul %119, %121, %cst_65 {dimension_numbers = #tpu.dot_dimension_numbers<[1], [0], [0], [1], [0, 0, 1, 1], [], []>} : vector<64x32xbf16>, vector<32x32xbf16>, vector<64x32xf32> -> vector<64x32xf32>
    %c1_66 = arith.constant 1 : index
    %c1_67 = arith.constant 1 : index
    %c0_68 = arith.constant 0 : index
    %c0_69 = arith.constant 0 : index
    %123 = vector.load %arg6[%c1_66, %c1_67, %c0_68, %c0_69] : memref<2x2x1x32xf32, #tpu.memory_space<vmem>>, vector<1x1x1x32xf32>
    %124 = vector.shape_cast %123 : vector<1x1x1x32xf32> to vector<1x32xf32>
    %125 = vector.broadcast %124 : vector<1x32xf32> to vector<64x32xf32>
    %126 = arith.addf %122, %125 : vector<64x32xf32>
    %cst_70 = arith.constant 0.000000e+00 : f32
    %127 = vector.broadcast %cst_70 : f32 to vector<64x32xf32>
    %128 = arith.maximumf %126, %127 : vector<64x32xf32>
    %129 = arith.truncf %128 : vector<64x32xf32> to vector<64x32xbf16>
    %c1_71 = arith.constant 1 : index
    %c0_72 = arith.constant 0 : index
    %c0_73 = arith.constant 0 : index
    %130 = vector.load %arg7[%c1_71, %c0_72, %c0_73] : memref<2x32x32xbf16, #tpu.memory_space<vmem>>, vector<1x32x32xbf16>
    %131 = vector.shape_cast %130 : vector<1x32x32xbf16> to vector<32x32xbf16>
    %cst_74 = arith.constant dense<0.000000e+00> : vector<64x32xf32>
    %132 = tpu.matmul %129, %131, %cst_74 {dimension_numbers = #tpu.dot_dimension_numbers<[1], [0], [0], [1], [0, 0, 1, 1], [], []>} : vector<64x32xbf16>, vector<32x32xbf16>, vector<64x32xf32> -> vector<64x32xf32>
    %c1_75 = arith.constant 1 : index
    %c0_76 = arith.constant 0 : index
    %c0_77 = arith.constant 0 : index
    %133 = vector.load %arg8[%c1_75, %c0_76, %c0_77] : memref<2x1x32xf32, #tpu.memory_space<vmem>>, vector<1x1x32xf32>
    %134 = vector.shape_cast %133 : vector<1x1x32xf32> to vector<1x32xf32>
    %135 = vector.broadcast %134 : vector<1x32xf32> to vector<64x32xf32>
    %136 = arith.addf %132, %135 : vector<64x32xf32>
    %137 = arith.addf %72, %136 : vector<64x32xf32>
    %138 = vector.shape_cast %137 : vector<64x32xf32> to vector<4x16x32xf32>
    %139 = vector.extract_strided_slice %138 {offsets = [0, 0, 0], sizes = [1, 16, 32], strides = [1, 1, 1]} : vector<4x16x32xf32> to vector<1x16x32xf32>
    %140 = vector.shape_cast %139 : vector<1x16x32xf32> to vector<16x32xf32>
    %141 = arith.addf %2, %140 : vector<16x32xf32>
    %c0_78 = arith.constant 0 : index
    %c3 = arith.constant 3 : index
    %c0_79 = arith.constant 0 : index
    %c0_80 = arith.constant 0 : index
    %142 = vector.load %arg9[%c0_78, %c3, %c0_79, %c0_80] : memref<1x4x16x32xf32, #tpu.memory_space<vmem>>, vector<1x1x16x32xf32>
    %143 = vector.shape_cast %142 : vector<1x1x16x32xf32> to vector<16x32xf32>
    %144 = vector.shape_cast %141 : vector<16x32xf32> to vector<1x1x16x32xf32>
    tpu.vector_store %arg9[%c0_78, %c3, %c0_79, %c0_80], %144 {strides = array<i32>} : memref<1x4x16x32xf32, #tpu.memory_space<vmem>>, vector<1x1x16x32xf32>,
    %145 = vector.extract_strided_slice %138 {offsets = [1, 0, 0], sizes = [1, 16, 32], strides = [1, 1, 1]} : vector<4x16x32xf32> to vector<1x16x32xf32>
    %146 = vector.shape_cast %145 : vector<1x16x32xf32> to vector<16x32xf32>
    %147 = arith.addf %2, %146 : vector<16x32xf32>
    %c0_81 = arith.constant 0 : index
    %c2 = arith.constant 2 : index
    %c0_82 = arith.constant 0 : index
    %c0_83 = arith.constant 0 : index
    %148 = vector.load %arg9[%c0_81, %c2, %c0_82, %c0_83] : memref<1x4x16x32xf32, #tpu.memory_space<vmem>>, vector<1x1x16x32xf32>
    %149 = vector.shape_cast %148 : vector<1x1x16x32xf32> to vector<16x32xf32>
    %150 = vector.shape_cast %147 : vector<16x32xf32> to vector<1x1x16x32xf32>
    tpu.vector_store %arg9[%c0_81, %c2, %c0_82, %c0_83], %150 {strides = array<i32>} : memref<1x4x16x32xf32, #tpu.memory_space<vmem>>, vector<1x1x16x32xf32>,
    %151 = vector.extract_strided_slice %138 {offsets = [2, 0, 0], sizes = [1, 16, 32], strides = [1, 1, 1]} : vector<4x16x32xf32> to vector<1x16x32xf32>
    %152 = vector.shape_cast %151 : vector<1x16x32xf32> to vector<16x32xf32>
    %153 = arith.addf %2, %152 : vector<16x32xf32>
    %c0_84 = arith.constant 0 : index
    %c1_85 = arith.constant 1 : index
    %c0_86 = arith.constant 0 : index
    %c0_87 = arith.constant 0 : index
    %154 = vector.load %arg9[%c0_84, %c1_85, %c0_86, %c0_87] : memref<1x4x16x32xf32, #tpu.memory_space<vmem>>, vector<1x1x16x32xf32>
    %155 = vector.shape_cast %154 : vector<1x1x16x32xf32> to vector<16x32xf32>
    %156 = vector.shape_cast %153 : vector<16x32xf32> to vector<1x1x16x32xf32>
    tpu.vector_store %arg9[%c0_84, %c1_85, %c0_86, %c0_87], %156 {strides = array<i32>} : memref<1x4x16x32xf32, #tpu.memory_space<vmem>>, vector<1x1x16x32xf32>,
    %157 = vector.extract_strided_slice %138 {offsets = [3, 0, 0], sizes = [1, 16, 32], strides = [1, 1, 1]} : vector<4x16x32xf32> to vector<1x16x32xf32>
    %158 = vector.shape_cast %157 : vector<1x16x32xf32> to vector<16x32xf32>
    %159 = arith.addf %2, %158 : vector<16x32xf32>
    %c0_88 = arith.constant 0 : index
    %c0_89 = arith.constant 0 : index
    %c0_90 = arith.constant 0 : index
    %c0_91 = arith.constant 0 : index
    %160 = vector.load %arg9[%c0_88, %c0_89, %c0_90, %c0_91] : memref<1x4x16x32xf32, #tpu.memory_space<vmem>>, vector<1x1x16x32xf32>
    %161 = vector.shape_cast %160 : vector<1x1x16x32xf32> to vector<16x32xf32>
    %162 = vector.shape_cast %159 : vector<16x32xf32> to vector<1x1x16x32xf32>
    tpu.vector_store %arg9[%c0_88, %c0_89, %c0_90, %c0_91], %162 {strides = array<i32>} : memref<1x4x16x32xf32, #tpu.memory_space<vmem>>, vector<1x1x16x32xf32>,
    return
  }
  func.func @transform_0(%arg0: i32, %arg1: i32) -> (i32, i32, i32, i32) {
    %c0_i32 = arith.constant 0 : i32
    %0 = arith.subi %c0_i32, %arg1 : i32
    %c0_i32_0 = arith.constant 0 : i32
    %c0_i32_1 = arith.constant 0 : i32
    %c0_i32_2 = arith.constant 0 : i32
    return %arg0, %0, %c0_i32_0, %c0_i32_1 : i32, i32, i32, i32
  }
  func.func @transform_1(%arg0: i32, %arg1: i32) -> (i32, i32, i32, i32) {
    %c7_i32 = arith.constant 7 : i32
    %c0_i32 = arith.constant 0 : i32
    %c0_i32_0 = arith.constant 0 : i32
    %c0_i32_1 = arith.constant 0 : i32
    return %arg0, %c7_i32, %c0_i32, %c0_i32_0 : i32, i32, i32, i32
  }
  func.func @transform_2(%arg0: i32, %arg1: i32) -> (i32, i32) {
    %c0_i32 = arith.constant 0 : i32
    %c0_i32_0 = arith.constant 0 : i32
    %c0_i32_1 = arith.constant 0 : i32
    return %c0_i32, %c0_i32_0 : i32, i32
  }
  func.func @transform_3(%arg0: i32, %arg1: i32) -> (i32, i32, i32, i32) {
    %c0_i32 = arith.constant 0 : i32
    %c0_i32_0 = arith.constant 0 : i32
    %c0_i32_1 = arith.constant 0 : i32
    %c0_i32_2 = arith.constant 0 : i32
    %c0_i32_3 = arith.constant 0 : i32
    return %c0_i32, %c0_i32_0, %c0_i32_1, %c0_i32_2 : i32, i32, i32, i32
  }
  func.func @transform_4(%arg0: i32, %arg1: i32) -> (i32, i32, i32, i32) {
    %c0_i32 = arith.constant 0 : i32
    %c0_i32_0 = arith.constant 0 : i32
    %c0_i32_1 = arith.constant 0 : i32
    %c0_i32_2 = arith.constant 0 : i32
    %c0_i32_3 = arith.constant 0 : i32
    return %c0_i32, %c0_i32_0, %c0_i32_1, %c0_i32_2 : i32, i32, i32, i32
  }
  func.func @transform_5(%arg0: i32, %arg1: i32) -> (i32, i32, i32) {
    %c0_i32 = arith.constant 0 : i32
    %c0_i32_0 = arith.constant 0 : i32
    %c0_i32_1 = arith.constant 0 : i32
    %c0_i32_2 = arith.constant 0 : i32
    return %c0_i32, %c0_i32_0, %c0_i32_1 : i32, i32, i32
  }
  func.func @transform_6(%arg0: i32, %arg1: i32) -> (i32, i32, i32) {
    %c0_i32 = arith.constant 0 : i32
    %c0_i32_0 = arith.constant 0 : i32
    %c0_i32_1 = arith.constant 0 : i32
    %c0_i32_2 = arith.constant 0 : i32
    return %c0_i32, %c0_i32_0, %c0_i32_1 : i32, i32, i32
  }
  func.func @transform_7(%arg0: i32, %arg1: i32) -> (i32, i32, i32, i32) {
    %c0_i32 = arith.constant 0 : i32
    %c0_i32_0 = arith.constant 0 : i32
    %c0_i32_1 = arith.constant 0 : i32
    return %arg0, %arg1, %c0_i32, %c0_i32_0 : i32, i32, i32, i32
  }
}

module attributes {stable_mosaic.version = 11 : i64} {
  func.func @_decoder_kernel(%arg0: i32, %arg1: memref<32x128xf32, #tpu.memory_space<vmem>>, %arg2: memref<128x64xbf16, #tpu.memory_space<vmem>>, %arg3: memref<1x64xf32, #tpu.memory_space<vmem>>, %arg4: memref<64x64xbf16, #tpu.memory_space<vmem>>, %arg5: memref<1x64xf32, #tpu.memory_space<vmem>>, %arg6: memref<64x64xbf16, #tpu.memory_space<vmem>>, %arg7: memref<1x64xf32, #tpu.memory_space<vmem>>, %arg8: memref<64x64xbf16, #tpu.memory_space<vmem>>, %arg9: memref<1x64xf32, #tpu.memory_space<vmem>>, %arg10: memref<64x64xbf16, #tpu.memory_space<vmem>>, %arg11: memref<1x64xf32, #tpu.memory_space<vmem>>, %arg12: memref<64x128xbf16, #tpu.memory_space<vmem>>, %arg13: memref<1x128xf32, #tpu.memory_space<vmem>>, %arg14: memref<32x128xf32, #tpu.memory_space<vmem>>) attributes {dimension_semantics = [#tpu.dimension_semantics<parallel>], iteration_bounds = array<i64: 1>, scalar_prefetch = 0 : i64, scratch_operands = 0 : i64, tpu.core_type = #tpu.core_type<tc>, window_params = [{transform_indices = @transform_0, window_bounds = array<i64: 32, 128>}, {pipeline_mode = #tpu.pipeline_mode<synchronous>, transform_indices = @transform_1, window_bounds = array<i64: 128, 64>}, {pipeline_mode = #tpu.pipeline_mode<synchronous>, transform_indices = @transform_2, window_bounds = array<i64: 1, 64>}, {pipeline_mode = #tpu.pipeline_mode<synchronous>, transform_indices = @transform_3, window_bounds = array<i64: 64, 64>}, {pipeline_mode = #tpu.pipeline_mode<synchronous>, transform_indices = @transform_4, window_bounds = array<i64: 1, 64>}, {pipeline_mode = #tpu.pipeline_mode<synchronous>, transform_indices = @transform_5, window_bounds = array<i64: 64, 64>}, {pipeline_mode = #tpu.pipeline_mode<synchronous>, transform_indices = @transform_6, window_bounds = array<i64: 1, 64>}, {pipeline_mode = #tpu.pipeline_mode<synchronous>, transform_indices = @transform_7, window_bounds = array<i64: 64, 64>}, {pipeline_mode = #tpu.pipeline_mode<synchronous>, transform_indices = @transform_8, window_bounds = array<i64: 1, 64>}, {pipeline_mode = #tpu.pipeline_mode<synchronous>, transform_indices = @transform_9, window_bounds = array<i64: 64, 64>}, {pipeline_mode = #tpu.pipeline_mode<synchronous>, transform_indices = @transform_10, window_bounds = array<i64: 1, 64>}, {pipeline_mode = #tpu.pipeline_mode<synchronous>, transform_indices = @transform_11, window_bounds = array<i64: 64, 128>}, {pipeline_mode = #tpu.pipeline_mode<synchronous>, transform_indices = @transform_12, window_bounds = array<i64: 1, 128>}, {transform_indices = @transform_13, window_bounds = array<i64: 32, 128>}]} {
    %c0 = arith.constant 0 : index
    %c0_0 = arith.constant 0 : index
    %0 = vector.load %arg1[%c0, %c0_0] : memref<32x128xf32, #tpu.memory_space<vmem>>, vector<32x128xf32>
    %1 = arith.truncf %0 : vector<32x128xf32> to vector<32x128xbf16>
    %c0_1 = arith.constant 0 : index
    %c0_2 = arith.constant 0 : index
    %2 = vector.load %arg2[%c0_1, %c0_2] : memref<128x64xbf16, #tpu.memory_space<vmem>>, vector<128x64xbf16>
    %cst = arith.constant dense<0.000000e+00> : vector<32x64xf32>
    %3 = tpu.matmul %1, %2, %cst {dimension_numbers = #tpu.dot_dimension_numbers<[1], [0], [0], [1], [0, 0, 1, 1], [], []>} : vector<32x128xbf16>, vector<128x64xbf16>, vector<32x64xf32> -> vector<32x64xf32>
    %c0_3 = arith.constant 0 : index
    %c0_4 = arith.constant 0 : index
    %4 = vector.load %arg3[%c0_3, %c0_4] : memref<1x64xf32, #tpu.memory_space<vmem>>, vector<1x64xf32>
    %5 = vector.broadcast %4 : vector<1x64xf32> to vector<32x64xf32>
    %6 = arith.addf %3, %5 : vector<32x64xf32>
    %cst_5 = arith.constant 0.000000e+00 : f32
    %7 = vector.broadcast %cst_5 : f32 to vector<32x64xf32>
    %8 = arith.maximumf %6, %7 : vector<32x64xf32>
    %9 = arith.truncf %8 : vector<32x64xf32> to vector<32x64xbf16>
    %c0_6 = arith.constant 0 : index
    %c0_7 = arith.constant 0 : index
    %10 = vector.load %arg4[%c0_6, %c0_7] : memref<64x64xbf16, #tpu.memory_space<vmem>>, vector<64x64xbf16>
    %cst_8 = arith.constant dense<0.000000e+00> : vector<32x64xf32>
    %11 = tpu.matmul %9, %10, %cst_8 {dimension_numbers = #tpu.dot_dimension_numbers<[1], [0], [0], [1], [0, 0, 1, 1], [], []>} : vector<32x64xbf16>, vector<64x64xbf16>, vector<32x64xf32> -> vector<32x64xf32>
    %c0_9 = arith.constant 0 : index
    %c0_10 = arith.constant 0 : index
    %12 = vector.load %arg5[%c0_9, %c0_10] : memref<1x64xf32, #tpu.memory_space<vmem>>, vector<1x64xf32>
    %13 = vector.broadcast %12 : vector<1x64xf32> to vector<32x64xf32>
    %14 = arith.addf %11, %13 : vector<32x64xf32>
    %cst_11 = arith.constant 0.000000e+00 : f32
    %15 = vector.broadcast %cst_11 : f32 to vector<32x64xf32>
    %16 = arith.maximumf %14, %15 : vector<32x64xf32>
    %17 = arith.truncf %16 : vector<32x64xf32> to vector<32x64xbf16>
    %c0_12 = arith.constant 0 : index
    %c0_13 = arith.constant 0 : index
    %18 = vector.load %arg6[%c0_12, %c0_13] : memref<64x64xbf16, #tpu.memory_space<vmem>>, vector<64x64xbf16>
    %cst_14 = arith.constant dense<0.000000e+00> : vector<32x64xf32>
    %19 = tpu.matmul %17, %18, %cst_14 {dimension_numbers = #tpu.dot_dimension_numbers<[1], [0], [0], [1], [0, 0, 1, 1], [], []>} : vector<32x64xbf16>, vector<64x64xbf16>, vector<32x64xf32> -> vector<32x64xf32>
    %c0_15 = arith.constant 0 : index
    %c0_16 = arith.constant 0 : index
    %20 = vector.load %arg7[%c0_15, %c0_16] : memref<1x64xf32, #tpu.memory_space<vmem>>, vector<1x64xf32>
    %21 = vector.broadcast %20 : vector<1x64xf32> to vector<32x64xf32>
    %22 = arith.addf %19, %21 : vector<32x64xf32>
    %cst_17 = arith.constant 0.000000e+00 : f32
    %23 = vector.broadcast %cst_17 : f32 to vector<32x64xf32>
    %24 = arith.maximumf %22, %23 : vector<32x64xf32>
    %25 = arith.truncf %24 : vector<32x64xf32> to vector<32x64xbf16>
    %c0_18 = arith.constant 0 : index
    %c0_19 = arith.constant 0 : index
    %26 = vector.load %arg8[%c0_18, %c0_19] : memref<64x64xbf16, #tpu.memory_space<vmem>>, vector<64x64xbf16>
    %cst_20 = arith.constant dense<0.000000e+00> : vector<32x64xf32>
    %27 = tpu.matmul %25, %26, %cst_20 {dimension_numbers = #tpu.dot_dimension_numbers<[1], [0], [0], [1], [0, 0, 1, 1], [], []>} : vector<32x64xbf16>, vector<64x64xbf16>, vector<32x64xf32> -> vector<32x64xf32>
    %c0_21 = arith.constant 0 : index
    %c0_22 = arith.constant 0 : index
    %28 = vector.load %arg9[%c0_21, %c0_22] : memref<1x64xf32, #tpu.memory_space<vmem>>, vector<1x64xf32>
    %29 = vector.broadcast %28 : vector<1x64xf32> to vector<32x64xf32>
    %30 = arith.addf %27, %29 : vector<32x64xf32>
    %cst_23 = arith.constant 0.000000e+00 : f32
    %31 = vector.broadcast %cst_23 : f32 to vector<32x64xf32>
    %32 = arith.maximumf %30, %31 : vector<32x64xf32>
    %33 = arith.truncf %32 : vector<32x64xf32> to vector<32x64xbf16>
    %c0_24 = arith.constant 0 : index
    %c0_25 = arith.constant 0 : index
    %34 = vector.load %arg10[%c0_24, %c0_25] : memref<64x64xbf16, #tpu.memory_space<vmem>>, vector<64x64xbf16>
    %cst_26 = arith.constant dense<0.000000e+00> : vector<32x64xf32>
    %35 = tpu.matmul %33, %34, %cst_26 {dimension_numbers = #tpu.dot_dimension_numbers<[1], [0], [0], [1], [0, 0, 1, 1], [], []>} : vector<32x64xbf16>, vector<64x64xbf16>, vector<32x64xf32> -> vector<32x64xf32>
    %c0_27 = arith.constant 0 : index
    %c0_28 = arith.constant 0 : index
    %36 = vector.load %arg11[%c0_27, %c0_28] : memref<1x64xf32, #tpu.memory_space<vmem>>, vector<1x64xf32>
    %37 = vector.broadcast %36 : vector<1x64xf32> to vector<32x64xf32>
    %38 = arith.addf %35, %37 : vector<32x64xf32>
    %cst_29 = arith.constant 0.000000e+00 : f32
    %39 = vector.broadcast %cst_29 : f32 to vector<32x64xf32>
    %40 = arith.maximumf %38, %39 : vector<32x64xf32>
    %41 = arith.truncf %40 : vector<32x64xf32> to vector<32x64xbf16>
    %c0_30 = arith.constant 0 : index
    %c0_31 = arith.constant 0 : index
    %42 = vector.load %arg12[%c0_30, %c0_31] : memref<64x128xbf16, #tpu.memory_space<vmem>>, vector<64x128xbf16>
    %cst_32 = arith.constant dense<0.000000e+00> : vector<32x128xf32>
    %43 = tpu.matmul %41, %42, %cst_32 {dimension_numbers = #tpu.dot_dimension_numbers<[1], [0], [0], [1], [0, 0, 1, 1], [], []>} : vector<32x64xbf16>, vector<64x128xbf16>, vector<32x128xf32> -> vector<32x128xf32>
    %c0_33 = arith.constant 0 : index
    %c0_34 = arith.constant 0 : index
    %44 = vector.load %arg13[%c0_33, %c0_34] : memref<1x128xf32, #tpu.memory_space<vmem>>, vector<1x128xf32>
    %45 = vector.broadcast %44 : vector<1x128xf32> to vector<32x128xf32>
    %46 = arith.addf %43, %45 : vector<32x128xf32>
    %c0_35 = arith.constant 0 : index
    %c0_36 = arith.constant 0 : index
    %47 = vector.load %arg14[%c0_35, %c0_36] : memref<32x128xf32, #tpu.memory_space<vmem>>, vector<32x128xf32>
    tpu.vector_store %arg14[%c0_35, %c0_36], %46 {strides = array<i32>} : memref<32x128xf32, #tpu.memory_space<vmem>>, vector<32x128xf32>,
    return
  }
  func.func @transform_0(%arg0: i32) -> (i32, i32) {
    %c0_i32 = arith.constant 0 : i32
    %c0_i32_0 = arith.constant 0 : i32
    return %arg0, %c0_i32 : i32, i32
  }
  func.func @transform_1(%arg0: i32) -> (i32, i32) {
    %c0_i32 = arith.constant 0 : i32
    %c0_i32_0 = arith.constant 0 : i32
    %c0_i32_1 = arith.constant 0 : i32
    return %c0_i32, %c0_i32_0 : i32, i32
  }
  func.func @transform_2(%arg0: i32) -> (i32, i32) {
    %c0_i32 = arith.constant 0 : i32
    %c0_i32_0 = arith.constant 0 : i32
    %c0_i32_1 = arith.constant 0 : i32
    return %c0_i32, %c0_i32_0 : i32, i32
  }
  func.func @transform_3(%arg0: i32) -> (i32, i32) {
    %c0_i32 = arith.constant 0 : i32
    %c0_i32_0 = arith.constant 0 : i32
    %c0_i32_1 = arith.constant 0 : i32
    return %c0_i32, %c0_i32_0 : i32, i32
  }
  func.func @transform_4(%arg0: i32) -> (i32, i32) {
    %c0_i32 = arith.constant 0 : i32
    %c0_i32_0 = arith.constant 0 : i32
    %c0_i32_1 = arith.constant 0 : i32
    return %c0_i32, %c0_i32_0 : i32, i32
  }
  func.func @transform_5(%arg0: i32) -> (i32, i32) {
    %c0_i32 = arith.constant 0 : i32
    %c0_i32_0 = arith.constant 0 : i32
    %c0_i32_1 = arith.constant 0 : i32
    return %c0_i32, %c0_i32_0 : i32, i32
  }
  func.func @transform_6(%arg0: i32) -> (i32, i32) {
    %c0_i32 = arith.constant 0 : i32
    %c0_i32_0 = arith.constant 0 : i32
    %c0_i32_1 = arith.constant 0 : i32
    return %c0_i32, %c0_i32_0 : i32, i32
  }
  func.func @transform_7(%arg0: i32) -> (i32, i32) {
    %c0_i32 = arith.constant 0 : i32
    %c0_i32_0 = arith.constant 0 : i32
    %c0_i32_1 = arith.constant 0 : i32
    return %c0_i32, %c0_i32_0 : i32, i32
  }
  func.func @transform_8(%arg0: i32) -> (i32, i32) {
    %c0_i32 = arith.constant 0 : i32
    %c0_i32_0 = arith.constant 0 : i32
    %c0_i32_1 = arith.constant 0 : i32
    return %c0_i32, %c0_i32_0 : i32, i32
  }
  func.func @transform_9(%arg0: i32) -> (i32, i32) {
    %c0_i32 = arith.constant 0 : i32
    %c0_i32_0 = arith.constant 0 : i32
    %c0_i32_1 = arith.constant 0 : i32
    return %c0_i32, %c0_i32_0 : i32, i32
  }
  func.func @transform_10(%arg0: i32) -> (i32, i32) {
    %c0_i32 = arith.constant 0 : i32
    %c0_i32_0 = arith.constant 0 : i32
    %c0_i32_1 = arith.constant 0 : i32
    return %c0_i32, %c0_i32_0 : i32, i32
  }
  func.func @transform_11(%arg0: i32) -> (i32, i32) {
    %c0_i32 = arith.constant 0 : i32
    %c0_i32_0 = arith.constant 0 : i32
    %c0_i32_1 = arith.constant 0 : i32
    return %c0_i32, %c0_i32_0 : i32, i32
  }
  func.func @transform_12(%arg0: i32) -> (i32, i32) {
    %c0_i32 = arith.constant 0 : i32
    %c0_i32_0 = arith.constant 0 : i32
    %c0_i32_1 = arith.constant 0 : i32
    return %c0_i32, %c0_i32_0 : i32, i32
  }
  func.func @transform_13(%arg0: i32) -> (i32, i32) {
    %c0_i32 = arith.constant 0 : i32
    %c0_i32_0 = arith.constant 0 : i32
    return %arg0, %c0_i32 : i32, i32
  }
}

</mosaic_0001>

<llo_original>
// kernel: graph_nbeats_forward.5
$region0: #{graph_nbeats_forward.5}
  #allocation0 [shape = 'u32[]', space=smem, size = 0x4, offset = 0x4, fixed_abs, tag = 'smem constant byte address 0x4 - core index']
  #allocation1 [shape = 'u32[144,128]{1,0:T(1,128)}', space=vmem, size = 0x12000, scoped, tag = 'internal scratch']
  %s0 = inlined_call_operand.vmem [shape: f32[16,32], index: 0, kind: input, shape index: {}]
  %s1 = inlined_call_operand.vmem [shape: bf16[16,16], index: 1, kind: output, shape index: {}]
  %s2 = sld [smem:[#allocation0]]
  $region14: #{graph_nbeats_forward.5} parent=0
    _
  %s4 = ssub.s32 1, %s2
  %s5 = scalar_select 0, %s4, %s2
  // Predicated region
  $region2: #{graph_nbeats_forward.5} parent=0 // pred_check
    _
  $region3: #{graph_nbeats_forward.5} parent=0 // pred_check_branch
    %7 = sbr.rel (0) target = $region5
  $region4: #{graph_nbeats_forward.5} parent=0 // pred_region
    _
  $region5: #{graph_nbeats_forward.5} parent=0 // pred_fallthru
    _
  %v8 = vld [vmem:[%s0] sm:$0xff]
  %v9 = vld [vmem:[%s0 + $0x8] sm:$0xff]
  %vm10 = vcmask 261120
  %v12 = vsel %vm10, %v8, 0
  %v15 = vsel %vm10, %v9, 0
  %17 = vmatprep.subr.mxu0 0.0
  %18 = vmatpush1.xpose.msra.mxu0 %v12
  %19 = vmatprep.subr.mxu0 0.0
  %20 = vmatpush1.xpose.msra.mxu0 %v15
  %21 = vmatprep.subr.mxu0 0.0
  %22 = vmatpush1.xpose.msra.mxu0 0.0
  %23 = vmatprep.subr.mxu0 0.0
  %24 = vmatpush1.xpose.msra.mxu0 0.0
  %25 = vmatprep.subr.mxu0 0.0
  %26 = vmatpush1.xpose.msra.mxu0 0.0
  %27 = vmatprep.subr.mxu0 0.0
  %28 = vmatpush1.xpose.msra.mxu0 0.0
  %29 = vmatprep.subr.mxu0 0.0
  %30 = vmatpush1.xpose.msra.mxu0 0.0
  %31 = vmatprep.subr.mxu0 0.0
  %32 = vmatpush1.xpose.msra.mxu0 0.0
  %33 = vmatprep.subr.mxu0 0.0
  %34 = vmatpush1.xpose.msra.mxu0 0.0
  %35 = vmatprep.subr.mxu0 0.0
  %36 = vmatpush1.xpose.msra.mxu0 0.0
  %37 = vmatprep.subr.mxu0 0.0
  %38 = vmatpush1.xpose.msra.mxu0 0.0
  %39 = vmatprep.subr.mxu0 0.0
  %40 = vmatpush1.xpose.msra.mxu0 0.0
  %41 = vmatprep.subr.mxu0 0.0
  %42 = vmatpush1.xpose.msra.mxu0 0.0
  %43 = vmatprep.subr.mxu0 0.0
  %44 = vmatpush1.xpose.msra.mxu0 0.0
  %45 = vmatprep.subr.mxu0 0.0
  %46 = vmatpush1.xpose.msra.mxu0 0.0
  %47 = vmatprep.subr.mxu0 0.0
  %48 = vmatpush1.xpose.msra.mxu0 0.0
  %49 = vmatprep.subr.mxu0 0.0
  %50 = vmatpush1.xpose.msra.mxu0 0.0
  %51 = vmatprep.subr.mxu0 0.0
  %52 = vmatpush1.xpose.msra.mxu0 0.0
  %53 = vmatprep.subr.mxu0 0.0
  %54 = vmatpush1.xpose.msra.mxu0 0.0
  %55 = vmatprep.subr.mxu0 0.0
  %56 = vmatpush1.xpose.msra.mxu0 0.0
  %57 = vmatprep.subr.mxu0 0.0
  %58 = vmatpush1.xpose.msra.mxu0 0.0
  %59 = vmatprep.subr.mxu0 0.0
  %60 = vmatpush1.xpose.msra.mxu0 0.0
  %61 = vmatprep.subr.mxu0 0.0
  %62 = vmatpush1.xpose.msra.mxu0 0.0
  %63 = vmatprep.subr.mxu0 0.0
  %64 = vmatpush1.xpose.msra.mxu0 0.0
  %65 = vmatprep.subr.mxu0 0.0
  %66 = vmatpush1.xpose.msra.mxu0 0.0
  %67 = vmatprep.subr.mxu0 0.0
  %68 = vmatpush1.xpose.msra.mxu0 0.0
  %69 = vmatprep.subr.mxu0 0.0
  %70 = vmatpush1.xpose.msra.mxu0 0.0
  %71 = vmatprep.subr.mxu0 0.0
  %72 = vmatpush1.xpose.msra.mxu0 0.0
  %73 = vmatprep.subr.mxu0 0.0
  %74 = vmatpush1.xpose.msra.mxu0 0.0
  %75 = vmatprep.subr.mxu0 0.0
  %76 = vmatpush1.xpose.msra.mxu0 0.0
  %77 = vmatprep.subr.mxu0 0.0
  %78 = vmatpush1.xpose.msra.mxu0 0.0
  %79 = vmatprep.subr.mxu0 0.0
  %80 = vmatpush1.xpose.msra.mxu0 0.0
  %81 = vmatprep.mubr.f32.mxu0 0.0
  %82 = vmatmul.mubr.f32.gmra.mrb[0].mxu0 %v12
  %v83 = vpop.f32.mrb[0].mxu0
  %v84 = vadd.f32 0.0, %v83
  %v85 = vpop.f32.mrb[0].mxu0
  %86 = vmatprep.mubr.f32.mxu0 0.0
  %87 = vmatmul.mubr.f32.gmra.mrb[0].mxu0 %v15
  %v88 = vpop.f32.mrb[0].mxu0
  %v89 = vadd.f32 0.0, %v88
  %v90 = vpop.f32.mrb[0].mxu0
  %91 = vdwg.mxu0
  %v92 = vmax.f32 %v84, 0.0
  %v93 = vmax.f32 %v89, 0.0
  %vm94 = vcmask 130048
  %v95 = vsel %vm94, %v92, -inf
  %96 = vmax.xlane.f32.xlu0 %v95
  %v97 = vpop.xlane.xlu0 %96
  %v98 = vsel %vm94, %v93, -inf
  %99 = vmax.xlane.f32.xlu0 %v98
  %v100 = vpop.xlane.xlu0 %99
  %v101 = vsub.f32 %v92, %v97
  %v102 = vsub.f32 %v93, %v100
  %v103 = vmul.f32 %v101, 1.442695
  %v104 = vpow.pop %v103
  %v105 = vmul.f32 %v102, 1.442695
  %v106 = vpow.pop %v105
  %v107 = vsel %vm94, %v104, 0.0
  %108 = vadd.xlane.f32.xlu0 %v107
  %v109 = vpop.xlane.xlu0 %108
  %v110 = vsel %vm94, %v106, 0.0
  %111 = vadd.xlane.f32.xlu0 %v110
  %v112 = vpop.xlane.xlu0 %111
  %v113 = vrcp.pop %v109
  %v114 = vmul.f32 %v104, %v113
  %v115 = vrcp.pop %v112
  %v116 = vmul.f32 %v106, %v115
  %117 = vxpose.xlu0.b32.start [1/16] %v114, 128
  %118 = vxpose.xlu0.b32.cont [2/16] %v116, 128
  %119 = vxpose.xlu0.b32.cont [3/16] 0.0, 128
  %120 = vxpose.xlu0.b32.cont [4/16] 0.0, 128
  %121 = vxpose.xlu0.b32.cont [5/16] 0.0, 128
  %122 = vxpose.xlu0.b32.cont [6/16] 0.0, 128
  %123 = vxpose.xlu0.b32.cont [7/16] 0.0, 128
  %124 = vxpose.xlu0.b32.cont [8/16] 0.0, 128
  %125 = vxpose.xlu0.b32.cont [9/16] 0.0, 128
  %126 = vxpose.xlu0.b32.cont [10/16] 0.0, 128
  %127 = vxpose.xlu0.b32.cont [11/16] 0.0, 128
  %128 = vxpose.xlu0.b32.cont [12/16] 0.0, 128
  %129 = vxpose.xlu0.b32.cont [13/16] 0.0, 128
  %130 = vxpose.xlu0.b32.cont [14/16] 0.0, 128
  %131 = vxpose.xlu0.b32.cont [15/16] 0.0, 128
  %132 = vxpose.xlu0.b32.end [16/16] 0.0, 128
  %v133 = vpop.trf.xlu0
  %v134 = vpop.trf.xlu0
  %v135 = vpop.trf.xlu0
  %v136 = vpop.trf.xlu0
  %v137 = vpop.trf.xlu0
  %v138 = vpop.trf.xlu0
  %v139 = vpop.trf.xlu0
  %v140 = vpop.trf.xlu0
  %v141 = vpop.trf.xlu0
  %v142 = vpop.trf.xlu0
  %v143 = vpop.trf.xlu0
  %v144 = vpop.trf.xlu0
  %v145 = vpop.trf.xlu0
  %v146 = vpop.trf.xlu0
  %v147 = vpop.trf.xlu0
  %v148 = vpop.trf.xlu0
  %v149 = vadd.f32 %v114, %v133
  %v150 = vadd.f32 %v116, %v134
  %v151 = vpack.c.bf16 %v150, %v149
  %v153 = vunpack.c.l.b16 %v151
  %v154 = vunpack.c.h.b16 %v151
  %v155 = vpack.c.b16 %v153, %v153
  %v156 = vpack.c.b16 %v154, %v154
  %vm159 = vcmask 125952
  %160 = vst.msk [vmem:[%s1] sm:$0xf] %vm159, %v155
  %161 = vst.msk [vmem:[%s1 + $0x4] sm:$0xf] %vm159, %v156
  // Predicated region
  $region6: #{graph_nbeats_forward.5} parent=0 // pred_check
    _
  $region7: #{graph_nbeats_forward.5} parent=0 // pred_check_branch
    %163 = sbr.rel (0) target = $region9
  $region8: #{graph_nbeats_forward.5} parent=0 // pred_region
    _
  $region9: #{graph_nbeats_forward.5} parent=0 // pred_fallthru
    _
  // Predicated region
  $region10: #{graph_nbeats_forward.5} parent=0 // pred_check
    _
  $region11: #{graph_nbeats_forward.5} parent=0 // pred_check_branch
    %165 = sbr.rel (0) target = $region13
  $region12: #{graph_nbeats_forward.5} parent=0 // pred_region
    _
  $region13: #{graph_nbeats_forward.5} parent=0 // pred_fallthru
    _

// kernel: graph_nbeats_forward.4
$region0: #{graph_nbeats_forward.4}
  #allocation0 [shape = 'u32[]', space=smem, size = 0x4, offset = 0x4, fixed_abs, tag = 'smem constant byte address 0x4 - core index']
  #allocation1 [shape = 'u32[144,128]{1,0:T(1,128)}', space=vmem, size = 0x12000, scoped, tag = 'internal scratch']
  %s0 = inlined_call_operand.vmem [shape: f32[2,8,16,8], index: 0, kind: input, shape index: {}]
  %s1 = inlined_call_operand.vmem [shape: bf16[8,32], index: 1, kind: input, shape index: {}]
  %s2 = inlined_call_operand.vmem [shape: f32[1,32], index: 2, kind: input, shape index: {}]
  %s3 = inlined_call_operand.vmem [shape: bf16[32,32], index: 3, kind: input, shape index: {}]
  %s4 = inlined_call_operand.vmem [shape: f32[1,32], index: 4, kind: input, shape index: {}]
  %s5 = inlined_call_operand.vmem [shape: bf16[32,32], index: 5, kind: input, shape index: {}]
  %s6 = inlined_call_operand.vmem [shape: f32[1,32], index: 6, kind: input, shape index: {}]
  %s7 = inlined_call_operand.vmem [shape: f32[16,32], index: 7, kind: input, shape index: {}]
  %s8 = inlined_call_operand.vmem [shape: f32[2,8,16,32], index: 8, kind: output, shape index: {}]
  %s9 = sld [smem:[#allocation0]]
  $region65: #{graph_nbeats_forward.4} parent=0
    _
  %s11 = ssub.s32 1, %s9
  %s12 = scalar_select 0, %s11, %s9
  loop: start=0, step=1, limit=4
  $region2: #{graph_nbeats_forward.4} parent=0 // loop_pre_header
    _
  $region3: #{graph_nbeats_forward.4} parent=0 // loop_header
    %s14 = sphi 0, %s18
    %p15 = scmp.ge.s32.totalorder %s14, 4
    %s21 = sphi 0, %s33
    %s22 = sphi 0, %s29
    %s23 = sphi 0, %s21
    %s24 = sphi 0, %s22
    %s25 = sphi 0, %s23
    %s26 = sphi 0, %s24
    %s38 = sphi 0, %s40
    %s41 = sphi 0, %s38
    %s42 = sphi 0, %s41
    %s58 = sphi 0, %s42
    %s62 = sphi 0, %s62
    %s64 = sphi 0, %s62
    %s65 = sphi 0, %s64
    %s79 = sphi 0, %s65
    %s83 = sphi 0, %s83
    %s85 = sphi 0, %s83
    %s86 = sphi 0, %s85
    %s100 = sphi 0, %s86
    %s104 = sphi 0, %s104
    %s106 = sphi 0, %s104
    %s107 = sphi 0, %s106
    %s121 = sphi 0, %s107
    %s125 = sphi 0, %s125
    %s127 = sphi 0, %s125
    %s128 = sphi 0, %s127
    %s142 = sphi 0, %s128
    %s146 = sphi 0, %s146
    %s148 = sphi 0, %s146
    %s149 = sphi 0, %s148
    %s163 = sphi 0, %s149
    %s167 = sphi 0, %s167
    %s169 = sphi 0, %s167
    %s170 = sphi 0, %s169
    %s184 = sphi 0, %s170
    %s188 = sphi 0, %s188
    %s190 = sphi 0, %s188
    %s191 = sphi 0, %s190
    %s205 = sphi 0, %s191
    %s213 = sphi 0, %s215
    %s216 = sphi 0, %s213
    %s217 = sphi 0, %s216
    %s233 = sphi 0, %s217
  $region4: #{graph_nbeats_forward.4} parent=0 // loop_header_branch
    %17 = sbr.rel (%p15) target = $region8
  $region5: #{graph_nbeats_forward.4} parent=0 // loop_body
    %s19 = ssub.s32 %s14, 1
    %s20 = ssub.s32 %s14, 2
    %s27 = sadd.s32 1, %s22
    %p28 = scmp.ge.s32.totalorder %s27, 1
    %s29 = scalar_select %p28, 0, %s27
    %s30 = sadd.s32 1, %s21
    %s31 = scalar_select %p28, %s30, %s21
    %p32 = scmp.ge.s32.totalorder %s31, 2
    %s33 = scalar_select %p32, 0, %s31
    %s34 = ssub.s32 %s21, %s33
    %s35 = ssub.s32 %s22, %s29
    %s36 = sor.u32 %s34, %s35
    %p37 = scmp.eq.s32.totalorder %s36, 0
    %s39 = sadd.s32 %s38, 1
    %s40 = scalar_select %p37, %s38, %s39
    %p43 = pneg %p37
    %p44 = scmp.eq.s32.totalorder %s14, 1
    %p45 = por %p43, %p44
    %p46 = scmp.ne.s32.totalorder %s38, %s41
    %p47 = scmp.eq.s32.totalorder %s14, 0
    %p48 = por %p46, %p47
    %p49 = scmp.ne.s32.totalorder %s38, %s41
    %p50 = scmp.eq.s32.totalorder %s19, 1
    %p51 = por %p49, %p50
    %p52 = scmp.ne.s32.totalorder %s41, %s42
    %p53 = scmp.eq.s32.totalorder %s19, 0
    %p54 = por %p52, %p53
    %p55 = scmp.ne.s32.totalorder %s41, %s42
    %p56 = scmp.eq.s32.totalorder %s20, 1
    %p57 = por %p55, %p56
    %p59 = scmp.ne.s32.totalorder %s42, %s58
    %p60 = scmp.eq.s32.totalorder %s20, 0
    %p61 = por %p59, %p60
    %s63 = sadd.s32 %s62, 1
    %p66 = scmp.eq.s32.totalorder %s14, 1
    %p67 = scmp.ne.s32.totalorder %s62, %s64
    %p68 = scmp.eq.s32.totalorder %s14, 0
    %p69 = por %p67, %p68
    %p70 = scmp.ne.s32.totalorder %s62, %s64
    %p71 = scmp.eq.s32.totalorder %s19, 1
    %p72 = por %p70, %p71
    %p73 = scmp.ne.s32.totalorder %s64, %s65
    %p74 = scmp.eq.s32.totalorder %s19, 0
    %p75 = por %p73, %p74
    %p76 = scmp.ne.s32.totalorder %s64, %s65
    %p77 = scmp.eq.s32.totalorder %s20, 1
    %p78 = por %p76, %p77
    %p80 = scmp.ne.s32.totalorder %s65, %s79
    %p81 = scmp.eq.s32.totalorder %s20, 0
    %p82 = por %p80, %p81
    %s84 = sadd.s32 %s83, 1
    %p87 = scmp.eq.s32.totalorder %s14, 1
    %p88 = scmp.ne.s32.totalorder %s83, %s85
    %p89 = scmp.eq.s32.totalorder %s14, 0
    %p90 = por %p88, %p89
    %p91 = scmp.ne.s32.totalorder %s83, %s85
    %p92 = scmp.eq.s32.totalorder %s19, 1
    %p93 = por %p91, %p92
    %p94 = scmp.ne.s32.totalorder %s85, %s86
    %p95 = scmp.eq.s32.totalorder %s19, 0
    %p96 = por %p94, %p95
    %p97 = scmp.ne.s32.totalorder %s85, %s86
    %p98 = scmp.eq.s32.totalorder %s20, 1
    %p99 = por %p97, %p98
    %p101 = scmp.ne.s32.totalorder %s86, %s100
    %p102 = scmp.eq.s32.totalorder %s20, 0
    %p103 = por %p101, %p102
    %s105 = sadd.s32 %s104, 1
    %p108 = scmp.eq.s32.totalorder %s14, 1
    %p109 = scmp.ne.s32.totalorder %s104, %s106
    %p110 = scmp.eq.s32.totalorder %s14, 0
    %p111 = por %p109, %p110
    %p112 = scmp.ne.s32.totalorder %s104, %s106
    %p113 = scmp.eq.s32.totalorder %s19, 1
    %p114 = por %p112, %p113
    %p115 = scmp.ne.s32.totalorder %s106, %s107
    %p116 = scmp.eq.s32.totalorder %s19, 0
    %p117 = por %p115, %p116
    %p118 = scmp.ne.s32.totalorder %s106, %s107
    %p119 = scmp.eq.s32.totalorder %s20, 1
    %p120 = por %p118, %p119
    %p122 = scmp.ne.s32.totalorder %s107, %s121
    %p123 = scmp.eq.s32.totalorder %s20, 0
    %p124 = por %p122, %p123
    %s126 = sadd.s32 %s125, 1
    %p129 = scmp.eq.s32.totalorder %s14, 1
    %p130 = scmp.ne.s32.totalorder %s125, %s127
    %p131 = scmp.eq.s32.totalorder %s14, 0
    %p132 = por %p130, %p131
    %p133 = scmp.ne.s32.totalorder %s125, %s127
    %p134 = scmp.eq.s32.totalorder %s19, 1
    %p135 = por %p133, %p134
    %p136 = scmp.ne.s32.totalorder %s127, %s128
    %p137 = scmp.eq.s32.totalorder %s19, 0
    %p138 = por %p136, %p137
    %p139 = scmp.ne.s32.totalorder %s127, %s128
    %p140 = scmp.eq.s32.totalorder %s20, 1
    %p141 = por %p139, %p140
    %p143 = scmp.ne.s32.totalorder %s128, %s142
    %p144 = scmp.eq.s32.totalorder %s20, 0
    %p145 = por %p143, %p144
    %s147 = sadd.s32 %s146, 1
    %p150 = scmp.eq.s32.totalorder %s14, 1
    %p151 = scmp.ne.s32.totalorder %s146, %s148
    %p152 = scmp.eq.s32.totalorder %s14, 0
    %p153 = por %p151, %p152
    %p154 = scmp.ne.s32.totalorder %s146, %s148
    %p155 = scmp.eq.s32.totalorder %s19, 1
    %p156 = por %p154, %p155
    %p157 = scmp.ne.s32.totalorder %s148, %s149
    %p158 = scmp.eq.s32.totalorder %s19, 0
    %p159 = por %p157, %p158
    %p160 = scmp.ne.s32.totalorder %s148, %s149
    %p161 = scmp.eq.s32.totalorder %s20, 1
    %p162 = por %p160, %p161
    %p164 = scmp.ne.s32.totalorder %s149, %s163
    %p165 = scmp.eq.s32.totalorder %s20, 0
    %p166 = por %p164, %p165
    %s168 = sadd.s32 %s167, 1
    %p171 = scmp.eq.s32.totalorder %s14, 1
    %p172 = scmp.ne.s32.totalorder %s167, %s169
    %p173 = scmp.eq.s32.totalorder %s14, 0
    %p174 = por %p172, %p173
    %p175 = scmp.ne.s32.totalorder %s167, %s169
    %p176 = scmp.eq.s32.totalorder %s19, 1
    %p177 = por %p175, %p176
    %p178 = scmp.ne.s32.totalorder %s169, %s170
    %p179 = scmp.eq.s32.totalorder %s19, 0
    %p180 = por %p178, %p179
    %p181 = scmp.ne.s32.totalorder %s169, %s170
    %p182 = scmp.eq.s32.totalorder %s20, 1
    %p183 = por %p181, %p182
    %p185 = scmp.ne.s32.totalorder %s170, %s184
    %p186 = scmp.eq.s32.totalorder %s20, 0
    %p187 = por %p185, %p186
    %s189 = sadd.s32 %s188, 1
    %p192 = scmp.eq.s32.totalorder %s14, 1
    %p193 = scmp.ne.s32.totalorder %s188, %s190
    %p194 = scmp.eq.s32.totalorder %s14, 0
    %p195 = por %p193, %p194
    %p196 = scmp.ne.s32.totalorder %s188, %s190
    %p197 = scmp.eq.s32.totalorder %s19, 1
    %p198 = por %p196, %p197
    %p199 = scmp.ne.s32.totalorder %s190, %s191
    %p200 = scmp.eq.s32.totalorder %s19, 0
    %p201 = por %p199, %p200
    %p202 = scmp.ne.s32.totalorder %s190, %s191
    %p203 = scmp.eq.s32.totalorder %s20, 1
    %p204 = por %p202, %p203
    %p206 = scmp.ne.s32.totalorder %s191, %s205
    %p207 = scmp.eq.s32.totalorder %s20, 0
    %p208 = por %p206, %p207
    %s209 = ssub.s32 %s21, %s33
    %s210 = ssub.s32 %s22, %s29
    %s211 = sor.u32 %s209, %s210
    %p212 = scmp.eq.s32.totalorder %s211, 0
    %s214 = sadd.s32 %s213, 1
    %s215 = scalar_select %p212, %s213, %s214
    %p218 = pneg %p212
    %p219 = scmp.eq.s32.totalorder %s14, 1
    %p220 = por %p218, %p219
    %p221 = scmp.ne.s32.totalorder %s213, %s216
    %p222 = scmp.eq.s32.totalorder %s14, 0
    %p223 = por %p221, %p222
    %p224 = scmp.ne.s32.totalorder %s213, %s216
    %p225 = scmp.eq.s32.totalorder %s19, 1
    %p226 = por %p224, %p225
    %p227 = scmp.ne.s32.totalorder %s216, %s217
    %p228 = scmp.eq.s32.totalorder %s19, 0
    %p229 = por %p227, %p228
    %p230 = scmp.ne.s32.totalorder %s216, %s217
    %p231 = scmp.eq.s32.totalorder %s20, 1
    %p232 = por %p230, %p231
    %p234 = scmp.ne.s32.totalorder %s217, %s233
    %p235 = scmp.eq.s32.totalorder %s20, 0
    %p236 = por %p234, %p235
    %p237 = scmp.le.s32.totalorder 1, %s14
    %p238 = scmp.lt.s32.totalorder %s14, 3
    %p239 = pnand %p237, %p238
    %p240 = pneg %p239
    // Predicated region
    $region9: #{graph_nbeats_forward.4} parent=5 // pred_check
      _
    $region10: #{graph_nbeats_forward.4} parent=5 // pred_check_branch
      %242 = sbr.rel (%p239) target = $region12
    $region11: #{graph_nbeats_forward.4} parent=5 // pred_region
      %s243 = ssub.s32 %s14, 1
      // Predicated region
      $region13: #{graph_nbeats_forward.4} parent=11 // pred_check
        %p244 = pneg %p75
      $region14: #{graph_nbeats_forward.4} parent=11 // pred_check_branch
        %246 = sbr.rel (%p244) target = $region16
      $region15: #{graph_nbeats_forward.4} parent=11 // pred_region
        _
      $region16: #{graph_nbeats_forward.4} parent=11 // pred_fallthru
        _
      // Predicated region
      $region17: #{graph_nbeats_forward.4} parent=11 // pred_check
        %p247 = pneg %p96
      $region18: #{graph_nbeats_forward.4} parent=11 // pred_check_branch
        %249 = sbr.rel (%p247) target = $region20
      $region19: #{graph_nbeats_forward.4} parent=11 // pred_region
        _
      $region20: #{graph_nbeats_forward.4} parent=11 // pred_fallthru
        _
      // Predicated region
      $region21: #{graph_nbeats_forward.4} parent=11 // pred_check
        %p250 = pneg %p117
      $region22: #{graph_nbeats_forward.4} parent=11 // pred_check_branch
        %252 = sbr.rel (%p250) target = $region24
      $region23: #{graph_nbeats_forward.4} parent=11 // pred_region
        _
      $region24: #{graph_nbeats_forward.4} parent=11 // pred_fallthru
        _
      // Predicated region
      $region25: #{graph_nbeats_forward.4} parent=11 // pred_check
        %p253 = pneg %p138
      $region26: #{graph_nbeats_forward.4} parent=11 // pred_check_branch
        %255 = sbr.rel (%p253) target = $region28
      $region27: #{graph_nbeats_forward.4} parent=11 // pred_region
        _
      $region28: #{graph_nbeats_forward.4} parent=11 // pred_fallthru
        _
      // Predicated region
      $region29: #{graph_nbeats_forward.4} parent=11 // pred_check
        %p256 = pneg %p159
      $region30: #{graph_nbeats_forward.4} parent=11 // pred_check_branch
        %258 = sbr.rel (%p256) target = $region32
      $region31: #{graph_nbeats_forward.4} parent=11 // pred_region
        _
      $region32: #{graph_nbeats_forward.4} parent=11 // pred_fallthru
        _
      // Predicated region
      $region33: #{graph_nbeats_forward.4} parent=11 // pred_check
        %p259 = pneg %p180
      $region34: #{graph_nbeats_forward.4} parent=11 // pred_check_branch
        %261 = sbr.rel (%p259) target = $region36
      $region35: #{graph_nbeats_forward.4} parent=11 // pred_region
        _
      $region36: #{graph_nbeats_forward.4} parent=11 // pred_fallthru
        _
      // Predicated region
      $region37: #{graph_nbeats_forward.4} parent=11 // pred_check
        %p262 = pneg %p201
      $region38: #{graph_nbeats_forward.4} parent=11 // pred_check_branch
        %264 = sbr.rel (%p262) target = $region40
      $region39: #{graph_nbeats_forward.4} parent=11 // pred_region
        _
      $region40: #{graph_nbeats_forward.4} parent=11 // pred_fallthru
        _
    $region12: #{graph_nbeats_forward.4} parent=5 // pred_fallthru
      _
    %p265 = scmp.lt.s32.totalorder %s14, 2
    // Predicated region
    $region41: #{graph_nbeats_forward.4} parent=5 // pred_check
      %p266 = pneg %p265
    $region42: #{graph_nbeats_forward.4} parent=5 // pred_check_branch
      %268 = sbr.rel (%p266) target = $region44
    $region43: #{graph_nbeats_forward.4} parent=5 // pred_region
      // Predicated region
      $region45: #{graph_nbeats_forward.4} parent=43 // pred_check
        %p269 = pneg %p48
      $region46: #{graph_nbeats_forward.4} parent=43 // pred_check_branch
        %271 = sbr.rel (%p269) target = $region48
      $region47: #{graph_nbeats_forward.4} parent=43 // pred_region
        %s272 = smul.u32 8, %s22
        %p273 = scmp.lt.s32.totalorder %s21, 1
        %s274 = scalar_select %p273, %s21, 1
        %p275 = scmp.lt.s32.totalorder %s272, 7
        %s276 = scalar_select %p275, %s272, 7
        %s277 = smul.addr %s276, 2
        %s278 = smul.addr %s274, 16
        %s279 = sadd.s32 %s277, %s278
        %s280 = smul.addr %s279, 8
        %s281 = scalar_lea.vmem %s0, %s280
        %s282 = smul.u32 8, %s22
      $region48: #{graph_nbeats_forward.4} parent=43 // pred_fallthru
        _
    $region44: #{graph_nbeats_forward.4} parent=5 // pred_fallthru
      _
    %p283 = scmp.le.s32.totalorder 1, %s14
    %p284 = scmp.lt.s32.totalorder %s14, 3
    %p285 = pnand %p283, %p284
    %p286 = pneg %p285
    // Predicated region
    $region49: #{graph_nbeats_forward.4} parent=5 // pred_check
      _
    $region50: #{graph_nbeats_forward.4} parent=5 // pred_check_branch
      %288 = sbr.rel (%p285) target = $region52
    $region51: #{graph_nbeats_forward.4} parent=5 // pred_region
      %s289 = ssub.s32 %s14, 1
      %s290 = smul.u32 8, %s24
      %p291 = scmp.lt.s32.totalorder %s23, 1
      %s292 = scalar_select %p291, %s23, 1
      %p293 = scmp.lt.s32.totalorder %s290, 7
      %s294 = scalar_select %p293, %s290, 7
      %s295 = smul.addr %s294, 2
      %s296 = smul.addr %s292, 16
      %s297 = sadd.s32 %s295, %s296
      %s298 = smul.addr %s297, 8
      %s299 = scalar_lea.vmem %s0, %s298
      %p300 = pneg %p54
      %p301 = pneg %p51
      %p302 = pneg %p75
      %p303 = pneg %p72
      %p304 = pneg %p96
      %p305 = pneg %p93
      %p306 = pneg %p117
      %p307 = pneg %p114
      %p308 = pneg %p138
      %p309 = pneg %p135
      %p310 = pneg %p159
      %p311 = pneg %p156
      %p312 = pneg %p180
      %p313 = pneg %p177
      %p314 = pneg %p201
      %p315 = pneg %p198
      %p316 = pneg %p229
      %p317 = pneg %p226
      %s318 = smul.u32 8, %s24
      %p319 = scmp.lt.s32.totalorder %s23, 1
      %s320 = scalar_select %p319, %s23, 1
      %p321 = scmp.lt.s32.totalorder %s318, 7
      %s322 = scalar_select %p321, %s318, 7
      %s323 = smul.addr %s322, 2
      %s324 = smul.addr %s320, 16
      %s325 = sadd.s32 %s323, %s324
      %s326 = smul.addr %s325, 8
      %s327 = scalar_lea.vmem %s8, %s326
      %s328 = smul.u32 8, %s24
      %p329 = scmp.lt.s32.totalorder %s23, 1
      %s330 = scalar_select %p329, %s23, 1
      %p331 = scmp.lt.s32.totalorder %s328, 7
      %s332 = scalar_select %p331, %s328, 7
      %s333 = smul.addr %s332, 2
      %s334 = smul.addr %s330, 16
      %s335 = sadd.s32 %s333, %s334
      %s336 = smul.addr %s335, 8
      %s337 = scalar_lea.vmem %s0, %s336
      %s338 = smul.u32 8, %s24
      %s339 = smul.u32 8, %s24
      %p340 = scmp.lt.s32.totalorder %s23, 1
      %s341 = scalar_select %p340, %s23, 1
      %p342 = scmp.lt.s32.totalorder %s339, 7
      %s343 = scalar_select %p342, %s339, 7
      %s344 = smul.addr %s343, 2
      %s345 = smul.addr %s341, 16
      %s346 = sadd.s32 %s344, %s345
      %s347 = smul.addr %s346, 8
      %s348 = scalar_lea.vmem %s8, %s347
      %s349 = smul.u32 8, %s24
      %v351 = vld [vmem:[%s337] sm:$0xff]
      %v352 = vld [vmem:[%s337 + $0x8] sm:$0xff]
      %v353 = vld [vmem:[%s337 + $0x10] sm:$0xff]
      %v354 = vld [vmem:[%s337 + $0x18] sm:$0xff]
      %v355 = vld [vmem:[%s337 + $0x20] sm:$0xff]
      %v356 = vld [vmem:[%s337 + $0x28] sm:$0xff]
      %v357 = vld [vmem:[%s337 + $0x30] sm:$0xff]
      %v358 = vld [vmem:[%s337 + $0x38] sm:$0xff]
      %v359 = vld [vmem:[%s337 + $0x40] sm:$0xff]
      %v360 = vld [vmem:[%s337 + $0x48] sm:$0xff]
      %v361 = vld [vmem:[%s337 + $0x50] sm:$0xff]
      %v362 = vld [vmem:[%s337 + $0x58] sm:$0xff]
      %v363 = vld [vmem:[%s337 + $0x60] sm:$0xff]
      %v364 = vld [vmem:[%s337 + $0x68] sm:$0xff]
      %v365 = vld [vmem:[%s337 + $0x70] sm:$0xff]
      %v366 = vld [vmem:[%s337 + $0x78] sm:$0xff]
      %v367 = vpack.c.bf16 %v352, %v351
      %v368 = vpack.c.bf16 %v354, %v353
      %v369 = vpack.c.bf16 %v356, %v355
      %v370 = vpack.c.bf16 %v358, %v357
      %v371 = vpack.c.bf16 %v360, %v359
      %v372 = vpack.c.bf16 %v362, %v361
      %v373 = vpack.c.bf16 %v364, %v363
      %v374 = vpack.c.bf16 %v366, %v365
      %v375 = vld [vmem:[%s1] sm:$0xf]
      %v376 = vld [vmem:[%s2] sm:$0x1]
      %v378 = vlaneseq
      %v379 = vshrl.u32 %v378, 7
      %v380 = vsub.s32 0, %v379
      %v381 = vrot.slane %v376, %v380
      %vm383 = vcmask 64512
      %v385 = vsel %vm383, %v367, 0
      %v388 = vsel %vm383, %v368, 0
      %v391 = vsel %vm383, %v369, 0
      %v394 = vsel %vm383, %v370, 0
      %v397 = vsel %vm383, %v371, 0
      %v400 = vsel %vm383, %v372, 0
      %v403 = vsel %vm383, %v373, 0
      %v406 = vsel %vm383, %v374, 0
      %vm408 = vcmask 1043456
      %v410 = vsel %vm408, %v375, 0
      %412 = vmatprep.subr.bf16.mxu0 0
      %413 = vmatpush1.bf16.msra.mxu0 %v410
      %414 = vmatprep.subr.bf16.mxu0 0
      %415 = vmatpush1.bf16.msra.mxu0 0
      %416 = vmatprep.subr.bf16.mxu0 0
      %417 = vmatpush1.bf16.msra.mxu0 0
      %418 = vmatprep.subr.bf16.mxu0 0
      %419 = vmatpush1.bf16.msra.mxu0 0
      %420 = vmatprep.subr.bf16.mxu0 0
      %421 = vmatpush1.bf16.msra.mxu0 0
      %422 = vmatprep.subr.bf16.mxu0 0
      %423 = vmatpush1.bf16.msra.mxu0 0
      %424 = vmatprep.subr.bf16.mxu0 0
      %425 = vmatpush1.bf16.msra.mxu0 0
      %426 = vmatprep.subr.bf16.mxu0 0
      %427 = vmatpush1.bf16.msra.mxu0 0
      %428 = vmatprep.subr.bf16.mxu0 0
      %429 = vmatpush1.bf16.msra.mxu0 0
      %430 = vmatprep.subr.bf16.mxu0 0
      %431 = vmatpush1.bf16.msra.mxu0 0
      %432 = vmatprep.subr.bf16.mxu0 0
      %433 = vmatpush1.bf16.msra.mxu0 0
      %434 = vmatprep.subr.bf16.mxu0 0
      %435 = vmatpush1.bf16.msra.mxu0 0
      %436 = vmatprep.subr.bf16.mxu0 0
      %437 = vmatpush1.bf16.msra.mxu0 0
      %438 = vmatprep.subr.bf16.mxu0 0
      %439 = vmatpush1.bf16.msra.mxu0 0
      %440 = vmatprep.subr.bf16.mxu0 0
      %441 = vmatpush1.bf16.msra.mxu0 0
      %442 = vmatprep.subr.bf16.mxu0 0
      %443 = vmatpush1.bf16.msra.mxu0 0
      %444 = vmatprep.mubr.bf16.mxu0 0
      %445 = vmatmul.mubr.bf16.gmra.mrb[0].mxu0 %v385
      %v446 = vpop.f32.mrb[0].mxu0
      %v447 = vadd.f32 %v381, %v446
      %v448 = vpop.f32.mrb[0].mxu0
      %v449 = vpop.f32.mrb[0].mxu0
      %v450 = vadd.f32 %v381, %v449
      %v451 = vpop.f32.mrb[0].mxu0
      %452 = vmatprep.mubr.bf16.mxu0 0
      %453 = vmatmul.mubr.bf16.gmra.mrb[0].mxu0 %v388
      %v454 = vpop.f32.mrb[0].mxu0
      %v455 = vadd.f32 %v381, %v454
      %v456 = vpop.f32.mrb[0].mxu0
      %v457 = vpop.f32.mrb[0].mxu0
      %v458 = vadd.f32 %v381, %v457
      %v459 = vpop.f32.mrb[0].mxu0
      %460 = vmatprep.mubr.bf16.mxu0 0
      %461 = vmatmul.mubr.bf16.gmra.mrb[0].mxu0 %v391
      %v462 = vpop.f32.mrb[0].mxu0
      %v463 = vadd.f32 %v381, %v462
      %v464 = vpop.f32.mrb[0].mxu0
      %v465 = vpop.f32.mrb[0].mxu0
      %v466 = vadd.f32 %v381, %v465
      %v467 = vpop.f32.mrb[0].mxu0
      %468 = vmatprep.mubr.bf16.mxu0 0
      %469 = vmatmul.mubr.bf16.gmra.mrb[0].mxu0 %v394
      %v470 = vpop.f32.mrb[0].mxu0
      %v471 = vadd.f32 %v381, %v470
      %v472 = vpop.f32.mrb[0].mxu0
      %v473 = vpop.f32.mrb[0].mxu0
      %v474 = vadd.f32 %v381, %v473
      %v475 = vpop.f32.mrb[0].mxu0
      %476 = vmatprep.mubr.bf16.mxu0 0
      %477 = vmatmul.mubr.bf16.gmra.mrb[0].mxu0 %v397
      %v478 = vpop.f32.mrb[0].mxu0
      %v479 = vadd.f32 %v381, %v478
      %v480 = vpop.f32.mrb[0].mxu0
      %v481 = vpop.f32.mrb[0].mxu0
      %v482 = vadd.f32 %v381, %v481
      %v483 = vpop.f32.mrb[0].mxu0
      %484 = vmatprep.mubr.bf16.mxu0 0
      %485 = vmatmul.mubr.bf16.gmra.mrb[0].mxu0 %v400
      %v486 = vpop.f32.mrb[0].mxu0
      %v487 = vadd.f32 %v381, %v486
      %v488 = vpop.f32.mrb[0].mxu0
      %v489 = vpop.f32.mrb[0].mxu0
      %v490 = vadd.f32 %v381, %v489
      %v491 = vpop.f32.mrb[0].mxu0
      %492 = vmatprep.mubr.bf16.mxu0 0
      %493 = vmatmul.mubr.bf16.gmra.mrb[0].mxu0 %v403
      %v494 = vpop.f32.mrb[0].mxu0
      %v495 = vadd.f32 %v381, %v494
      %v496 = vpop.f32.mrb[0].mxu0
      %v497 = vpop.f32.mrb[0].mxu0
      %v498 = vadd.f32 %v381, %v497
      %v499 = vpop.f32.mrb[0].mxu0
      %500 = vmatprep.mubr.bf16.mxu0 0
      %501 = vmatmul.mubr.bf16.gmra.mrb[0].mxu0 %v406
      %v502 = vpop.f32.mrb[0].mxu0
      %v503 = vadd.f32 %v381, %v502
      %v504 = vpop.f32.mrb[0].mxu0
      %v505 = vpop.f32.mrb[0].mxu0
      %v506 = vadd.f32 %v381, %v505
      %v507 = vpop.f32.mrb[0].mxu0
      %508 = vdwg.mxu0
      %v509 = vxor.u32 %v447, 2147483648
      %v510 = vxor.u32 %v450, 2147483648
      %v511 = vxor.u32 %v455, 2147483648
      %v512 = vxor.u32 %v458, 2147483648
      %v513 = vxor.u32 %v463, 2147483648
      %v514 = vxor.u32 %v466, 2147483648
      %v515 = vxor.u32 %v471, 2147483648
      %v516 = vxor.u32 %v474, 2147483648
      %v517 = vxor.u32 %v479, 2147483648
      %v518 = vxor.u32 %v482, 2147483648
      %v519 = vxor.u32 %v487, 2147483648
      %v520 = vxor.u32 %v490, 2147483648
      %v521 = vxor.u32 %v495, 2147483648
      %v522 = vxor.u32 %v498, 2147483648
      %v523 = vxor.u32 %v503, 2147483648
      %v524 = vxor.u32 %v506, 2147483648
      %v525 = vmul.f32 %v509, 1.442695
      %v526 = vpow.pop %v525
      %v527 = vmul.f32 %v510, 1.442695
      %v528 = vpow.pop %v527
      %v529 = vmul.f32 %v511, 1.442695
      %v530 = vpow.pop %v529
      %v531 = vmul.f32 %v512, 1.442695
      %v532 = vpow.pop %v531
      %v533 = vmul.f32 %v513, 1.442695
      %v534 = vpow.pop %v533
      %v535 = vmul.f32 %v514, 1.442695
      %v536 = vpow.pop %v535
      %v537 = vmul.f32 %v515, 1.442695
      %v538 = vpow.pop %v537
      %v539 = vmul.f32 %v516, 1.442695
      %v540 = vpow.pop %v539
      %v541 = vmul.f32 %v517, 1.442695
      %v542 = vpow.pop %v541
      %v543 = vmul.f32 %v518, 1.442695
      %v544 = vpow.pop %v543
      %v545 = vmul.f32 %v519, 1.442695
      %v546 = vpow.pop %v545
      %v547 = vmul.f32 %v520, 1.442695
      %v548 = vpow.pop %v547
      %v549 = vmul.f32 %v521, 1.442695
      %v550 = vpow.pop %v549
      %v551 = vmul.f32 %v522, 1.442695
      %v552 = vpow.pop %v551
      %v553 = vmul.f32 %v523, 1.442695
      %v554 = vpow.pop %v553
      %v555 = vmul.f32 %v524, 1.442695
      %v556 = vpow.pop %v555
      %v557 = vadd.f32 %v526, 1.0
      %v558 = vadd.f32 %v528, 1.0
      %v559 = vadd.f32 %v530, 1.0
      %v560 = vadd.f32 %v532, 1.0
      %v561 = vadd.f32 %v534, 1.0
      %v562 = vadd.f32 %v536, 1.0
      %v563 = vadd.f32 %v538, 1.0
      %v564 = vadd.f32 %v540, 1.0
      %v565 = vadd.f32 %v542, 1.0
      %v566 = vadd.f32 %v544, 1.0
      %v567 = vadd.f32 %v546, 1.0
      %v568 = vadd.f32 %v548, 1.0
      %v569 = vadd.f32 %v550, 1.0
      %v570 = vadd.f32 %v552, 1.0
      %v571 = vadd.f32 %v554, 1.0
      %v572 = vadd.f32 %v556, 1.0
      %v573 = vrcp.pop %v557
      %v574 = vmul.f32 1.0, %v573
      %v575 = vrcp.pop %v558
      %v576 = vmul.f32 1.0, %v575
      %v577 = vrcp.pop %v559
      %v578 = vmul.f32 1.0, %v577
      %v579 = vrcp.pop %v560
      %v580 = vmul.f32 1.0, %v579
      %v581 = vrcp.pop %v561
      %v582 = vmul.f32 1.0, %v581
      %v583 = vrcp.pop %v562
      %v584 = vmul.f32 1.0, %v583
      %v585 = vrcp.pop %v563
      %v586 = vmul.f32 1.0, %v585
      %v587 = vrcp.pop %v564
      %v588 = vmul.f32 1.0, %v587
      %v589 = vrcp.pop %v565
      %v590 = vmul.f32 1.0, %v589
      %v591 = vrcp.pop %v566
      %v592 = vmul.f32 1.0, %v591
      %v593 = vrcp.pop %v567
      %v594 = vmul.f32 1.0, %v593
      %v595 = vrcp.pop %v568
      %v596 = vmul.f32 1.0, %v595
      %v597 = vrcp.pop %v569
      %v598 = vmul.f32 1.0, %v597
      %v599 = vrcp.pop %v570
      %v600 = vmul.f32 1.0, %v599
      %v601 = vrcp.pop %v571
      %v602 = vmul.f32 1.0, %v601
      %v603 = vrcp.pop %v572
      %v604 = vmul.f32 1.0, %v603
      %v605 = vmul.f32 %v447, %v574
      %v606 = vmul.f32 %v450, %v576
      %v607 = vmul.f32 %v455, %v578
      %v608 = vmul.f32 %v458, %v580
      %v609 = vmul.f32 %v463, %v582
      %v610 = vmul.f32 %v466, %v584
      %v611 = vmul.f32 %v471, %v586
      %v612 = vmul.f32 %v474, %v588
      %v613 = vmul.f32 %v479, %v590
      %v614 = vmul.f32 %v482, %v592
      %v615 = vmul.f32 %v487, %v594
      %v616 = vmul.f32 %v490, %v596
      %v617 = vmul.f32 %v495, %v598
      %v618 = vmul.f32 %v498, %v600
      %v619 = vmul.f32 %v503, %v602
      %v620 = vmul.f32 %v506, %v604
      %v621 = vpack.c.bf16 %v606, %v605
      %v622 = vpack.c.bf16 %v608, %v607
      %v623 = vpack.c.bf16 %v610, %v609
      %v624 = vpack.c.bf16 %v612, %v611
      %v625 = vpack.c.bf16 %v614, %v613
      %v626 = vpack.c.bf16 %v616, %v615
      %v627 = vpack.c.bf16 %v618, %v617
      %v628 = vpack.c.bf16 %v620, %v619
      %v629 = vld [vmem:[%s3] sm:$0xf]
      %v630 = vld [vmem:[%s3 + $0x4] sm:$0xf]
      %v631 = vld [vmem:[%s3 + $0x8] sm:$0xf]
      %v632 = vld [vmem:[%s3 + $0xc] sm:$0xf]
      %v633 = vld [vmem:[%s4] sm:$0x1]
      %v635 = vlaneseq
      %v636 = vshrl.u32 %v635, 7
      %v637 = vsub.s32 0, %v636
      %v638 = vrot.slane %v633, %v637
      %v644 = vunpack.c.l.b16 %v629
      %v645 = vunpack.c.l.b16 %v630
      %v646 = vunpack.c.l.b16 %v631
      %v647 = vunpack.c.l.b16 %v632
      %v648 = vpack.c.b16 %v645, %v644
      %v649 = vpack.c.b16 %v647, %v646
      %vm652 = vcmask 261120
      %v654 = vsel %vm652, %v621, 0
      %v657 = vsel %vm652, %v622, 0
      %v660 = vsel %vm652, %v623, 0
      %v663 = vsel %vm652, %v624, 0
      %v666 = vsel %vm652, %v625, 0
      %v669 = vsel %vm652, %v626, 0
      %v672 = vsel %vm652, %v627, 0
      %v675 = vsel %vm652, %v628, 0
      %677 = vmatprep.subr.bf16.mxu0 0
      %678 = vmatpush1.bf16.msra.mxu0 %v648
      %679 = vmatprep.subr.bf16.mxu0 0
      %680 = vmatpush1.bf16.msra.mxu0 %v649
      %681 = vmatprep.subr.bf16.mxu0 0
      %682 = vmatpush1.bf16.msra.mxu0 0
      %683 = vmatprep.subr.bf16.mxu0 0
      %684 = vmatpush1.bf16.msra.mxu0 0
      %685 = vmatprep.subr.bf16.mxu0 0
      %686 = vmatpush1.bf16.msra.mxu0 0
      %687 = vmatprep.subr.bf16.mxu0 0
      %688 = vmatpush1.bf16.msra.mxu0 0
      %689 = vmatprep.subr.bf16.mxu0 0
      %690 = vmatpush1.bf16.msra.mxu0 0
      %691 = vmatprep.subr.bf16.mxu0 0
      %692 = vmatpush1.bf16.msra.mxu0 0
      %693 = vmatprep.subr.bf16.mxu0 0
      %694 = vmatpush1.bf16.msra.mxu0 0
      %695 = vmatprep.subr.bf16.mxu0 0
      %696 = vmatpush1.bf16.msra.mxu0 0
      %697 = vmatprep.subr.bf16.mxu0 0
      %698 = vmatpush1.bf16.msra.mxu0 0
      %699 = vmatprep.subr.bf16.mxu0 0
      %700 = vmatpush1.bf16.msra.mxu0 0
      %701 = vmatprep.subr.bf16.mxu0 0
      %702 = vmatpush1.bf16.msra.mxu0 0
      %703 = vmatprep.subr.bf16.mxu0 0
      %704 = vmatpush1.bf16.msra.mxu0 0
      %705 = vmatprep.subr.bf16.mxu0 0
      %706 = vmatpush1.bf16.msra.mxu0 0
      %707 = vmatprep.subr.bf16.mxu0 0
      %708 = vmatpush1.bf16.msra.mxu0 0
      %709 = vmatprep.mubr.bf16.mxu0 0
      %710 = vmatmul.mubr.bf16.gmra.mrb[0].mxu0 %v654
      %v711 = vpop.f32.mrb[0].mxu0
      %v712 = vadd.f32 %v638, %v711
      %v713 = vpop.f32.mrb[0].mxu0
      %v714 = vpop.f32.mrb[0].mxu0
      %v715 = vadd.f32 %v638, %v714
      %v716 = vpop.f32.mrb[0].mxu0
      %717 = vmatprep.mubr.bf16.mxu0 0
      %718 = vmatmul.mubr.bf16.gmra.mrb[0].mxu0 %v657
      %v719 = vpop.f32.mrb[0].mxu0
      %v720 = vadd.f32 %v638, %v719
      %v721 = vpop.f32.mrb[0].mxu0
      %v722 = vpop.f32.mrb[0].mxu0
      %v723 = vadd.f32 %v638, %v722
      %v724 = vpop.f32.mrb[0].mxu0
      %725 = vmatprep.mubr.bf16.mxu0 0
      %726 = vmatmul.mubr.bf16.gmra.mrb[0].mxu0 %v660
      %v727 = vpop.f32.mrb[0].mxu0
      %v728 = vadd.f32 %v638, %v727
      %v729 = vpop.f32.mrb[0].mxu0
      %v730 = vpop.f32.mrb[0].mxu0
      %v731 = vadd.f32 %v638, %v730
      %v732 = vpop.f32.mrb[0].mxu0
      %733 = vmatprep.mubr.bf16.mxu0 0
      %734 = vmatmul.mubr.bf16.gmra.mrb[0].mxu0 %v663
      %v735 = vpop.f32.mrb[0].mxu0
      %v736 = vadd.f32 %v638, %v735
      %v737 = vpop.f32.mrb[0].mxu0
      %v738 = vpop.f32.mrb[0].mxu0
      %v739 = vadd.f32 %v638, %v738
      %v740 = vpop.f32.mrb[0].mxu0
      %741 = vmatprep.mubr.bf16.mxu0 0
      %742 = vmatmul.mubr.bf16.gmra.mrb[0].mxu0 %v666
      %v743 = vpop.f32.mrb[0].mxu0
      %v744 = vadd.f32 %v638, %v743
      %v745 = vpop.f32.mrb[0].mxu0
      %v746 = vpop.f32.mrb[0].mxu0
      %v747 = vadd.f32 %v638, %v746
      %v748 = vpop.f32.mrb[0].mxu0
      %749 = vmatprep.mubr.bf16.mxu0 0
      %750 = vmatmul.mubr.bf16.gmra.mrb[0].mxu0 %v669
      %v751 = vpop.f32.mrb[0].mxu0
      %v752 = vadd.f32 %v638, %v751
      %v753 = vpop.f32.mrb[0].mxu0
      %v754 = vpop.f32.mrb[0].mxu0
      %v755 = vadd.f32 %v638, %v754
      %v756 = vpop.f32.mrb[0].mxu0
      %757 = vmatprep.mubr.bf16.mxu0 0
      %758 = vmatmul.mubr.bf16.gmra.mrb[0].mxu0 %v672
      %v759 = vpop.f32.mrb[0].mxu0
      %v760 = vadd.f32 %v638, %v759
      %v761 = vpop.f32.mrb[0].mxu0
      %v762 = vpop.f32.mrb[0].mxu0
      %v763 = vadd.f32 %v638, %v762
      %v764 = vpop.f32.mrb[0].mxu0
      %765 = vmatprep.mubr.bf16.mxu0 0
      %766 = vmatmul.mubr.bf16.gmra.mrb[0].mxu0 %v675
      %v767 = vpop.f32.mrb[0].mxu0
      %v768 = vadd.f32 %v638, %v767
      %v769 = vpop.f32.mrb[0].mxu0
      %v770 = vpop.f32.mrb[0].mxu0
      %v771 = vadd.f32 %v638, %v770
      %v772 = vpop.f32.mrb[0].mxu0
      %773 = vdwg.mxu0
      %v774 = vxor.u32 %v712, 2147483648
      %v775 = vxor.u32 %v715, 2147483648
      %v776 = vxor.u32 %v720, 2147483648
      %v777 = vxor.u32 %v723, 2147483648
      %v778 = vxor.u32 %v728, 2147483648
      %v779 = vxor.u32 %v731, 2147483648
      %v780 = vxor.u32 %v736, 2147483648
      %v781 = vxor.u32 %v739, 2147483648
      %v782 = vxor.u32 %v744, 2147483648
      %v783 = vxor.u32 %v747, 2147483648
      %v784 = vxor.u32 %v752, 2147483648
      %v785 = vxor.u32 %v755, 2147483648
      %v786 = vxor.u32 %v760, 2147483648
      %v787 = vxor.u32 %v763, 2147483648
      %v788 = vxor.u32 %v768, 2147483648
      %v789 = vxor.u32 %v771, 2147483648
      %v790 = vmul.f32 %v774, 1.442695
      %v791 = vpow.pop %v790
      %v792 = vmul.f32 %v775, 1.442695
      %v793 = vpow.pop %v792
      %v794 = vmul.f32 %v776, 1.442695
      %v795 = vpow.pop %v794
      %v796 = vmul.f32 %v777, 1.442695
      %v797 = vpow.pop %v796
      %v798 = vmul.f32 %v778, 1.442695
      %v799 = vpow.pop %v798
      %v800 = vmul.f32 %v779, 1.442695
      %v801 = vpow.pop %v800
      %v802 = vmul.f32 %v780, 1.442695
      %v803 = vpow.pop %v802
      %v804 = vmul.f32 %v781, 1.442695
      %v805 = vpow.pop %v804
      %v806 = vmul.f32 %v782, 1.442695
      %v807 = vpow.pop %v806
      %v808 = vmul.f32 %v783, 1.442695
      %v809 = vpow.pop %v808
      %v810 = vmul.f32 %v784, 1.442695
      %v811 = vpow.pop %v810
      %v812 = vmul.f32 %v785, 1.442695
      %v813 = vpow.pop %v812
      %v814 = vmul.f32 %v786, 1.442695
      %v815 = vpow.pop %v814
      %v816 = vmul.f32 %v787, 1.442695
      %v817 = vpow.pop %v816
      %v818 = vmul.f32 %v788, 1.442695
      %v819 = vpow.pop %v818
      %v820 = vmul.f32 %v789, 1.442695
      %v821 = vpow.pop %v820
      %v822 = vadd.f32 %v791, 1.0
      %v823 = vadd.f32 %v793, 1.0
      %v824 = vadd.f32 %v795, 1.0
      %v825 = vadd.f32 %v797, 1.0
      %v826 = vadd.f32 %v799, 1.0
      %v827 = vadd.f32 %v801, 1.0
      %v828 = vadd.f32 %v803, 1.0
      %v829 = vadd.f32 %v805, 1.0
      %v830 = vadd.f32 %v807, 1.0
      %v831 = vadd.f32 %v809, 1.0
      %v832 = vadd.f32 %v811, 1.0
      %v833 = vadd.f32 %v813, 1.0
      %v834 = vadd.f32 %v815, 1.0
      %v835 = vadd.f32 %v817, 1.0
      %v836 = vadd.f32 %v819, 1.0
      %v837 = vadd.f32 %v821, 1.0
      %v838 = vrcp.pop %v822
      %v839 = vmul.f32 1.0, %v838
      %v840 = vrcp.pop %v823
      %v841 = vmul.f32 1.0, %v840
      %v842 = vrcp.pop %v824
      %v843 = vmul.f32 1.0, %v842
      %v844 = vrcp.pop %v825
      %v845 = vmul.f32 1.0, %v844
      %v846 = vrcp.pop %v826
      %v847 = vmul.f32 1.0, %v846
      %v848 = vrcp.pop %v827
      %v849 = vmul.f32 1.0, %v848
      %v850 = vrcp.pop %v828
      %v851 = vmul.f32 1.0, %v850
      %v852 = vrcp.pop %v829
      %v853 = vmul.f32 1.0, %v852
      %v854 = vrcp.pop %v830
      %v855 = vmul.f32 1.0, %v854
      %v856 = vrcp.pop %v831
      %v857 = vmul.f32 1.0, %v856
      %v858 = vrcp.pop %v832
      %v859 = vmul.f32 1.0, %v858
      %v860 = vrcp.pop %v833
      %v861 = vmul.f32 1.0, %v860
      %v862 = vrcp.pop %v834
      %v863 = vmul.f32 1.0, %v862
      %v864 = vrcp.pop %v835
      %v865 = vmul.f32 1.0, %v864
      %v866 = vrcp.pop %v836
      %v867 = vmul.f32 1.0, %v866
      %v868 = vrcp.pop %v837
      %v869 = vmul.f32 1.0, %v868
      %v870 = vmul.f32 %v712, %v839
      %v871 = vmul.f32 %v715, %v841
      %v872 = vmul.f32 %v720, %v843
      %v873 = vmul.f32 %v723, %v845
      %v874 = vmul.f32 %v728, %v847
      %v875 = vmul.f32 %v731, %v849
      %v876 = vmul.f32 %v736, %v851
      %v877 = vmul.f32 %v739, %v853
      %v878 = vmul.f32 %v744, %v855
      %v879 = vmul.f32 %v747, %v857
      %v880 = vmul.f32 %v752, %v859
      %v881 = vmul.f32 %v755, %v861
      %v882 = vmul.f32 %v760, %v863
      %v883 = vmul.f32 %v763, %v865
      %v884 = vmul.f32 %v768, %v867
      %v885 = vmul.f32 %v771, %v869
      %v886 = vpack.c.bf16 %v871, %v870
      %v887 = vpack.c.bf16 %v873, %v872
      %v888 = vpack.c.bf16 %v875, %v874
      %v889 = vpack.c.bf16 %v877, %v876
      %v890 = vpack.c.bf16 %v879, %v878
      %v891 = vpack.c.bf16 %v881, %v880
      %v892 = vpack.c.bf16 %v883, %v882
      %v893 = vpack.c.bf16 %v885, %v884
      %v894 = vld [vmem:[%s5] sm:$0xf]
      %v895 = vld [vmem:[%s5 + $0x4] sm:$0xf]
      %v896 = vld [vmem:[%s5 + $0x8] sm:$0xf]
      %v897 = vld [vmem:[%s5 + $0xc] sm:$0xf]
      %v898 = vld [vmem:[%s6] sm:$0x1]
      %v900 = vlaneseq
      %v901 = vshrl.u32 %v900, 7
      %v902 = vsub.s32 0, %v901
      %v903 = vrot.slane %v898, %v902
      %v909 = vunpack.c.l.b16 %v894
      %v910 = vunpack.c.l.b16 %v895
      %v911 = vunpack.c.l.b16 %v896
      %v912 = vunpack.c.l.b16 %v897
      %v913 = vpack.c.b16 %v910, %v909
      %v914 = vpack.c.b16 %v912, %v911
      %v918 = vsel %vm652, %v886, 0
      %v921 = vsel %vm652, %v887, 0
      %v924 = vsel %vm652, %v888, 0
      %v927 = vsel %vm652, %v889, 0
      %v930 = vsel %vm652, %v890, 0
      %v933 = vsel %vm652, %v891, 0
      %v936 = vsel %vm652, %v892, 0
      %v939 = vsel %vm652, %v893, 0
      %941 = vmatprep.subr.bf16.mxu0 0
      %942 = vmatpush1.bf16.msra.mxu0 %v913
      %943 = vmatprep.subr.bf16.mxu0 0
      %944 = vmatpush1.bf16.msra.mxu0 %v914
      %945 = vmatprep.subr.bf16.mxu0 0
      %946 = vmatpush1.bf16.msra.mxu0 0
      %947 = vmatprep.subr.bf16.mxu0 0
      %948 = vmatpush1.bf16.msra.mxu0 0
      %949 = vmatprep.subr.bf16.mxu0 0
      %950 = vmatpush1.bf16.msra.mxu0 0
      %951 = vmatprep.subr.bf16.mxu0 0
      %952 = vmatpush1.bf16.msra.mxu0 0
      %953 = vmatprep.subr.bf16.mxu0 0
      %954 = vmatpush1.bf16.msra.mxu0 0
      %955 = vmatprep.subr.bf16.mxu0 0
      %956 = vmatpush1.bf16.msra.mxu0 0
      %957 = vmatprep.subr.bf16.mxu0 0
      %958 = vmatpush1.bf16.msra.mxu0 0
      %959 = vmatprep.subr.bf16.mxu0 0
      %960 = vmatpush1.bf16.msra.mxu0 0
      %961 = vmatprep.subr.bf16.mxu0 0
      %962 = vmatpush1.bf16.msra.mxu0 0
      %963 = vmatprep.subr.bf16.mxu0 0
      %964 = vmatpush1.bf16.msra.mxu0 0
      %965 = vmatprep.subr.bf16.mxu0 0
      %966 = vmatpush1.bf16.msra.mxu0 0
      %967 = vmatprep.subr.bf16.mxu0 0
      %968 = vmatpush1.bf16.msra.mxu0 0
      %969 = vmatprep.subr.bf16.mxu0 0
      %970 = vmatpush1.bf16.msra.mxu0 0
      %971 = vmatprep.subr.bf16.mxu0 0
      %972 = vmatpush1.bf16.msra.mxu0 0
      %973 = vmatprep.mubr.bf16.mxu0 0
      %974 = vmatmul.mubr.bf16.gmra.mrb[0].mxu0 %v918
      %v975 = vpop.f32.mrb[0].mxu0
      %v976 = vadd.f32 %v903, %v975
      %v977 = vpop.f32.mrb[0].mxu0
      %v978 = vpop.f32.mrb[0].mxu0
      %v979 = vadd.f32 %v903, %v978
      %v980 = vpop.f32.mrb[0].mxu0
      %981 = vmatprep.mubr.bf16.mxu0 0
      %982 = vmatmul.mubr.bf16.gmra.mrb[0].mxu0 %v921
      %v983 = vpop.f32.mrb[0].mxu0
      %v984 = vadd.f32 %v903, %v983
      %v985 = vpop.f32.mrb[0].mxu0
      %v986 = vpop.f32.mrb[0].mxu0
      %v987 = vadd.f32 %v903, %v986
      %v988 = vpop.f32.mrb[0].mxu0
      %989 = vmatprep.mubr.bf16.mxu0 0
      %990 = vmatmul.mubr.bf16.gmra.mrb[0].mxu0 %v924
      %v991 = vpop.f32.mrb[0].mxu0
      %v992 = vadd.f32 %v903, %v991
      %v993 = vpop.f32.mrb[0].mxu0
      %v994 = vpop.f32.mrb[0].mxu0
      %v995 = vadd.f32 %v903, %v994
      %v996 = vpop.f32.mrb[0].mxu0
      %997 = vmatprep.mubr.bf16.mxu0 0
      %998 = vmatmul.mubr.bf16.gmra.mrb[0].mxu0 %v927
      %v999 = vpop.f32.mrb[0].mxu0
      %v1000 = vadd.f32 %v903, %v999
      %v1001 = vpop.f32.mrb[0].mxu0
      %v1002 = vpop.f32.mrb[0].mxu0
      %v1003 = vadd.f32 %v903, %v1002
      %v1004 = vpop.f32.mrb[0].mxu0
      %1005 = vmatprep.mubr.bf16.mxu0 0
      %1006 = vmatmul.mubr.bf16.gmra.mrb[0].mxu0 %v930
      %v1007 = vpop.f32.mrb[0].mxu0
      %v1008 = vadd.f32 %v903, %v1007
      %v1009 = vpop.f32.mrb[0].mxu0
      %v1010 = vpop.f32.mrb[0].mxu0
      %v1011 = vadd.f32 %v903, %v1010
      %v1012 = vpop.f32.mrb[0].mxu0
      %1013 = vmatprep.mubr.bf16.mxu0 0
      %1014 = vmatmul.mubr.bf16.gmra.mrb[0].mxu0 %v933
      %v1015 = vpop.f32.mrb[0].mxu0
      %v1016 = vadd.f32 %v903, %v1015
      %v1017 = vpop.f32.mrb[0].mxu0
      %v1018 = vpop.f32.mrb[0].mxu0
      %v1019 = vadd.f32 %v903, %v1018
      %v1020 = vpop.f32.mrb[0].mxu0
      %1021 = vmatprep.mubr.bf16.mxu0 0
      %1022 = vmatmul.mubr.bf16.gmra.mrb[0].mxu0 %v936
      %v1023 = vpop.f32.mrb[0].mxu0
      %v1024 = vadd.f32 %v903, %v1023
      %v1025 = vpop.f32.mrb[0].mxu0
      %v1026 = vpop.f32.mrb[0].mxu0
      %v1027 = vadd.f32 %v903, %v1026
      %v1028 = vpop.f32.mrb[0].mxu0
      %1029 = vmatprep.mubr.bf16.mxu0 0
      %1030 = vmatmul.mubr.bf16.gmra.mrb[0].mxu0 %v939
      %v1031 = vpop.f32.mrb[0].mxu0
      %v1032 = vadd.f32 %v903, %v1031
      %v1033 = vpop.f32.mrb[0].mxu0
      %v1034 = vpop.f32.mrb[0].mxu0
      %v1035 = vadd.f32 %v903, %v1034
      %v1036 = vpop.f32.mrb[0].mxu0
      %1037 = vdwg.mxu0
      %v1038 = vld [vmem:[%s7] sm:$0xff]
      %v1039 = vld [vmem:[%s7 + $0x8] sm:$0xff]
      %v1040 = vadd.f32 %v976, %v1038
      %v1041 = vadd.f32 %v979, %v1039
      %v1042 = vadd.f32 %v984, %v1038
      %v1043 = vadd.f32 %v987, %v1039
      %v1044 = vadd.f32 %v992, %v1038
      %v1045 = vadd.f32 %v995, %v1039
      %v1046 = vadd.f32 %v1000, %v1038
      %v1047 = vadd.f32 %v1003, %v1039
      %v1048 = vadd.f32 %v1008, %v1038
      %v1049 = vadd.f32 %v1011, %v1039
      %v1050 = vadd.f32 %v1016, %v1038
      %v1051 = vadd.f32 %v1019, %v1039
      %v1052 = vadd.f32 %v1024, %v1038
      %v1053 = vadd.f32 %v1027, %v1039
      %v1054 = vadd.f32 %v1032, %v1038
      %v1055 = vadd.f32 %v1035, %v1039
      %1056 = vst.msk [vmem:[%s348] sm:$0xff] %vm652, %v1040
      %1057 = vst.msk [vmem:[%s348 + $0x8] sm:$0xff] %vm652, %v1041
      %1058 = vst.msk [vmem:[%s348 + $0x10] sm:$0xff] %vm652, %v1042
      %1059 = vst.msk [vmem:[%s348 + $0x18] sm:$0xff] %vm652, %v1043
      %1060 = vst.msk [vmem:[%s348 + $0x20] sm:$0xff] %vm652, %v1044
      %1061 = vst.msk [vmem:[%s348 + $0x28] sm:$0xff] %vm652, %v1045
      %1062 = vst.msk [vmem:[%s348 + $0x30] sm:$0xff] %vm652, %v1046
      %1063 = vst.msk [vmem:[%s348 + $0x38] sm:$0xff] %vm652, %v1047
      %1064 = vst.msk [vmem:[%s348 + $0x40] sm:$0xff] %vm652, %v1048
      %1065 = vst.msk [vmem:[%s348 + $0x48] sm:$0xff] %vm652, %v1049
      %1066 = vst.msk [vmem:[%s348 + $0x50] sm:$0xff] %vm652, %v1050
      %1067 = vst.msk [vmem:[%s348 + $0x58] sm:$0xff] %vm652, %v1051
      %1068 = vst.msk [vmem:[%s348 + $0x60] sm:$0xff] %vm652, %v1052
      %1069 = vst.msk [vmem:[%s348 + $0x68] sm:$0xff] %vm652, %v1053
      %1070 = vst.msk [vmem:[%s348 + $0x70] sm:$0xff] %vm652, %v1054
      %1071 = vst.msk [vmem:[%s348 + $0x78] sm:$0xff] %vm652, %v1055
      %s1072 = smul.u32 8, %s24
      %p1073 = scmp.lt.s32.totalorder %s23, 1
      %s1074 = scalar_select %p1073, %s23, 1
      %p1075 = scmp.lt.s32.totalorder %s1072, 7
      %s1076 = scalar_select %p1075, %s1072, 7
      %s1077 = smul.addr %s1076, 2
      %s1078 = smul.addr %s1074, 16
      %s1079 = sadd.s32 %s1077, %s1078
      %s1080 = smul.addr %s1079, 8
      %s1081 = scalar_lea.vmem %s8, %s1080
      // Predicated region
      $region53: #{graph_nbeats_forward.4} parent=51 // pred_check
        %p1082 = pneg %p226
      $region54: #{graph_nbeats_forward.4} parent=51 // pred_check_branch
        %1084 = sbr.rel (%p1082) target = $region56
      $region55: #{graph_nbeats_forward.4} parent=51 // pred_region
        %s1085 = smul.u32 8, %s24
      $region56: #{graph_nbeats_forward.4} parent=51 // pred_fallthru
        _
    $region52: #{graph_nbeats_forward.4} parent=5 // pred_fallthru
      _
    %p1086 = scmp.le.s32.totalorder 2, %s14
    // Predicated region
    $region57: #{graph_nbeats_forward.4} parent=5 // pred_check
      %p1087 = pneg %p1086
    $region58: #{graph_nbeats_forward.4} parent=5 // pred_check_branch
      %1089 = sbr.rel (%p1087) target = $region60
    $region59: #{graph_nbeats_forward.4} parent=5 // pred_region
      %s1090 = ssub.s32 %s14, 2
      // Predicated region
      $region61: #{graph_nbeats_forward.4} parent=59 // pred_check
        %p1091 = pneg %p232
      $region62: #{graph_nbeats_forward.4} parent=59 // pred_check_branch
        %1093 = sbr.rel (%p1091) target = $region64
      $region63: #{graph_nbeats_forward.4} parent=59 // pred_region
        %s1094 = smul.u32 8, %s26
        %p1095 = scmp.lt.s32.totalorder %s25, 1
        %s1096 = scalar_select %p1095, %s25, 1
        %p1097 = scmp.lt.s32.totalorder %s1094, 7
        %s1098 = scalar_select %p1097, %s1094, 7
        %s1099 = smul.addr %s1098, 2
        %s1100 = smul.addr %s1096, 16
        %s1101 = sadd.s32 %s1099, %s1100
        %s1102 = smul.addr %s1101, 8
        %s1103 = scalar_lea.vmem %s8, %s1102
      $region64: #{graph_nbeats_forward.4} parent=59 // pred_fallthru
        _
    $region60: #{graph_nbeats_forward.4} parent=5 // pred_fallthru
      _
  $region6: #{graph_nbeats_forward.4} parent=0 // loop_footer
    %s18 = sadd.s32 1, %s14
  $region7: #{graph_nbeats_forward.4} parent=0 // loop_footer_branch
    %13 = sbr.rel target = $region3
  $region8: #{graph_nbeats_forward.4} parent=0 // loop_exit
    _

// kernel: graph_nbeats_forward.6
$region0: #{graph_nbeats_forward.6}
  #allocation0 [shape = 'u32[]', space=smem, size = 0x4, offset = 0x4, fixed_abs, tag = 'smem constant byte address 0x4 - core index']
  #allocation1 [shape = 'u32[144,128]{1,0:T(1,128)}', space=vmem, size = 0x12000, scoped, tag = 'internal scratch']
  %s0 = inlined_call_operand.vmem [shape: f32[2,8,16,32], index: 0, kind: input, shape index: {}, may-alias: {0,1}]
  %s1 = inlined_call_operand.vmem [shape: f32[2,8,16,32], index: 1, kind: input, shape index: {}, may-alias: {0,1}]
  %s2 = inlined_call_operand.vmem [shape: bf16[16,16], index: 2, kind: input, shape index: {}]
  %s3 = inlined_call_operand.vmem [shape: bf16[2,2,32,32], index: 3, kind: input, shape index: {}]
  %s4 = inlined_call_operand.vmem [shape: f32[2,2,1,32], index: 4, kind: input, shape index: {}]
  %s5 = inlined_call_operand.vmem [shape: bf16[2,32,32], index: 5, kind: input, shape index: {}]
  %s6 = inlined_call_operand.vmem [shape: f32[2,1,32], index: 6, kind: input, shape index: {}]
  %s7 = inlined_call_operand.vmem [shape: f32[2,4,16,32], index: 7, kind: output, shape index: {}]
  %s8 = sld [smem:[#allocation0]]
  $region61: #{graph_nbeats_forward.6} parent=0
    _
  %s10 = ssub.s32 1, %s8
  %s11 = scalar_select 0, %s10, %s8
  loop: start=0, step=1, limit=4
  $region2: #{graph_nbeats_forward.6} parent=0 // loop_pre_header
    _
  $region3: #{graph_nbeats_forward.6} parent=0 // loop_header
    %s13 = sphi 0, %s17
    %p14 = scmp.ge.s32.totalorder %s13, 4
    %s20 = sphi 0, %s32
    %s21 = sphi 0, %s28
    %s22 = sphi 0, %s20
    %s23 = sphi 0, %s21
    %s24 = sphi 0, %s22
    %s25 = sphi 0, %s23
    %s39 = sphi 0, %s41
    %s42 = sphi 0, %s39
    %s43 = sphi 0, %s42
    %s59 = sphi 0, %s43
    %s65 = sphi 0, %s67
    %s68 = sphi 0, %s65
    %s69 = sphi 0, %s68
    %s85 = sphi 0, %s69
    %s89 = sphi 0, %s89
    %s91 = sphi 0, %s89
    %s92 = sphi 0, %s91
    %s106 = sphi 0, %s92
    %s110 = sphi 0, %s110
    %s112 = sphi 0, %s110
    %s113 = sphi 0, %s112
    %s127 = sphi 0, %s113
    %s131 = sphi 0, %s131
    %s133 = sphi 0, %s131
    %s134 = sphi 0, %s133
    %s148 = sphi 0, %s134
    %s152 = sphi 0, %s152
    %s154 = sphi 0, %s152
    %s155 = sphi 0, %s154
    %s169 = sphi 0, %s155
    %s173 = sphi 0, %s173
    %s175 = sphi 0, %s173
    %s176 = sphi 0, %s175
    %s190 = sphi 0, %s176
    %s198 = sphi 0, %s200
    %s201 = sphi 0, %s198
    %s202 = sphi 0, %s201
    %s218 = sphi 0, %s202
  $region4: #{graph_nbeats_forward.6} parent=0 // loop_header_branch
    %16 = sbr.rel (%p14) target = $region8
  $region5: #{graph_nbeats_forward.6} parent=0 // loop_body
    %s18 = ssub.s32 %s13, 1
    %s19 = ssub.s32 %s13, 2
    %s26 = sadd.s32 1, %s21
    %p27 = scmp.ge.s32.totalorder %s26, 1
    %s28 = scalar_select %p27, 0, %s26
    %s29 = sadd.s32 1, %s20
    %s30 = scalar_select %p27, %s29, %s20
    %p31 = scmp.ge.s32.totalorder %s30, 2
    %s32 = scalar_select %p31, 0, %s30
    %s33 = ssub.s32 0, %s21
    %s34 = ssub.s32 0, %s28
    %s35 = ssub.s32 %s20, %s32
    %s36 = ssub.s32 %s33, %s34
    %s37 = sor.u32 %s35, %s36
    %p38 = scmp.eq.s32.totalorder %s37, 0
    %s40 = sadd.s32 %s39, 1
    %s41 = scalar_select %p38, %s39, %s40
    %p44 = pneg %p38
    %p45 = scmp.eq.s32.totalorder %s13, 1
    %p46 = por %p44, %p45
    %p47 = scmp.ne.s32.totalorder %s39, %s42
    %p48 = scmp.eq.s32.totalorder %s13, 0
    %p49 = por %p47, %p48
    %p50 = scmp.ne.s32.totalorder %s39, %s42
    %p51 = scmp.eq.s32.totalorder %s18, 1
    %p52 = por %p50, %p51
    %p53 = scmp.ne.s32.totalorder %s42, %s43
    %p54 = scmp.eq.s32.totalorder %s18, 0
    %p55 = por %p53, %p54
    %p56 = scmp.ne.s32.totalorder %s42, %s43
    %p57 = scmp.eq.s32.totalorder %s19, 1
    %p58 = por %p56, %p57
    %p60 = scmp.ne.s32.totalorder %s43, %s59
    %p61 = scmp.eq.s32.totalorder %s19, 0
    %p62 = por %p60, %p61
    %s63 = ssub.s32 %s20, %s32
    %p64 = scmp.eq.s32.totalorder %s63, 0
    %s66 = sadd.s32 %s65, 1
    %s67 = scalar_select %p64, %s65, %s66
    %p70 = pneg %p64
    %p71 = scmp.eq.s32.totalorder %s13, 1
    %p72 = por %p70, %p71
    %p73 = scmp.ne.s32.totalorder %s65, %s68
    %p74 = scmp.eq.s32.totalorder %s13, 0
    %p75 = por %p73, %p74
    %p76 = scmp.ne.s32.totalorder %s65, %s68
    %p77 = scmp.eq.s32.totalorder %s18, 1
    %p78 = por %p76, %p77
    %p79 = scmp.ne.s32.totalorder %s68, %s69
    %p80 = scmp.eq.s32.totalorder %s18, 0
    %p81 = por %p79, %p80
    %p82 = scmp.ne.s32.totalorder %s68, %s69
    %p83 = scmp.eq.s32.totalorder %s19, 1
    %p84 = por %p82, %p83
    %p86 = scmp.ne.s32.totalorder %s69, %s85
    %p87 = scmp.eq.s32.totalorder %s19, 0
    %p88 = por %p86, %p87
    %s90 = sadd.s32 %s89, 1
    %p93 = scmp.eq.s32.totalorder %s13, 1
    %p94 = scmp.ne.s32.totalorder %s89, %s91
    %p95 = scmp.eq.s32.totalorder %s13, 0
    %p96 = por %p94, %p95
    %p97 = scmp.ne.s32.totalorder %s89, %s91
    %p98 = scmp.eq.s32.totalorder %s18, 1
    %p99 = por %p97, %p98
    %p100 = scmp.ne.s32.totalorder %s91, %s92
    %p101 = scmp.eq.s32.totalorder %s18, 0
    %p102 = por %p100, %p101
    %p103 = scmp.ne.s32.totalorder %s91, %s92
    %p104 = scmp.eq.s32.totalorder %s19, 1
    %p105 = por %p103, %p104
    %p107 = scmp.ne.s32.totalorder %s92, %s106
    %p108 = scmp.eq.s32.totalorder %s19, 0
    %p109 = por %p107, %p108
    %s111 = sadd.s32 %s110, 1
    %p114 = scmp.eq.s32.totalorder %s13, 1
    %p115 = scmp.ne.s32.totalorder %s110, %s112
    %p116 = scmp.eq.s32.totalorder %s13, 0
    %p117 = por %p115, %p116
    %p118 = scmp.ne.s32.totalorder %s110, %s112
    %p119 = scmp.eq.s32.totalorder %s18, 1
    %p120 = por %p118, %p119
    %p121 = scmp.ne.s32.totalorder %s112, %s113
    %p122 = scmp.eq.s32.totalorder %s18, 0
    %p123 = por %p121, %p122
    %p124 = scmp.ne.s32.totalorder %s112, %s113
    %p125 = scmp.eq.s32.totalorder %s19, 1
    %p126 = por %p124, %p125
    %p128 = scmp.ne.s32.totalorder %s113, %s127
    %p129 = scmp.eq.s32.totalorder %s19, 0
    %p130 = por %p128, %p129
    %s132 = sadd.s32 %s131, 1
    %p135 = scmp.eq.s32.totalorder %s13, 1
    %p136 = scmp.ne.s32.totalorder %s131, %s133
    %p137 = scmp.eq.s32.totalorder %s13, 0
    %p138 = por %p136, %p137
    %p139 = scmp.ne.s32.totalorder %s131, %s133
    %p140 = scmp.eq.s32.totalorder %s18, 1
    %p141 = por %p139, %p140
    %p142 = scmp.ne.s32.totalorder %s133, %s134
    %p143 = scmp.eq.s32.totalorder %s18, 0
    %p144 = por %p142, %p143
    %p145 = scmp.ne.s32.totalorder %s133, %s134
    %p146 = scmp.eq.s32.totalorder %s19, 1
    %p147 = por %p145, %p146
    %p149 = scmp.ne.s32.totalorder %s134, %s148
    %p150 = scmp.eq.s32.totalorder %s19, 0
    %p151 = por %p149, %p150
    %s153 = sadd.s32 %s152, 1
    %p156 = scmp.eq.s32.totalorder %s13, 1
    %p157 = scmp.ne.s32.totalorder %s152, %s154
    %p158 = scmp.eq.s32.totalorder %s13, 0
    %p159 = por %p157, %p158
    %p160 = scmp.ne.s32.totalorder %s152, %s154
    %p161 = scmp.eq.s32.totalorder %s18, 1
    %p162 = por %p160, %p161
    %p163 = scmp.ne.s32.totalorder %s154, %s155
    %p164 = scmp.eq.s32.totalorder %s18, 0
    %p165 = por %p163, %p164
    %p166 = scmp.ne.s32.totalorder %s154, %s155
    %p167 = scmp.eq.s32.totalorder %s19, 1
    %p168 = por %p166, %p167
    %p170 = scmp.ne.s32.totalorder %s155, %s169
    %p171 = scmp.eq.s32.totalorder %s19, 0
    %p172 = por %p170, %p171
    %s174 = sadd.s32 %s173, 1
    %p177 = scmp.eq.s32.totalorder %s13, 1
    %p178 = scmp.ne.s32.totalorder %s173, %s175
    %p179 = scmp.eq.s32.totalorder %s13, 0
    %p180 = por %p178, %p179
    %p181 = scmp.ne.s32.totalorder %s173, %s175
    %p182 = scmp.eq.s32.totalorder %s18, 1
    %p183 = por %p181, %p182
    %p184 = scmp.ne.s32.totalorder %s175, %s176
    %p185 = scmp.eq.s32.totalorder %s18, 0
    %p186 = por %p184, %p185
    %p187 = scmp.ne.s32.totalorder %s175, %s176
    %p188 = scmp.eq.s32.totalorder %s19, 1
    %p189 = por %p187, %p188
    %p191 = scmp.ne.s32.totalorder %s176, %s190
    %p192 = scmp.eq.s32.totalorder %s19, 0
    %p193 = por %p191, %p192
    %s194 = ssub.s32 %s20, %s32
    %s195 = ssub.s32 %s21, %s28
    %s196 = sor.u32 %s194, %s195
    %p197 = scmp.eq.s32.totalorder %s196, 0
    %s199 = sadd.s32 %s198, 1
    %s200 = scalar_select %p197, %s198, %s199
    %p203 = pneg %p197
    %p204 = scmp.eq.s32.totalorder %s13, 1
    %p205 = por %p203, %p204
    %p206 = scmp.ne.s32.totalorder %s198, %s201
    %p207 = scmp.eq.s32.totalorder %s13, 0
    %p208 = por %p206, %p207
    %p209 = scmp.ne.s32.totalorder %s198, %s201
    %p210 = scmp.eq.s32.totalorder %s18, 1
    %p211 = por %p209, %p210
    %p212 = scmp.ne.s32.totalorder %s201, %s202
    %p213 = scmp.eq.s32.totalorder %s18, 0
    %p214 = por %p212, %p213
    %p215 = scmp.ne.s32.totalorder %s201, %s202
    %p216 = scmp.eq.s32.totalorder %s19, 1
    %p217 = por %p215, %p216
    %p219 = scmp.ne.s32.totalorder %s202, %s218
    %p220 = scmp.eq.s32.totalorder %s19, 0
    %p221 = por %p219, %p220
    %p222 = scmp.le.s32.totalorder 1, %s13
    %p223 = scmp.lt.s32.totalorder %s13, 3
    %p224 = pnand %p222, %p223
    %p225 = pneg %p224
    // Predicated region
    $region9: #{graph_nbeats_forward.6} parent=5 // pred_check
      _
    $region10: #{graph_nbeats_forward.6} parent=5 // pred_check_branch
      %227 = sbr.rel (%p224) target = $region12
    $region11: #{graph_nbeats_forward.6} parent=5 // pred_region
      %s228 = ssub.s32 %s13, 1
      // Predicated region
      $region13: #{graph_nbeats_forward.6} parent=11 // pred_check
        %p229 = pneg %p102
      $region14: #{graph_nbeats_forward.6} parent=11 // pred_check_branch
        %231 = sbr.rel (%p229) target = $region16
      $region15: #{graph_nbeats_forward.6} parent=11 // pred_region
        _
      $region16: #{graph_nbeats_forward.6} parent=11 // pred_fallthru
        _
      // Predicated region
      $region17: #{graph_nbeats_forward.6} parent=11 // pred_check
        %p232 = pneg %p123
      $region18: #{graph_nbeats_forward.6} parent=11 // pred_check_branch
        %234 = sbr.rel (%p232) target = $region20
      $region19: #{graph_nbeats_forward.6} parent=11 // pred_region
        _
      $region20: #{graph_nbeats_forward.6} parent=11 // pred_fallthru
        _
      // Predicated region
      $region21: #{graph_nbeats_forward.6} parent=11 // pred_check
        %p235 = pneg %p144
      $region22: #{graph_nbeats_forward.6} parent=11 // pred_check_branch
        %237 = sbr.rel (%p235) target = $region24
      $region23: #{graph_nbeats_forward.6} parent=11 // pred_region
        _
      $region24: #{graph_nbeats_forward.6} parent=11 // pred_fallthru
        _
      // Predicated region
      $region25: #{graph_nbeats_forward.6} parent=11 // pred_check
        %p238 = pneg %p165
      $region26: #{graph_nbeats_forward.6} parent=11 // pred_check_branch
        %240 = sbr.rel (%p238) target = $region28
      $region27: #{graph_nbeats_forward.6} parent=11 // pred_region
        _
      $region28: #{graph_nbeats_forward.6} parent=11 // pred_fallthru
        _
      // Predicated region
      $region29: #{graph_nbeats_forward.6} parent=11 // pred_check
        %p241 = pneg %p186
      $region30: #{graph_nbeats_forward.6} parent=11 // pred_check_branch
        %243 = sbr.rel (%p241) target = $region32
      $region31: #{graph_nbeats_forward.6} parent=11 // pred_region
        _
      $region32: #{graph_nbeats_forward.6} parent=11 // pred_fallthru
        _
    $region12: #{graph_nbeats_forward.6} parent=5 // pred_fallthru
      _
    %p244 = scmp.lt.s32.totalorder %s13, 2
    // Predicated region
    $region33: #{graph_nbeats_forward.6} parent=5 // pred_check
      %p245 = pneg %p244
    $region34: #{graph_nbeats_forward.6} parent=5 // pred_check_branch
      %247 = sbr.rel (%p245) target = $region36
    $region35: #{graph_nbeats_forward.6} parent=5 // pred_region
      // Predicated region
      $region37: #{graph_nbeats_forward.6} parent=35 // pred_check
        %p248 = pneg %p49
      $region38: #{graph_nbeats_forward.6} parent=35 // pred_check_branch
        %250 = sbr.rel (%p248) target = $region40
      $region39: #{graph_nbeats_forward.6} parent=35 // pred_region
        %s251 = ssub.s32 0, %s21
        %s252 = smul.u32 4, %s251
        %p253 = scmp.lt.s32.totalorder %s20, 1
        %s254 = scalar_select %p253, %s20, 1
        %p255 = scmp.lt.s32.totalorder %s252, 7
        %s256 = scalar_select %p255, %s252, 7
        %s257 = smul.addr %s256, 2
        %s258 = smul.addr %s254, 16
        %s259 = sadd.s32 %s257, %s258
        %s260 = smul.addr %s259, 8
        %s261 = scalar_lea.vmem %s0, %s260
        %s262 = ssub.s32 0, %s21
        %s263 = smul.u32 4, %s262
      $region40: #{graph_nbeats_forward.6} parent=35 // pred_fallthru
        _
      // Predicated region
      $region41: #{graph_nbeats_forward.6} parent=35 // pred_check
        %p264 = pneg %p75
      $region42: #{graph_nbeats_forward.6} parent=35 // pred_check_branch
        %266 = sbr.rel (%p264) target = $region44
      $region43: #{graph_nbeats_forward.6} parent=35 // pred_region
        %p267 = scmp.lt.s32.totalorder %s20, 1
        %s268 = scalar_select %p267, %s20, 1
        %s269 = smul.addr %s268, 16
        %s270 = sadd.s32 14, %s269
        %s271 = smul.addr %s270, 8
        %s272 = scalar_lea.vmem %s1, %s271
      $region44: #{graph_nbeats_forward.6} parent=35 // pred_fallthru
        _
    $region36: #{graph_nbeats_forward.6} parent=5 // pred_fallthru
      _
    %p273 = scmp.le.s32.totalorder 1, %s13
    %p274 = scmp.lt.s32.totalorder %s13, 3
    %p275 = pnand %p273, %p274
    %p276 = pneg %p275
    // Predicated region
    $region45: #{graph_nbeats_forward.6} parent=5 // pred_check
      _
    $region46: #{graph_nbeats_forward.6} parent=5 // pred_check_branch
      %278 = sbr.rel (%p275) target = $region48
    $region47: #{graph_nbeats_forward.6} parent=5 // pred_region
      %s279 = ssub.s32 %s13, 1
      %s280 = ssub.s32 0, %s23
      %s281 = smul.u32 4, %s280
      %p282 = scmp.lt.s32.totalorder %s22, 1
      %s283 = scalar_select %p282, %s22, 1
      %p284 = scmp.lt.s32.totalorder %s281, 7
      %s285 = scalar_select %p284, %s281, 7
      %s286 = smul.addr %s285, 2
      %s287 = smul.addr %s283, 16
      %s288 = sadd.s32 %s286, %s287
      %s289 = smul.addr %s288, 8
      %s290 = scalar_lea.vmem %s0, %s289
      %p291 = pneg %p55
      %p292 = pneg %p52
      %p293 = scmp.lt.s32.totalorder %s22, 1
      %s294 = scalar_select %p293, %s22, 1
      %s295 = smul.addr %s294, 16
      %s296 = sadd.s32 14, %s295
      %s297 = smul.addr %s296, 8
      %s298 = scalar_lea.vmem %s1, %s297
      %p299 = pneg %p81
      %p300 = pneg %p78
      %p301 = pneg %p102
      %p302 = pneg %p99
      %p303 = pneg %p123
      %p304 = pneg %p120
      %p305 = pneg %p144
      %p306 = pneg %p141
      %p307 = pneg %p165
      %p308 = pneg %p162
      %p309 = pneg %p186
      %p310 = pneg %p183
      %p311 = pneg %p214
      %p312 = pneg %p211
      %s313 = smul.u32 4, %s23
      %p314 = scmp.lt.s32.totalorder %s22, 1
      %s315 = scalar_select %p314, %s22, 1
      %p316 = scmp.lt.s32.totalorder %s313, 3
      %s317 = scalar_select %p316, %s313, 3
      %s318 = smul.addr %s317, 2
      %s319 = smul.addr %s315, 8
      %s320 = sadd.s32 %s318, %s319
      %s321 = smul.addr %s320, 8
      %s322 = scalar_lea.vmem %s7, %s321
      %s323 = ssub.s32 0, %s23
      %s324 = smul.u32 4, %s323
      %p325 = scmp.lt.s32.totalorder %s22, 1
      %s326 = scalar_select %p325, %s22, 1
      %p327 = scmp.lt.s32.totalorder %s324, 7
      %s328 = scalar_select %p327, %s324, 7
      %s329 = smul.addr %s328, 2
      %s330 = smul.addr %s326, 16
      %s331 = sadd.s32 %s329, %s330
      %s332 = smul.addr %s331, 8
      %s333 = scalar_lea.vmem %s0, %s332
      %s334 = ssub.s32 0, %s23
      %s335 = smul.u32 4, %s334
      %p336 = scmp.lt.s32.totalorder %s22, 1
      %s337 = scalar_select %p336, %s22, 1
      %s338 = smul.addr %s337, 16
      %s339 = sadd.s32 14, %s338
      %s340 = smul.addr %s339, 8
      %s341 = scalar_lea.vmem %s1, %s340
      %s342 = smul.u32 4, %s23
      %p343 = scmp.lt.s32.totalorder %s22, 1
      %s344 = scalar_select %p343, %s22, 1
      %p345 = scmp.lt.s32.totalorder %s342, 3
      %s346 = scalar_select %p345, %s342, 3
      %s347 = smul.addr %s346, 2
      %s348 = smul.addr %s344, 8
      %s349 = sadd.s32 %s347, %s348
      %s350 = smul.addr %s349, 8
      %s351 = scalar_lea.vmem %s7, %s350
      %s352 = smul.u32 4, %s23
      %v354 = vld [vmem:[%s2] sm:$0xf]
      %v355 = vld [vmem:[%s2 + $0x4] sm:$0xf]
      %v356 = vld [vmem:[%s341] sm:$0xff]
      %v357 = vld [vmem:[%s341 + $0x8] sm:$0xff]
      %v358 = vld [vmem:[%s333] sm:$0xff]
      %v359 = vld [vmem:[%s333 + $0x8] sm:$0xff]
      %v360 = vld [vmem:[%s333 + $0x10] sm:$0xff]
      %v361 = vld [vmem:[%s333 + $0x18] sm:$0xff]
      %v362 = vld [vmem:[%s333 + $0x20] sm:$0xff]
      %v363 = vld [vmem:[%s333 + $0x28] sm:$0xff]
      %v364 = vld [vmem:[%s333 + $0x30] sm:$0xff]
      %v365 = vld [vmem:[%s333 + $0x38] sm:$0xff]
      %v366 = vpack.c.bf16 %v359, %v358
      %v369 = vunpack.c.l.b16 %v354
      %v370 = vunpack.c.l.b16 %v355
      %v371 = vpack.c.b16 %v370, %v369
      %vm372 = vcmask 130048
      %v374 = vsel %vm372, %v371, 0
      %376 = vmatprep.subr.bf16.mxu0 0
      %377 = vmatpush1.bf16.msra.mxu0 %v366
      %378 = vmatprep.subr.bf16.mxu0 0
      %379 = vmatpush1.bf16.msra.mxu0 0
      %380 = vmatprep.subr.bf16.mxu0 0
      %381 = vmatpush1.bf16.msra.mxu0 0
      %382 = vmatprep.subr.bf16.mxu0 0
      %383 = vmatpush1.bf16.msra.mxu0 0
      %384 = vmatprep.subr.bf16.mxu0 0
      %385 = vmatpush1.bf16.msra.mxu0 0
      %386 = vmatprep.subr.bf16.mxu0 0
      %387 = vmatpush1.bf16.msra.mxu0 0
      %388 = vmatprep.subr.bf16.mxu0 0
      %389 = vmatpush1.bf16.msra.mxu0 0
      %390 = vmatprep.subr.bf16.mxu0 0
      %391 = vmatpush1.bf16.msra.mxu0 0
      %392 = vmatprep.subr.bf16.mxu0 0
      %393 = vmatpush1.bf16.msra.mxu0 0
      %394 = vmatprep.subr.bf16.mxu0 0
      %395 = vmatpush1.bf16.msra.mxu0 0
      %396 = vmatprep.subr.bf16.mxu0 0
      %397 = vmatpush1.bf16.msra.mxu0 0
      %398 = vmatprep.subr.bf16.mxu0 0
      %399 = vmatpush1.bf16.msra.mxu0 0
      %400 = vmatprep.subr.bf16.mxu0 0
      %401 = vmatpush1.bf16.msra.mxu0 0
      %402 = vmatprep.subr.bf16.mxu0 0
      %403 = vmatpush1.bf16.msra.mxu0 0
      %404 = vmatprep.subr.bf16.mxu0 0
      %405 = vmatpush1.bf16.msra.mxu0 0
      %406 = vmatprep.subr.bf16.mxu0 0
      %407 = vmatpush1.bf16.msra.mxu0 0
      %408 = vmatprep.mubr.bf16.mxu0 0
      %409 = vmatmul.mubr.bf16.gmra.mrb[0].mxu0 %v374
      %v410 = vpop.f32.mrb[0].mxu0
      %v411 = vadd.f32 0.0, %v410
      %v412 = vpop.f32.mrb[0].mxu0
      %v413 = vpop.f32.mrb[0].mxu0
      %v414 = vadd.f32 0.0, %v413
      %v415 = vpop.f32.mrb[0].mxu0
      %416 = vdwg.mxu0
      %v417 = vpack.c.bf16 %v361, %v360
      %418 = vmatprep.subr.bf16.mxu0 0
      %419 = vmatpush1.bf16.msra.mxu0 %v417
      %420 = vmatprep.subr.bf16.mxu0 0
      %421 = vmatpush1.bf16.msra.mxu0 0
      %422 = vmatprep.subr.bf16.mxu0 0
      %423 = vmatpush1.bf16.msra.mxu0 0
      %424 = vmatprep.subr.bf16.mxu0 0
      %425 = vmatpush1.bf16.msra.mxu0 0
      %426 = vmatprep.subr.bf16.mxu0 0
      %427 = vmatpush1.bf16.msra.mxu0 0
      %428 = vmatprep.subr.bf16.mxu0 0
      %429 = vmatpush1.bf16.msra.mxu0 0
      %430 = vmatprep.subr.bf16.mxu0 0
      %431 = vmatpush1.bf16.msra.mxu0 0
      %432 = vmatprep.subr.bf16.mxu0 0
      %433 = vmatpush1.bf16.msra.mxu0 0
      %434 = vmatprep.subr.bf16.mxu0 0
      %435 = vmatpush1.bf16.msra.mxu0 0
      %436 = vmatprep.subr.bf16.mxu0 0
      %437 = vmatpush1.bf16.msra.mxu0 0
      %438 = vmatprep.subr.bf16.mxu0 0
      %439 = vmatpush1.bf16.msra.mxu0 0
      %440 = vmatprep.subr.bf16.mxu0 0
      %441 = vmatpush1.bf16.msra.mxu0 0
      %442 = vmatprep.subr.bf16.mxu0 0
      %443 = vmatpush1.bf16.msra.mxu0 0
      %444 = vmatprep.subr.bf16.mxu0 0
      %445 = vmatpush1.bf16.msra.mxu0 0
      %446 = vmatprep.subr.bf16.mxu0 0
      %447 = vmatpush1.bf16.msra.mxu0 0
      %448 = vmatprep.subr.bf16.mxu0 0
      %449 = vmatpush1.bf16.msra.mxu0 0
      %450 = vmatprep.mubr.bf16.mxu0 0
      %451 = vmatmul.mubr.bf16.gmra.mrb[0].mxu0 %v374
      %v452 = vpop.f32.mrb[0].mxu0
      %v453 = vadd.f32 0.0, %v452
      %v454 = vpop.f32.mrb[0].mxu0
      %v455 = vpop.f32.mrb[0].mxu0
      %v456 = vadd.f32 0.0, %v455
      %v457 = vpop.f32.mrb[0].mxu0
      %458 = vdwg.mxu0
      %v459 = vpack.c.bf16 %v363, %v362
      %460 = vmatprep.subr.bf16.mxu0 0
      %461 = vmatpush1.bf16.msra.mxu0 %v459
      %462 = vmatprep.subr.bf16.mxu0 0
      %463 = vmatpush1.bf16.msra.mxu0 0
      %464 = vmatprep.subr.bf16.mxu0 0
      %465 = vmatpush1.bf16.msra.mxu0 0
      %466 = vmatprep.subr.bf16.mxu0 0
      %467 = vmatpush1.bf16.msra.mxu0 0
      %468 = vmatprep.subr.bf16.mxu0 0
      %469 = vmatpush1.bf16.msra.mxu0 0
      %470 = vmatprep.subr.bf16.mxu0 0
      %471 = vmatpush1.bf16.msra.mxu0 0
      %472 = vmatprep.subr.bf16.mxu0 0
      %473 = vmatpush1.bf16.msra.mxu0 0
      %474 = vmatprep.subr.bf16.mxu0 0
      %475 = vmatpush1.bf16.msra.mxu0 0
      %476 = vmatprep.subr.bf16.mxu0 0
      %477 = vmatpush1.bf16.msra.mxu0 0
      %478 = vmatprep.subr.bf16.mxu0 0
      %479 = vmatpush1.bf16.msra.mxu0 0
      %480 = vmatprep.subr.bf16.mxu0 0
      %481 = vmatpush1.bf16.msra.mxu0 0
      %482 = vmatprep.subr.bf16.mxu0 0
      %483 = vmatpush1.bf16.msra.mxu0 0
      %484 = vmatprep.subr.bf16.mxu0 0
      %485 = vmatpush1.bf16.msra.mxu0 0
      %486 = vmatprep.subr.bf16.mxu0 0
      %487 = vmatpush1.bf16.msra.mxu0 0
      %488 = vmatprep.subr.bf16.mxu0 0
      %489 = vmatpush1.bf16.msra.mxu0 0
      %490 = vmatprep.subr.bf16.mxu0 0
      %491 = vmatpush1.bf16.msra.mxu0 0
      %492 = vmatprep.mubr.bf16.mxu0 0
      %493 = vmatmul.mubr.bf16.gmra.mrb[0].mxu0 %v374
      %v494 = vpop.f32.mrb[0].mxu0
      %v495 = vadd.f32 0.0, %v494
      %v496 = vpop.f32.mrb[0].mxu0
      %v497 = vpop.f32.mrb[0].mxu0
      %v498 = vadd.f32 0.0, %v497
      %v499 = vpop.f32.mrb[0].mxu0
      %500 = vdwg.mxu0
      %v501 = vpack.c.bf16 %v365, %v364
      %502 = vmatprep.subr.bf16.mxu0 0
      %503 = vmatpush1.bf16.msra.mxu0 %v501
      %504 = vmatprep.subr.bf16.mxu0 0
      %505 = vmatpush1.bf16.msra.mxu0 0
      %506 = vmatprep.subr.bf16.mxu0 0
      %507 = vmatpush1.bf16.msra.mxu0 0
      %508 = vmatprep.subr.bf16.mxu0 0
      %509 = vmatpush1.bf16.msra.mxu0 0
      %510 = vmatprep.subr.bf16.mxu0 0
      %511 = vmatpush1.bf16.msra.mxu0 0
      %512 = vmatprep.subr.bf16.mxu0 0
      %513 = vmatpush1.bf16.msra.mxu0 0
      %514 = vmatprep.subr.bf16.mxu0 0
      %515 = vmatpush1.bf16.msra.mxu0 0
      %516 = vmatprep.subr.bf16.mxu0 0
      %517 = vmatpush1.bf16.msra.mxu0 0
      %518 = vmatprep.subr.bf16.mxu0 0
      %519 = vmatpush1.bf16.msra.mxu0 0
      %520 = vmatprep.subr.bf16.mxu0 0
      %521 = vmatpush1.bf16.msra.mxu0 0
      %522 = vmatprep.subr.bf16.mxu0 0
      %523 = vmatpush1.bf16.msra.mxu0 0
      %524 = vmatprep.subr.bf16.mxu0 0
      %525 = vmatpush1.bf16.msra.mxu0 0
      %526 = vmatprep.subr.bf16.mxu0 0
      %527 = vmatpush1.bf16.msra.mxu0 0
      %528 = vmatprep.subr.bf16.mxu0 0
      %529 = vmatpush1.bf16.msra.mxu0 0
      %530 = vmatprep.subr.bf16.mxu0 0
      %531 = vmatpush1.bf16.msra.mxu0 0
      %532 = vmatprep.subr.bf16.mxu0 0
      %533 = vmatpush1.bf16.msra.mxu0 0
      %534 = vmatprep.mubr.bf16.mxu0 0
      %535 = vmatmul.mubr.bf16.gmra.mrb[0].mxu0 %v374
      %v536 = vpop.f32.mrb[0].mxu0
      %v537 = vadd.f32 0.0, %v536
      %v538 = vpop.f32.mrb[0].mxu0
      %v539 = vpop.f32.mrb[0].mxu0
      %v540 = vadd.f32 0.0, %v539
      %v541 = vpop.f32.mrb[0].mxu0
      %542 = vdwg.mxu0
      %v543 = vpack.c.bf16 %v414, %v411
      %v544 = vpack.c.bf16 %v456, %v453
      %v545 = vpack.c.bf16 %v498, %v495
      %v546 = vpack.c.bf16 %v540, %v537
      %v547 = vld [vmem:[%s3] sm:$0xf]
      %v548 = vld [vmem:[%s3 + $0x4] sm:$0xf]
      %v549 = vld [vmem:[%s3 + $0x8] sm:$0xf]
      %v550 = vld [vmem:[%s3 + $0xc] sm:$0xf]
      %v551 = vld [vmem:[%s4] sm:$0x1]
      %v553 = vlaneseq
      %v554 = vshrl.u32 %v553, 7
      %v555 = vsub.s32 0, %v554
      %v556 = vrot.slane %v551, %v555
      %v562 = vunpack.c.l.b16 %v547
      %v563 = vunpack.c.l.b16 %v548
      %v564 = vunpack.c.l.b16 %v549
      %v565 = vunpack.c.l.b16 %v550
      %v566 = vpack.c.b16 %v563, %v562
      %v567 = vpack.c.b16 %v565, %v564
      %vm570 = vcmask 261120
      %v572 = vsel %vm570, %v543, 0
      %v575 = vsel %vm570, %v544, 0
      %v578 = vsel %vm570, %v545, 0
      %v581 = vsel %vm570, %v546, 0
      %583 = vmatprep.subr.bf16.mxu0 0
      %584 = vmatpush1.bf16.msra.mxu0 %v566
      %585 = vmatprep.subr.bf16.mxu0 0
      %586 = vmatpush1.bf16.msra.mxu0 %v567
      %587 = vmatprep.subr.bf16.mxu0 0
      %588 = vmatpush1.bf16.msra.mxu0 0
      %589 = vmatprep.subr.bf16.mxu0 0
      %590 = vmatpush1.bf16.msra.mxu0 0
      %591 = vmatprep.subr.bf16.mxu0 0
      %592 = vmatpush1.bf16.msra.mxu0 0
      %593 = vmatprep.subr.bf16.mxu0 0
      %594 = vmatpush1.bf16.msra.mxu0 0
      %595 = vmatprep.subr.bf16.mxu0 0
      %596 = vmatpush1.bf16.msra.mxu0 0
      %597 = vmatprep.subr.bf16.mxu0 0
      %598 = vmatpush1.bf16.msra.mxu0 0
      %599 = vmatprep.subr.bf16.mxu0 0
      %600 = vmatpush1.bf16.msra.mxu0 0
      %601 = vmatprep.subr.bf16.mxu0 0
      %602 = vmatpush1.bf16.msra.mxu0 0
      %603 = vmatprep.subr.bf16.mxu0 0
      %604 = vmatpush1.bf16.msra.mxu0 0
      %605 = vmatprep.subr.bf16.mxu0 0
      %606 = vmatpush1.bf16.msra.mxu0 0
      %607 = vmatprep.subr.bf16.mxu0 0
      %608 = vmatpush1.bf16.msra.mxu0 0
      %609 = vmatprep.subr.bf16.mxu0 0
      %610 = vmatpush1.bf16.msra.mxu0 0
      %611 = vmatprep.subr.bf16.mxu0 0
      %612 = vmatpush1.bf16.msra.mxu0 0
      %613 = vmatprep.subr.bf16.mxu0 0
      %614 = vmatpush1.bf16.msra.mxu0 0
      %615 = vmatprep.mubr.bf16.mxu0 0
      %616 = vmatmul.mubr.bf16.gmra.mrb[0].mxu0 %v572
      %v617 = vpop.f32.mrb[0].mxu0
      %v618 = vadd.f32 %v556, %v617
      %v619 = vpop.f32.mrb[0].mxu0
      %v620 = vpop.f32.mrb[0].mxu0
      %v621 = vadd.f32 %v556, %v620
      %v622 = vpop.f32.mrb[0].mxu0
      %623 = vmatprep.mubr.bf16.mxu0 0
      %624 = vmatmul.mubr.bf16.gmra.mrb[0].mxu0 %v575
      %v625 = vpop.f32.mrb[0].mxu0
      %v626 = vadd.f32 %v556, %v625
      %v627 = vpop.f32.mrb[0].mxu0
      %v628 = vpop.f32.mrb[0].mxu0
      %v629 = vadd.f32 %v556, %v628
      %v630 = vpop.f32.mrb[0].mxu0
      %631 = vmatprep.mubr.bf16.mxu0 0
      %632 = vmatmul.mubr.bf16.gmra.mrb[0].mxu0 %v578
      %v633 = vpop.f32.mrb[0].mxu0
      %v634 = vadd.f32 %v556, %v633
      %v635 = vpop.f32.mrb[0].mxu0
      %v636 = vpop.f32.mrb[0].mxu0
      %v637 = vadd.f32 %v556, %v636
      %v638 = vpop.f32.mrb[0].mxu0
      %639 = vmatprep.mubr.bf16.mxu0 0
      %640 = vmatmul.mubr.bf16.gmra.mrb[0].mxu0 %v581
      %v641 = vpop.f32.mrb[0].mxu0
      %v642 = vadd.f32 %v556, %v641
      %v643 = vpop.f32.mrb[0].mxu0
      %v644 = vpop.f32.mrb[0].mxu0
      %v645 = vadd.f32 %v556, %v644
      %v646 = vpop.f32.mrb[0].mxu0
      %647 = vdwg.mxu0
      %v648 = vmax.f32 %v618, 0.0
      %v649 = vmax.f32 %v621, 0.0
      %v650 = vmax.f32 %v626, 0.0
      %v651 = vmax.f32 %v629, 0.0
      %v652 = vmax.f32 %v634, 0.0
      %v653 = vmax.f32 %v637, 0.0
      %v654 = vmax.f32 %v642, 0.0
      %v655 = vmax.f32 %v645, 0.0
      %v656 = vpack.c.bf16 %v649, %v648
      %657 = vmatprep.subr.bf16.mxu0 0
      %658 = vmatpush1.bf16.msra.mxu0 %v656
      %659 = vmatprep.subr.bf16.mxu0 0
      %660 = vmatpush1.bf16.msra.mxu0 0
      %661 = vmatprep.subr.bf16.mxu0 0
      %662 = vmatpush1.bf16.msra.mxu0 0
      %663 = vmatprep.subr.bf16.mxu0 0
      %664 = vmatpush1.bf16.msra.mxu0 0
      %665 = vmatprep.subr.bf16.mxu0 0
      %666 = vmatpush1.bf16.msra.mxu0 0
      %667 = vmatprep.subr.bf16.mxu0 0
      %668 = vmatpush1.bf16.msra.mxu0 0
      %669 = vmatprep.subr.bf16.mxu0 0
      %670 = vmatpush1.bf16.msra.mxu0 0
      %671 = vmatprep.subr.bf16.mxu0 0
      %672 = vmatpush1.bf16.msra.mxu0 0
      %673 = vmatprep.subr.bf16.mxu0 0
      %674 = vmatpush1.bf16.msra.mxu0 0
      %675 = vmatprep.subr.bf16.mxu0 0
      %676 = vmatpush1.bf16.msra.mxu0 0
      %677 = vmatprep.subr.bf16.mxu0 0
      %678 = vmatpush1.bf16.msra.mxu0 0
      %679 = vmatprep.subr.bf16.mxu0 0
      %680 = vmatpush1.bf16.msra.mxu0 0
      %681 = vmatprep.subr.bf16.mxu0 0
      %682 = vmatpush1.bf16.msra.mxu0 0
      %683 = vmatprep.subr.bf16.mxu0 0
      %684 = vmatpush1.bf16.msra.mxu0 0
      %685 = vmatprep.subr.bf16.mxu0 0
      %686 = vmatpush1.bf16.msra.mxu0 0
      %687 = vmatprep.subr.bf16.mxu0 0
      %688 = vmatpush1.bf16.msra.mxu0 0
      %689 = vmatprep.mubr.bf16.mxu0 0
      %690 = vmatmul.mubr.bf16.gmra.mrb[0].mxu0 %v374
      %v691 = vpop.f32.mrb[0].mxu0
      %v692 = vadd.f32 0.0, %v691
      %v693 = vpop.f32.mrb[0].mxu0
      %v694 = vpop.f32.mrb[0].mxu0
      %v695 = vadd.f32 0.0, %v694
      %v696 = vpop.f32.mrb[0].mxu0
      %697 = vdwg.mxu0
      %v698 = vpack.c.bf16 %v651, %v650
      %699 = vmatprep.subr.bf16.mxu0 0
      %700 = vmatpush1.bf16.msra.mxu0 %v698
      %701 = vmatprep.subr.bf16.mxu0 0
      %702 = vmatpush1.bf16.msra.mxu0 0
      %703 = vmatprep.subr.bf16.mxu0 0
      %704 = vmatpush1.bf16.msra.mxu0 0
      %705 = vmatprep.subr.bf16.mxu0 0
      %706 = vmatpush1.bf16.msra.mxu0 0
      %707 = vmatprep.subr.bf16.mxu0 0
      %708 = vmatpush1.bf16.msra.mxu0 0
      %709 = vmatprep.subr.bf16.mxu0 0
      %710 = vmatpush1.bf16.msra.mxu0 0
      %711 = vmatprep.subr.bf16.mxu0 0
      %712 = vmatpush1.bf16.msra.mxu0 0
      %713 = vmatprep.subr.bf16.mxu0 0
      %714 = vmatpush1.bf16.msra.mxu0 0
      %715 = vmatprep.subr.bf16.mxu0 0
      %716 = vmatpush1.bf16.msra.mxu0 0
      %717 = vmatprep.subr.bf16.mxu0 0
      %718 = vmatpush1.bf16.msra.mxu0 0
      %719 = vmatprep.subr.bf16.mxu0 0
      %720 = vmatpush1.bf16.msra.mxu0 0
      %721 = vmatprep.subr.bf16.mxu0 0
      %722 = vmatpush1.bf16.msra.mxu0 0
      %723 = vmatprep.subr.bf16.mxu0 0
      %724 = vmatpush1.bf16.msra.mxu0 0
      %725 = vmatprep.subr.bf16.mxu0 0
      %726 = vmatpush1.bf16.msra.mxu0 0
      %727 = vmatprep.subr.bf16.mxu0 0
      %728 = vmatpush1.bf16.msra.mxu0 0
      %729 = vmatprep.subr.bf16.mxu0 0
      %730 = vmatpush1.bf16.msra.mxu0 0
      %731 = vmatprep.mubr.bf16.mxu0 0
      %732 = vmatmul.mubr.bf16.gmra.mrb[0].mxu0 %v374
      %v733 = vpop.f32.mrb[0].mxu0
      %v734 = vadd.f32 0.0, %v733
      %v735 = vpop.f32.mrb[0].mxu0
      %v736 = vpop.f32.mrb[0].mxu0
      %v737 = vadd.f32 0.0, %v736
      %v738 = vpop.f32.mrb[0].mxu0
      %739 = vdwg.mxu0
      %v740 = vpack.c.bf16 %v653, %v652
      %741 = vmatprep.subr.bf16.mxu0 0
      %742 = vmatpush1.bf16.msra.mxu0 %v740
      %743 = vmatprep.subr.bf16.mxu0 0
      %744 = vmatpush1.bf16.msra.mxu0 0
      %745 = vmatprep.subr.bf16.mxu0 0
      %746 = vmatpush1.bf16.msra.mxu0 0
      %747 = vmatprep.subr.bf16.mxu0 0
      %748 = vmatpush1.bf16.msra.mxu0 0
      %749 = vmatprep.subr.bf16.mxu0 0
      %750 = vmatpush1.bf16.msra.mxu0 0
      %751 = vmatprep.subr.bf16.mxu0 0
      %752 = vmatpush1.bf16.msra.mxu0 0
      %753 = vmatprep.subr.bf16.mxu0 0
      %754 = vmatpush1.bf16.msra.mxu0 0
      %755 = vmatprep.subr.bf16.mxu0 0
      %756 = vmatpush1.bf16.msra.mxu0 0
      %757 = vmatprep.subr.bf16.mxu0 0
      %758 = vmatpush1.bf16.msra.mxu0 0
      %759 = vmatprep.subr.bf16.mxu0 0
      %760 = vmatpush1.bf16.msra.mxu0 0
      %761 = vmatprep.subr.bf16.mxu0 0
      %762 = vmatpush1.bf16.msra.mxu0 0
      %763 = vmatprep.subr.bf16.mxu0 0
      %764 = vmatpush1.bf16.msra.mxu0 0
      %765 = vmatprep.subr.bf16.mxu0 0
      %766 = vmatpush1.bf16.msra.mxu0 0
      %767 = vmatprep.subr.bf16.mxu0 0
      %768 = vmatpush1.bf16.msra.mxu0 0
      %769 = vmatprep.subr.bf16.mxu0 0
      %770 = vmatpush1.bf16.msra.mxu0 0
      %771 = vmatprep.subr.bf16.mxu0 0
      %772 = vmatpush1.bf16.msra.mxu0 0
      %773 = vmatprep.mubr.bf16.mxu0 0
      %774 = vmatmul.mubr.bf16.gmra.mrb[0].mxu0 %v374
      %v775 = vpop.f32.mrb[0].mxu0
      %v776 = vadd.f32 0.0, %v775
      %v777 = vpop.f32.mrb[0].mxu0
      %v778 = vpop.f32.mrb[0].mxu0
      %v779 = vadd.f32 0.0, %v778
      %v780 = vpop.f32.mrb[0].mxu0
      %781 = vdwg.mxu0
      %v782 = vpack.c.bf16 %v655, %v654
      %783 = vmatprep.subr.bf16.mxu0 0
      %784 = vmatpush1.bf16.msra.mxu0 %v782
      %785 = vmatprep.subr.bf16.mxu0 0
      %786 = vmatpush1.bf16.msra.mxu0 0
      %787 = vmatprep.subr.bf16.mxu0 0
      %788 = vmatpush1.bf16.msra.mxu0 0
      %789 = vmatprep.subr.bf16.mxu0 0
      %790 = vmatpush1.bf16.msra.mxu0 0
      %791 = vmatprep.subr.bf16.mxu0 0
      %792 = vmatpush1.bf16.msra.mxu0 0
      %793 = vmatprep.subr.bf16.mxu0 0
      %794 = vmatpush1.bf16.msra.mxu0 0
      %795 = vmatprep.subr.bf16.mxu0 0
      %796 = vmatpush1.bf16.msra.mxu0 0
      %797 = vmatprep.subr.bf16.mxu0 0
      %798 = vmatpush1.bf16.msra.mxu0 0
      %799 = vmatprep.subr.bf16.mxu0 0
      %800 = vmatpush1.bf16.msra.mxu0 0
      %801 = vmatprep.subr.bf16.mxu0 0
      %802 = vmatpush1.bf16.msra.mxu0 0
      %803 = vmatprep.subr.bf16.mxu0 0
      %804 = vmatpush1.bf16.msra.mxu0 0
      %805 = vmatprep.subr.bf16.mxu0 0
      %806 = vmatpush1.bf16.msra.mxu0 0
      %807 = vmatprep.subr.bf16.mxu0 0
      %808 = vmatpush1.bf16.msra.mxu0 0
      %809 = vmatprep.subr.bf16.mxu0 0
      %810 = vmatpush1.bf16.msra.mxu0 0
      %811 = vmatprep.subr.bf16.mxu0 0
      %812 = vmatpush1.bf16.msra.mxu0 0
      %813 = vmatprep.subr.bf16.mxu0 0
      %814 = vmatpush1.bf16.msra.mxu0 0
      %815 = vmatprep.mubr.bf16.mxu0 0
      %816 = vmatmul.mubr.bf16.gmra.mrb[0].mxu0 %v374
      %v817 = vpop.f32.mrb[0].mxu0
      %v818 = vadd.f32 0.0, %v817
      %v819 = vpop.f32.mrb[0].mxu0
      %v820 = vpop.f32.mrb[0].mxu0
      %v821 = vadd.f32 0.0, %v820
      %v822 = vpop.f32.mrb[0].mxu0
      %823 = vdwg.mxu0
      %v824 = vpack.c.bf16 %v695, %v692
      %v825 = vpack.c.bf16 %v737, %v734
      %v826 = vpack.c.bf16 %v779, %v776
      %v827 = vpack.c.bf16 %v821, %v818
      %s828 = scalar_lea.vmem %s3, 16
      %v829 = vld [vmem:[%s828] sm:$0xf]
      %v830 = vld [vmem:[%s828 + $0x4] sm:$0xf]
      %v831 = vld [vmem:[%s828 + $0x8] sm:$0xf]
      %v832 = vld [vmem:[%s828 + $0xc] sm:$0xf]
      %s833 = scalar_lea.vmem %s4, 1
      %v834 = vld [vmem:[%s833] sm:$0x1]
      %v836 = vlaneseq
      %v837 = vshrl.u32 %v836, 7
      %v838 = vsub.s32 0, %v837
      %v839 = vrot.slane %v834, %v838
      %v845 = vunpack.c.l.b16 %v829
      %v846 = vunpack.c.l.b16 %v830
      %v847 = vunpack.c.l.b16 %v831
      %v848 = vunpack.c.l.b16 %v832
      %v849 = vpack.c.b16 %v846, %v845
      %v850 = vpack.c.b16 %v848, %v847
      %v854 = vsel %vm570, %v824, 0
      %v857 = vsel %vm570, %v825, 0
      %v860 = vsel %vm570, %v826, 0
      %v863 = vsel %vm570, %v827, 0
      %865 = vmatprep.subr.bf16.mxu0 0
      %866 = vmatpush1.bf16.msra.mxu0 %v849
      %867 = vmatprep.subr.bf16.mxu0 0
      %868 = vmatpush1.bf16.msra.mxu0 %v850
      %869 = vmatprep.subr.bf16.mxu0 0
      %870 = vmatpush1.bf16.msra.mxu0 0
      %871 = vmatprep.subr.bf16.mxu0 0
      %872 = vmatpush1.bf16.msra.mxu0 0
      %873 = vmatprep.subr.bf16.mxu0 0
      %874 = vmatpush1.bf16.msra.mxu0 0
      %875 = vmatprep.subr.bf16.mxu0 0
      %876 = vmatpush1.bf16.msra.mxu0 0
      %877 = vmatprep.subr.bf16.mxu0 0
      %878 = vmatpush1.bf16.msra.mxu0 0
      %879 = vmatprep.subr.bf16.mxu0 0
      %880 = vmatpush1.bf16.msra.mxu0 0
      %881 = vmatprep.subr.bf16.mxu0 0
      %882 = vmatpush1.bf16.msra.mxu0 0
      %883 = vmatprep.subr.bf16.mxu0 0
      %884 = vmatpush1.bf16.msra.mxu0 0
      %885 = vmatprep.subr.bf16.mxu0 0
      %886 = vmatpush1.bf16.msra.mxu0 0
      %887 = vmatprep.subr.bf16.mxu0 0
      %888 = vmatpush1.bf16.msra.mxu0 0
      %889 = vmatprep.subr.bf16.mxu0 0
      %890 = vmatpush1.bf16.msra.mxu0 0
      %891 = vmatprep.subr.bf16.mxu0 0
      %892 = vmatpush1.bf16.msra.mxu0 0
      %893 = vmatprep.subr.bf16.mxu0 0
      %894 = vmatpush1.bf16.msra.mxu0 0
      %895 = vmatprep.subr.bf16.mxu0 0
      %896 = vmatpush1.bf16.msra.mxu0 0
      %897 = vmatprep.mubr.bf16.mxu0 0
      %898 = vmatmul.mubr.bf16.gmra.mrb[0].mxu0 %v854
      %v899 = vpop.f32.mrb[0].mxu0
      %v900 = vadd.f32 %v839, %v899
      %v901 = vpop.f32.mrb[0].mxu0
      %v902 = vpop.f32.mrb[0].mxu0
      %v903 = vadd.f32 %v839, %v902
      %v904 = vpop.f32.mrb[0].mxu0
      %905 = vmatprep.mubr.bf16.mxu0 0
      %906 = vmatmul.mubr.bf16.gmra.mrb[0].mxu0 %v857
      %v907 = vpop.f32.mrb[0].mxu0
      %v908 = vadd.f32 %v839, %v907
      %v909 = vpop.f32.mrb[0].mxu0
      %v910 = vpop.f32.mrb[0].mxu0
      %v911 = vadd.f32 %v839, %v910
      %v912 = vpop.f32.mrb[0].mxu0
      %913 = vmatprep.mubr.bf16.mxu0 0
      %914 = vmatmul.mubr.bf16.gmra.mrb[0].mxu0 %v860
      %v915 = vpop.f32.mrb[0].mxu0
      %v916 = vadd.f32 %v839, %v915
      %v917 = vpop.f32.mrb[0].mxu0
      %v918 = vpop.f32.mrb[0].mxu0
      %v919 = vadd.f32 %v839, %v918
      %v920 = vpop.f32.mrb[0].mxu0
      %921 = vmatprep.mubr.bf16.mxu0 0
      %922 = vmatmul.mubr.bf16.gmra.mrb[0].mxu0 %v863
      %v923 = vpop.f32.mrb[0].mxu0
      %v924 = vadd.f32 %v839, %v923
      %v925 = vpop.f32.mrb[0].mxu0
      %v926 = vpop.f32.mrb[0].mxu0
      %v927 = vadd.f32 %v839, %v926
      %v928 = vpop.f32.mrb[0].mxu0
      %929 = vdwg.mxu0
      %v930 = vmax.f32 %v900, 0.0
      %v931 = vmax.f32 %v903, 0.0
      %v932 = vmax.f32 %v908, 0.0
      %v933 = vmax.f32 %v911, 0.0
      %v934 = vmax.f32 %v916, 0.0
      %v935 = vmax.f32 %v919, 0.0
      %v936 = vmax.f32 %v924, 0.0
      %v937 = vmax.f32 %v927, 0.0
      %v938 = vpack.c.bf16 %v931, %v930
      %v939 = vpack.c.bf16 %v933, %v932
      %v940 = vpack.c.bf16 %v935, %v934
      %v941 = vpack.c.bf16 %v937, %v936
      %v942 = vld [vmem:[%s5] sm:$0xf]
      %v943 = vld [vmem:[%s5 + $0x4] sm:$0xf]
      %v944 = vld [vmem:[%s5 + $0x8] sm:$0xf]
      %v945 = vld [vmem:[%s5 + $0xc] sm:$0xf]
      %v946 = vld [vmem:[%s6] sm:$0x1]
      %v948 = vlaneseq
      %v949 = vshrl.u32 %v948, 7
      %v950 = vsub.s32 0, %v949
      %v951 = vrot.slane %v946, %v950
      %v957 = vunpack.c.l.b16 %v942
      %v958 = vunpack.c.l.b16 %v943
      %v959 = vunpack.c.l.b16 %v944
      %v960 = vunpack.c.l.b16 %v945
      %v961 = vpack.c.b16 %v958, %v957
      %v962 = vpack.c.b16 %v960, %v959
      %v966 = vsel %vm570, %v938, 0
      %v969 = vsel %vm570, %v939, 0
      %v972 = vsel %vm570, %v940, 0
      %v975 = vsel %vm570, %v941, 0
      %977 = vmatprep.subr.bf16.mxu0 0
      %978 = vmatpush1.bf16.msra.mxu0 %v961
      %979 = vmatprep.subr.bf16.mxu0 0
      %980 = vmatpush1.bf16.msra.mxu0 %v962
      %981 = vmatprep.subr.bf16.mxu0 0
      %982 = vmatpush1.bf16.msra.mxu0 0
      %983 = vmatprep.subr.bf16.mxu0 0
      %984 = vmatpush1.bf16.msra.mxu0 0
      %985 = vmatprep.subr.bf16.mxu0 0
      %986 = vmatpush1.bf16.msra.mxu0 0
      %987 = vmatprep.subr.bf16.mxu0 0
      %988 = vmatpush1.bf16.msra.mxu0 0
      %989 = vmatprep.subr.bf16.mxu0 0
      %990 = vmatpush1.bf16.msra.mxu0 0
      %991 = vmatprep.subr.bf16.mxu0 0
      %992 = vmatpush1.bf16.msra.mxu0 0
      %993 = vmatprep.subr.bf16.mxu0 0
      %994 = vmatpush1.bf16.msra.mxu0 0
      %995 = vmatprep.subr.bf16.mxu0 0
      %996 = vmatpush1.bf16.msra.mxu0 0
      %997 = vmatprep.subr.bf16.mxu0 0
      %998 = vmatpush1.bf16.msra.mxu0 0
      %999 = vmatprep.subr.bf16.mxu0 0
      %1000 = vmatpush1.bf16.msra.mxu0 0
      %1001 = vmatprep.subr.bf16.mxu0 0
      %1002 = vmatpush1.bf16.msra.mxu0 0
      %1003 = vmatprep.subr.bf16.mxu0 0
      %1004 = vmatpush1.bf16.msra.mxu0 0
      %1005 = vmatprep.subr.bf16.mxu0 0
      %1006 = vmatpush1.bf16.msra.mxu0 0
      %1007 = vmatprep.subr.bf16.mxu0 0
      %1008 = vmatpush1.bf16.msra.mxu0 0
      %1009 = vmatprep.mubr.bf16.mxu0 0
      %1010 = vmatmul.mubr.bf16.gmra.mrb[0].mxu0 %v966
      %v1011 = vpop.f32.mrb[0].mxu0
      %v1012 = vadd.f32 %v951, %v1011
      %v1013 = vpop.f32.mrb[0].mxu0
      %v1014 = vpop.f32.mrb[0].mxu0
      %v1015 = vadd.f32 %v951, %v1014
      %v1016 = vpop.f32.mrb[0].mxu0
      %1017 = vmatprep.mubr.bf16.mxu0 0
      %1018 = vmatmul.mubr.bf16.gmra.mrb[0].mxu0 %v969
      %v1019 = vpop.f32.mrb[0].mxu0
      %v1020 = vadd.f32 %v951, %v1019
      %v1021 = vpop.f32.mrb[0].mxu0
      %v1022 = vpop.f32.mrb[0].mxu0
      %v1023 = vadd.f32 %v951, %v1022
      %v1024 = vpop.f32.mrb[0].mxu0
      %1025 = vmatprep.mubr.bf16.mxu0 0
      %1026 = vmatmul.mubr.bf16.gmra.mrb[0].mxu0 %v972
      %v1027 = vpop.f32.mrb[0].mxu0
      %v1028 = vadd.f32 %v951, %v1027
      %v1029 = vpop.f32.mrb[0].mxu0
      %v1030 = vpop.f32.mrb[0].mxu0
      %v1031 = vadd.f32 %v951, %v1030
      %v1032 = vpop.f32.mrb[0].mxu0
      %1033 = vmatprep.mubr.bf16.mxu0 0
      %1034 = vmatmul.mubr.bf16.gmra.mrb[0].mxu0 %v975
      %v1035 = vpop.f32.mrb[0].mxu0
      %v1036 = vadd.f32 %v951, %v1035
      %v1037 = vpop.f32.mrb[0].mxu0
      %v1038 = vpop.f32.mrb[0].mxu0
      %v1039 = vadd.f32 %v951, %v1038
      %v1040 = vpop.f32.mrb[0].mxu0
      %1041 = vdwg.mxu0
      %v1042 = vsub.f32 %v358, %v1012
      %v1043 = vsub.f32 %v359, %v1015
      %v1044 = vsub.f32 %v360, %v1020
      %v1045 = vsub.f32 %v361, %v1023
      %v1046 = vsub.f32 %v362, %v1028
      %v1047 = vsub.f32 %v363, %v1031
      %v1048 = vsub.f32 %v364, %v1036
      %v1049 = vsub.f32 %v365, %v1039
      %v1050 = vadd.f32 %v1012, 0.0
      %v1051 = vadd.f32 %v1015, 0.0
      %v1052 = vadd.f32 %v1020, 0.0
      %v1053 = vadd.f32 %v1023, 0.0
      %v1054 = vadd.f32 %v1028, 0.0
      %v1055 = vadd.f32 %v1031, 0.0
      %v1056 = vadd.f32 %v1036, 0.0
      %v1057 = vadd.f32 %v1039, 0.0
      %v1058 = vpack.c.bf16 %v1043, %v1042
      %1059 = vmatprep.subr.bf16.mxu0 0
      %1060 = vmatpush1.bf16.msra.mxu0 %v1058
      %1061 = vmatprep.subr.bf16.mxu0 0
      %1062 = vmatpush1.bf16.msra.mxu0 0
      %1063 = vmatprep.subr.bf16.mxu0 0
      %1064 = vmatpush1.bf16.msra.mxu0 0
      %1065 = vmatprep.subr.bf16.mxu0 0
      %1066 = vmatpush1.bf16.msra.mxu0 0
      %1067 = vmatprep.subr.bf16.mxu0 0
      %1068 = vmatpush1.bf16.msra.mxu0 0
      %1069 = vmatprep.subr.bf16.mxu0 0
      %1070 = vmatpush1.bf16.msra.mxu0 0
      %1071 = vmatprep.subr.bf16.mxu0 0
      %1072 = vmatpush1.bf16.msra.mxu0 0
      %1073 = vmatprep.subr.bf16.mxu0 0
      %1074 = vmatpush1.bf16.msra.mxu0 0
      %1075 = vmatprep.subr.bf16.mxu0 0
      %1076 = vmatpush1.bf16.msra.mxu0 0
      %1077 = vmatprep.subr.bf16.mxu0 0
      %1078 = vmatpush1.bf16.msra.mxu0 0
      %1079 = vmatprep.subr.bf16.mxu0 0
      %1080 = vmatpush1.bf16.msra.mxu0 0
      %1081 = vmatprep.subr.bf16.mxu0 0
      %1082 = vmatpush1.bf16.msra.mxu0 0
      %1083 = vmatprep.subr.bf16.mxu0 0
      %1084 = vmatpush1.bf16.msra.mxu0 0
      %1085 = vmatprep.subr.bf16.mxu0 0
      %1086 = vmatpush1.bf16.msra.mxu0 0
      %1087 = vmatprep.subr.bf16.mxu0 0
      %1088 = vmatpush1.bf16.msra.mxu0 0
      %1089 = vmatprep.subr.bf16.mxu0 0
      %1090 = vmatpush1.bf16.msra.mxu0 0
      %1091 = vmatprep.mubr.bf16.mxu0 0
      %1092 = vmatmul.mubr.bf16.gmra.mrb[0].mxu0 %v374
      %v1093 = vpop.f32.mrb[0].mxu0
      %v1094 = vadd.f32 0.0, %v1093
      %v1095 = vpop.f32.mrb[0].mxu0
      %v1096 = vpop.f32.mrb[0].mxu0
      %v1097 = vadd.f32 0.0, %v1096
      %v1098 = vpop.f32.mrb[0].mxu0
      %1099 = vdwg.mxu0
      %v1100 = vpack.c.bf16 %v1045, %v1044
      %1101 = vmatprep.subr.bf16.mxu0 0
      %1102 = vmatpush1.bf16.msra.mxu0 %v1100
      %1103 = vmatprep.subr.bf16.mxu0 0
      %1104 = vmatpush1.bf16.msra.mxu0 0
      %1105 = vmatprep.subr.bf16.mxu0 0
      %1106 = vmatpush1.bf16.msra.mxu0 0
      %1107 = vmatprep.subr.bf16.mxu0 0
      %1108 = vmatpush1.bf16.msra.mxu0 0
      %1109 = vmatprep.subr.bf16.mxu0 0
      %1110 = vmatpush1.bf16.msra.mxu0 0
      %1111 = vmatprep.subr.bf16.mxu0 0
      %1112 = vmatpush1.bf16.msra.mxu0 0
      %1113 = vmatprep.subr.bf16.mxu0 0
      %1114 = vmatpush1.bf16.msra.mxu0 0
      %1115 = vmatprep.subr.bf16.mxu0 0
      %1116 = vmatpush1.bf16.msra.mxu0 0
      %1117 = vmatprep.subr.bf16.mxu0 0
      %1118 = vmatpush1.bf16.msra.mxu0 0
      %1119 = vmatprep.subr.bf16.mxu0 0
      %1120 = vmatpush1.bf16.msra.mxu0 0
      %1121 = vmatprep.subr.bf16.mxu0 0
      %1122 = vmatpush1.bf16.msra.mxu0 0
      %1123 = vmatprep.subr.bf16.mxu0 0
      %1124 = vmatpush1.bf16.msra.mxu0 0
      %1125 = vmatprep.subr.bf16.mxu0 0
      %1126 = vmatpush1.bf16.msra.mxu0 0
      %1127 = vmatprep.subr.bf16.mxu0 0
      %1128 = vmatpush1.bf16.msra.mxu0 0
      %1129 = vmatprep.subr.bf16.mxu0 0
      %1130 = vmatpush1.bf16.msra.mxu0 0
      %1131 = vmatprep.subr.bf16.mxu0 0
      %1132 = vmatpush1.bf16.msra.mxu0 0
      %1133 = vmatprep.mubr.bf16.mxu0 0
      %1134 = vmatmul.mubr.bf16.gmra.mrb[0].mxu0 %v374
      %v1135 = vpop.f32.mrb[0].mxu0
      %v1136 = vadd.f32 0.0, %v1135
      %v1137 = vpop.f32.mrb[0].mxu0
      %v1138 = vpop.f32.mrb[0].mxu0
      %v1139 = vadd.f32 0.0, %v1138
      %v1140 = vpop.f32.mrb[0].mxu0
      %1141 = vdwg.mxu0
      %v1142 = vpack.c.bf16 %v1047, %v1046
      %1143 = vmatprep.subr.bf16.mxu0 0
      %1144 = vmatpush1.bf16.msra.mxu0 %v1142
      %1145 = vmatprep.subr.bf16.mxu0 0
      %1146 = vmatpush1.bf16.msra.mxu0 0
      %1147 = vmatprep.subr.bf16.mxu0 0
      %1148 = vmatpush1.bf16.msra.mxu0 0
      %1149 = vmatprep.subr.bf16.mxu0 0
      %1150 = vmatpush1.bf16.msra.mxu0 0
      %1151 = vmatprep.subr.bf16.mxu0 0
      %1152 = vmatpush1.bf16.msra.mxu0 0
      %1153 = vmatprep.subr.bf16.mxu0 0
      %1154 = vmatpush1.bf16.msra.mxu0 0
      %1155 = vmatprep.subr.bf16.mxu0 0
      %1156 = vmatpush1.bf16.msra.mxu0 0
      %1157 = vmatprep.subr.bf16.mxu0 0
      %1158 = vmatpush1.bf16.msra.mxu0 0
      %1159 = vmatprep.subr.bf16.mxu0 0
      %1160 = vmatpush1.bf16.msra.mxu0 0
      %1161 = vmatprep.subr.bf16.mxu0 0
      %1162 = vmatpush1.bf16.msra.mxu0 0
      %1163 = vmatprep.subr.bf16.mxu0 0
      %1164 = vmatpush1.bf16.msra.mxu0 0
      %1165 = vmatprep.subr.bf16.mxu0 0
      %1166 = vmatpush1.bf16.msra.mxu0 0
      %1167 = vmatprep.subr.bf16.mxu0 0
      %1168 = vmatpush1.bf16.msra.mxu0 0
      %1169 = vmatprep.subr.bf16.mxu0 0
      %1170 = vmatpush1.bf16.msra.mxu0 0
      %1171 = vmatprep.subr.bf16.mxu0 0
      %1172 = vmatpush1.bf16.msra.mxu0 0
      %1173 = vmatprep.subr.bf16.mxu0 0
      %1174 = vmatpush1.bf16.msra.mxu0 0
      %1175 = vmatprep.mubr.bf16.mxu0 0
      %1176 = vmatmul.mubr.bf16.gmra.mrb[0].mxu0 %v374
      %v1177 = vpop.f32.mrb[0].mxu0
      %v1178 = vadd.f32 0.0, %v1177
      %v1179 = vpop.f32.mrb[0].mxu0
      %v1180 = vpop.f32.mrb[0].mxu0
      %v1181 = vadd.f32 0.0, %v1180
      %v1182 = vpop.f32.mrb[0].mxu0
      %1183 = vdwg.mxu0
      %v1184 = vpack.c.bf16 %v1049, %v1048
      %1185 = vmatprep.subr.bf16.mxu0 0
      %1186 = vmatpush1.bf16.msra.mxu0 %v1184
      %1187 = vmatprep.subr.bf16.mxu0 0
      %1188 = vmatpush1.bf16.msra.mxu0 0
      %1189 = vmatprep.subr.bf16.mxu0 0
      %1190 = vmatpush1.bf16.msra.mxu0 0
      %1191 = vmatprep.subr.bf16.mxu0 0
      %1192 = vmatpush1.bf16.msra.mxu0 0
      %1193 = vmatprep.subr.bf16.mxu0 0
      %1194 = vmatpush1.bf16.msra.mxu0 0
      %1195 = vmatprep.subr.bf16.mxu0 0
      %1196 = vmatpush1.bf16.msra.mxu0 0
      %1197 = vmatprep.subr.bf16.mxu0 0
      %1198 = vmatpush1.bf16.msra.mxu0 0
      %1199 = vmatprep.subr.bf16.mxu0 0
      %1200 = vmatpush1.bf16.msra.mxu0 0
      %1201 = vmatprep.subr.bf16.mxu0 0
      %1202 = vmatpush1.bf16.msra.mxu0 0
      %1203 = vmatprep.subr.bf16.mxu0 0
      %1204 = vmatpush1.bf16.msra.mxu0 0
      %1205 = vmatprep.subr.bf16.mxu0 0
      %1206 = vmatpush1.bf16.msra.mxu0 0
      %1207 = vmatprep.subr.bf16.mxu0 0
      %1208 = vmatpush1.bf16.msra.mxu0 0
      %1209 = vmatprep.subr.bf16.mxu0 0
      %1210 = vmatpush1.bf16.msra.mxu0 0
      %1211 = vmatprep.subr.bf16.mxu0 0
      %1212 = vmatpush1.bf16.msra.mxu0 0
      %1213 = vmatprep.subr.bf16.mxu0 0
      %1214 = vmatpush1.bf16.msra.mxu0 0
      %1215 = vmatprep.subr.bf16.mxu0 0
      %1216 = vmatpush1.bf16.msra.mxu0 0
      %1217 = vmatprep.mubr.bf16.mxu0 0
      %1218 = vmatmul.mubr.bf16.gmra.mrb[0].mxu0 %v374
      %v1219 = vpop.f32.mrb[0].mxu0
      %v1220 = vadd.f32 0.0, %v1219
      %v1221 = vpop.f32.mrb[0].mxu0
      %v1222 = vpop.f32.mrb[0].mxu0
      %v1223 = vadd.f32 0.0, %v1222
      %v1224 = vpop.f32.mrb[0].mxu0
      %1225 = vdwg.mxu0
      %v1226 = vpack.c.bf16 %v1097, %v1094
      %v1227 = vpack.c.bf16 %v1139, %v1136
      %v1228 = vpack.c.bf16 %v1181, %v1178
      %v1229 = vpack.c.bf16 %v1223, %v1220
      %s1230 = scalar_lea.vmem %s3, 32
      %v1231 = vld [vmem:[%s1230] sm:$0xf]
      %v1232 = vld [vmem:[%s1230 + $0x4] sm:$0xf]
      %v1233 = vld [vmem:[%s1230 + $0x8] sm:$0xf]
      %v1234 = vld [vmem:[%s1230 + $0xc] sm:$0xf]
      %s1235 = scalar_lea.vmem %s4, 2
      %v1236 = vld [vmem:[%s1235] sm:$0x1]
      %v1238 = vlaneseq
      %v1239 = vshrl.u32 %v1238, 7
      %v1240 = vsub.s32 0, %v1239
      %v1241 = vrot.slane %v1236, %v1240
      %v1247 = vunpack.c.l.b16 %v1231
      %v1248 = vunpack.c.l.b16 %v1232
      %v1249 = vunpack.c.l.b16 %v1233
      %v1250 = vunpack.c.l.b16 %v1234
      %v1251 = vpack.c.b16 %v1248, %v1247
      %v1252 = vpack.c.b16 %v1250, %v1249
      %v1256 = vsel %vm570, %v1226, 0
      %v1259 = vsel %vm570, %v1227, 0
      %v1262 = vsel %vm570, %v1228, 0
      %v1265 = vsel %vm570, %v1229, 0
      %1267 = vmatprep.subr.bf16.mxu0 0
      %1268 = vmatpush1.bf16.msra.mxu0 %v1251
      %1269 = vmatprep.subr.bf16.mxu0 0
      %1270 = vmatpush1.bf16.msra.mxu0 %v1252
      %1271 = vmatprep.subr.bf16.mxu0 0
      %1272 = vmatpush1.bf16.msra.mxu0 0
      %1273 = vmatprep.subr.bf16.mxu0 0
      %1274 = vmatpush1.bf16.msra.mxu0 0
      %1275 = vmatprep.subr.bf16.mxu0 0
      %1276 = vmatpush1.bf16.msra.mxu0 0
      %1277 = vmatprep.subr.bf16.mxu0 0
      %1278 = vmatpush1.bf16.msra.mxu0 0
      %1279 = vmatprep.subr.bf16.mxu0 0
      %1280 = vmatpush1.bf16.msra.mxu0 0
      %1281 = vmatprep.subr.bf16.mxu0 0
      %1282 = vmatpush1.bf16.msra.mxu0 0
      %1283 = vmatprep.subr.bf16.mxu0 0
      %1284 = vmatpush1.bf16.msra.mxu0 0
      %1285 = vmatprep.subr.bf16.mxu0 0
      %1286 = vmatpush1.bf16.msra.mxu0 0
      %1287 = vmatprep.subr.bf16.mxu0 0
      %1288 = vmatpush1.bf16.msra.mxu0 0
      %1289 = vmatprep.subr.bf16.mxu0 0
      %1290 = vmatpush1.bf16.msra.mxu0 0
      %1291 = vmatprep.subr.bf16.mxu0 0
      %1292 = vmatpush1.bf16.msra.mxu0 0
      %1293 = vmatprep.subr.bf16.mxu0 0
      %1294 = vmatpush1.bf16.msra.mxu0 0
      %1295 = vmatprep.subr.bf16.mxu0 0
      %1296 = vmatpush1.bf16.msra.mxu0 0
      %1297 = vmatprep.subr.bf16.mxu0 0
      %1298 = vmatpush1.bf16.msra.mxu0 0
      %1299 = vmatprep.mubr.bf16.mxu0 0
      %1300 = vmatmul.mubr.bf16.gmra.mrb[0].mxu0 %v1256
      %v1301 = vpop.f32.mrb[0].mxu0
      %v1302 = vadd.f32 %v1241, %v1301
      %v1303 = vpop.f32.mrb[0].mxu0
      %v1304 = vpop.f32.mrb[0].mxu0
      %v1305 = vadd.f32 %v1241, %v1304
      %v1306 = vpop.f32.mrb[0].mxu0
      %1307 = vmatprep.mubr.bf16.mxu0 0
      %1308 = vmatmul.mubr.bf16.gmra.mrb[0].mxu0 %v1259
      %v1309 = vpop.f32.mrb[0].mxu0
      %v1310 = vadd.f32 %v1241, %v1309
      %v1311 = vpop.f32.mrb[0].mxu0
      %v1312 = vpop.f32.mrb[0].mxu0
      %v1313 = vadd.f32 %v1241, %v1312
      %v1314 = vpop.f32.mrb[0].mxu0
      %1315 = vmatprep.mubr.bf16.mxu0 0
      %1316 = vmatmul.mubr.bf16.gmra.mrb[0].mxu0 %v1262
      %v1317 = vpop.f32.mrb[0].mxu0
      %v1318 = vadd.f32 %v1241, %v1317
      %v1319 = vpop.f32.mrb[0].mxu0
      %v1320 = vpop.f32.mrb[0].mxu0
      %v1321 = vadd.f32 %v1241, %v1320
      %v1322 = vpop.f32.mrb[0].mxu0
      %1323 = vmatprep.mubr.bf16.mxu0 0
      %1324 = vmatmul.mubr.bf16.gmra.mrb[0].mxu0 %v1265
      %v1325 = vpop.f32.mrb[0].mxu0
      %v1326 = vadd.f32 %v1241, %v1325
      %v1327 = vpop.f32.mrb[0].mxu0
      %v1328 = vpop.f32.mrb[0].mxu0
      %v1329 = vadd.f32 %v1241, %v1328
      %v1330 = vpop.f32.mrb[0].mxu0
      %1331 = vdwg.mxu0
      %v1332 = vmax.f32 %v1302, 0.0
      %v1333 = vmax.f32 %v1305, 0.0
      %v1334 = vmax.f32 %v1310, 0.0
      %v1335 = vmax.f32 %v1313, 0.0
      %v1336 = vmax.f32 %v1318, 0.0
      %v1337 = vmax.f32 %v1321, 0.0
      %v1338 = vmax.f32 %v1326, 0.0
      %v1339 = vmax.f32 %v1329, 0.0
      %v1340 = vpack.c.bf16 %v1333, %v1332
      %1341 = vmatprep.subr.bf16.mxu0 0
      %1342 = vmatpush1.bf16.msra.mxu0 %v1340
      %1343 = vmatprep.subr.bf16.mxu0 0
      %1344 = vmatpush1.bf16.msra.mxu0 0
      %1345 = vmatprep.subr.bf16.mxu0 0
      %1346 = vmatpush1.bf16.msra.mxu0 0
      %1347 = vmatprep.subr.bf16.mxu0 0
      %1348 = vmatpush1.bf16.msra.mxu0 0
      %1349 = vmatprep.subr.bf16.mxu0 0
      %1350 = vmatpush1.bf16.msra.mxu0 0
      %1351 = vmatprep.subr.bf16.mxu0 0
      %1352 = vmatpush1.bf16.msra.mxu0 0
      %1353 = vmatprep.subr.bf16.mxu0 0
      %1354 = vmatpush1.bf16.msra.mxu0 0
      %1355 = vmatprep.subr.bf16.mxu0 0
      %1356 = vmatpush1.bf16.msra.mxu0 0
      %1357 = vmatprep.subr.bf16.mxu0 0
      %1358 = vmatpush1.bf16.msra.mxu0 0
      %1359 = vmatprep.subr.bf16.mxu0 0
      %1360 = vmatpush1.bf16.msra.mxu0 0
      %1361 = vmatprep.subr.bf16.mxu0 0
      %1362 = vmatpush1.bf16.msra.mxu0 0
      %1363 = vmatprep.subr.bf16.mxu0 0
      %1364 = vmatpush1.bf16.msra.mxu0 0
      %1365 = vmatprep.subr.bf16.mxu0 0
      %1366 = vmatpush1.bf16.msra.mxu0 0
      %1367 = vmatprep.subr.bf16.mxu0 0
      %1368 = vmatpush1.bf16.msra.mxu0 0
      %1369 = vmatprep.subr.bf16.mxu0 0
      %1370 = vmatpush1.bf16.msra.mxu0 0
      %1371 = vmatprep.subr.bf16.mxu0 0
      %1372 = vmatpush1.bf16.msra.mxu0 0
      %1373 = vmatprep.mubr.bf16.mxu0 0
      %1374 = vmatmul.mubr.bf16.gmra.mrb[0].mxu0 %v374
      %v1375 = vpop.f32.mrb[0].mxu0
      %v1376 = vadd.f32 0.0, %v1375
      %v1377 = vpop.f32.mrb[0].mxu0
      %v1378 = vpop.f32.mrb[0].mxu0
      %v1379 = vadd.f32 0.0, %v1378
      %v1380 = vpop.f32.mrb[0].mxu0
      %1381 = vdwg.mxu0
      %v1382 = vpack.c.bf16 %v1335, %v1334
      %1383 = vmatprep.subr.bf16.mxu0 0
      %1384 = vmatpush1.bf16.msra.mxu0 %v1382
      %1385 = vmatprep.subr.bf16.mxu0 0
      %1386 = vmatpush1.bf16.msra.mxu0 0
      %1387 = vmatprep.subr.bf16.mxu0 0
      %1388 = vmatpush1.bf16.msra.mxu0 0
      %1389 = vmatprep.subr.bf16.mxu0 0
      %1390 = vmatpush1.bf16.msra.mxu0 0
      %1391 = vmatprep.subr.bf16.mxu0 0
      %1392 = vmatpush1.bf16.msra.mxu0 0
      %1393 = vmatprep.subr.bf16.mxu0 0
      %1394 = vmatpush1.bf16.msra.mxu0 0
      %1395 = vmatprep.subr.bf16.mxu0 0
      %1396 = vmatpush1.bf16.msra.mxu0 0
      %1397 = vmatprep.subr.bf16.mxu0 0
      %1398 = vmatpush1.bf16.msra.mxu0 0
      %1399 = vmatprep.subr.bf16.mxu0 0
      %1400 = vmatpush1.bf16.msra.mxu0 0
      %1401 = vmatprep.subr.bf16.mxu0 0
      %1402 = vmatpush1.bf16.msra.mxu0 0
      %1403 = vmatprep.subr.bf16.mxu0 0
      %1404 = vmatpush1.bf16.msra.mxu0 0
      %1405 = vmatprep.subr.bf16.mxu0 0
      %1406 = vmatpush1.bf16.msra.mxu0 0
      %1407 = vmatprep.subr.bf16.mxu0 0
      %1408 = vmatpush1.bf16.msra.mxu0 0
      %1409 = vmatprep.subr.bf16.mxu0 0
      %1410 = vmatpush1.bf16.msra.mxu0 0
      %1411 = vmatprep.subr.bf16.mxu0 0
      %1412 = vmatpush1.bf16.msra.mxu0 0
      %1413 = vmatprep.subr.bf16.mxu0 0
      %1414 = vmatpush1.bf16.msra.mxu0 0
      %1415 = vmatprep.mubr.bf16.mxu0 0
      %1416 = vmatmul.mubr.bf16.gmra.mrb[0].mxu0 %v374
      %v1417 = vpop.f32.mrb[0].mxu0
      %v1418 = vadd.f32 0.0, %v1417
      %v1419 = vpop.f32.mrb[0].mxu0
      %v1420 = vpop.f32.mrb[0].mxu0
      %v1421 = vadd.f32 0.0, %v1420
      %v1422 = vpop.f32.mrb[0].mxu0
      %1423 = vdwg.mxu0
      %v1424 = vpack.c.bf16 %v1337, %v1336
      %1425 = vmatprep.subr.bf16.mxu0 0
      %1426 = vmatpush1.bf16.msra.mxu0 %v1424
      %1427 = vmatprep.subr.bf16.mxu0 0
      %1428 = vmatpush1.bf16.msra.mxu0 0
      %1429 = vmatprep.subr.bf16.mxu0 0
      %1430 = vmatpush1.bf16.msra.mxu0 0
      %1431 = vmatprep.subr.bf16.mxu0 0
      %1432 = vmatpush1.bf16.msra.mxu0 0
      %1433 = vmatprep.subr.bf16.mxu0 0
      %1434 = vmatpush1.bf16.msra.mxu0 0
      %1435 = vmatprep.subr.bf16.mxu0 0
      %1436 = vmatpush1.bf16.msra.mxu0 0
      %1437 = vmatprep.subr.bf16.mxu0 0
      %1438 = vmatpush1.bf16.msra.mxu0 0
      %1439 = vmatprep.subr.bf16.mxu0 0
      %1440 = vmatpush1.bf16.msra.mxu0 0
      %1441 = vmatprep.subr.bf16.mxu0 0
      %1442 = vmatpush1.bf16.msra.mxu0 0
      %1443 = vmatprep.subr.bf16.mxu0 0
      %1444 = vmatpush1.bf16.msra.mxu0 0
      %1445 = vmatprep.subr.bf16.mxu0 0
      %1446 = vmatpush1.bf16.msra.mxu0 0
      %1447 = vmatprep.subr.bf16.mxu0 0
      %1448 = vmatpush1.bf16.msra.mxu0 0
      %1449 = vmatprep.subr.bf16.mxu0 0
      %1450 = vmatpush1.bf16.msra.mxu0 0
      %1451 = vmatprep.subr.bf16.mxu0 0
      %1452 = vmatpush1.bf16.msra.mxu0 0
      %1453 = vmatprep.subr.bf16.mxu0 0
      %1454 = vmatpush1.bf16.msra.mxu0 0
      %1455 = vmatprep.subr.bf16.mxu0 0
      %1456 = vmatpush1.bf16.msra.mxu0 0
      %1457 = vmatprep.mubr.bf16.mxu0 0
      %1458 = vmatmul.mubr.bf16.gmra.mrb[0].mxu0 %v374
      %v1459 = vpop.f32.mrb[0].mxu0
      %v1460 = vadd.f32 0.0, %v1459
      %v1461 = vpop.f32.mrb[0].mxu0
      %v1462 = vpop.f32.mrb[0].mxu0
      %v1463 = vadd.f32 0.0, %v1462
      %v1464 = vpop.f32.mrb[0].mxu0
      %1465 = vdwg.mxu0
      %v1466 = vpack.c.bf16 %v1339, %v1338
      %1467 = vmatprep.subr.bf16.mxu0 0
      %1468 = vmatpush1.bf16.msra.mxu0 %v1466
      %1469 = vmatprep.subr.bf16.mxu0 0
      %1470 = vmatpush1.bf16.msra.mxu0 0
      %1471 = vmatprep.subr.bf16.mxu0 0
      %1472 = vmatpush1.bf16.msra.mxu0 0
      %1473 = vmatprep.subr.bf16.mxu0 0
      %1474 = vmatpush1.bf16.msra.mxu0 0
      %1475 = vmatprep.subr.bf16.mxu0 0
      %1476 = vmatpush1.bf16.msra.mxu0 0
      %1477 = vmatprep.subr.bf16.mxu0 0
      %1478 = vmatpush1.bf16.msra.mxu0 0
      %1479 = vmatprep.subr.bf16.mxu0 0
      %1480 = vmatpush1.bf16.msra.mxu0 0
      %1481 = vmatprep.subr.bf16.mxu0 0
      %1482 = vmatpush1.bf16.msra.mxu0 0
      %1483 = vmatprep.subr.bf16.mxu0 0
      %1484 = vmatpush1.bf16.msra.mxu0 0
      %1485 = vmatprep.subr.bf16.mxu0 0
      %1486 = vmatpush1.bf16.msra.mxu0 0
      %1487 = vmatprep.subr.bf16.mxu0 0
      %1488 = vmatpush1.bf16.msra.mxu0 0
      %1489 = vmatprep.subr.bf16.mxu0 0
      %1490 = vmatpush1.bf16.msra.mxu0 0
      %1491 = vmatprep.subr.bf16.mxu0 0
      %1492 = vmatpush1.bf16.msra.mxu0 0
      %1493 = vmatprep.subr.bf16.mxu0 0
      %1494 = vmatpush1.bf16.msra.mxu0 0
      %1495 = vmatprep.subr.bf16.mxu0 0
      %1496 = vmatpush1.bf16.msra.mxu0 0
      %1497 = vmatprep.subr.bf16.mxu0 0
      %1498 = vmatpush1.bf16.msra.mxu0 0
      %1499 = vmatprep.mubr.bf16.mxu0 0
      %1500 = vmatmul.mubr.bf16.gmra.mrb[0].mxu0 %v374
      %v1501 = vpop.f32.mrb[0].mxu0
      %v1502 = vadd.f32 0.0, %v1501
      %v1503 = vpop.f32.mrb[0].mxu0
      %v1504 = vpop.f32.mrb[0].mxu0
      %v1505 = vadd.f32 0.0, %v1504
      %v1506 = vpop.f32.mrb[0].mxu0
      %1507 = vdwg.mxu0
      %v1508 = vpack.c.bf16 %v1379, %v1376
      %v1509 = vpack.c.bf16 %v1421, %v1418
      %v1510 = vpack.c.bf16 %v1463, %v1460
      %v1511 = vpack.c.bf16 %v1505, %v1502
      %s1512 = scalar_lea.vmem %s3, 48
      %v1513 = vld [vmem:[%s1512] sm:$0xf]
      %v1514 = vld [vmem:[%s1512 + $0x4] sm:$0xf]
      %v1515 = vld [vmem:[%s1512 + $0x8] sm:$0xf]
      %v1516 = vld [vmem:[%s1512 + $0xc] sm:$0xf]
      %s1517 = scalar_lea.vmem %s4, 3
      %v1518 = vld [vmem:[%s1517] sm:$0x1]
      %v1520 = vlaneseq
      %v1521 = vshrl.u32 %v1520, 7
      %v1522 = vsub.s32 0, %v1521
      %v1523 = vrot.slane %v1518, %v1522
      %v1529 = vunpack.c.l.b16 %v1513
      %v1530 = vunpack.c.l.b16 %v1514
      %v1531 = vunpack.c.l.b16 %v1515
      %v1532 = vunpack.c.l.b16 %v1516
      %v1533 = vpack.c.b16 %v1530, %v1529
      %v1534 = vpack.c.b16 %v1532, %v1531
      %v1538 = vsel %vm570, %v1508, 0
      %v1541 = vsel %vm570, %v1509, 0
      %v1544 = vsel %vm570, %v1510, 0
      %v1547 = vsel %vm570, %v1511, 0
      %1549 = vmatprep.subr.bf16.mxu0 0
      %1550 = vmatpush1.bf16.msra.mxu0 %v1533
      %1551 = vmatprep.subr.bf16.mxu0 0
      %1552 = vmatpush1.bf16.msra.mxu0 %v1534
      %1553 = vmatprep.subr.bf16.mxu0 0
      %1554 = vmatpush1.bf16.msra.mxu0 0
      %1555 = vmatprep.subr.bf16.mxu0 0
      %1556 = vmatpush1.bf16.msra.mxu0 0
      %1557 = vmatprep.subr.bf16.mxu0 0
      %1558 = vmatpush1.bf16.msra.mxu0 0
      %1559 = vmatprep.subr.bf16.mxu0 0
      %1560 = vmatpush1.bf16.msra.mxu0 0
      %1561 = vmatprep.subr.bf16.mxu0 0
      %1562 = vmatpush1.bf16.msra.mxu0 0
      %1563 = vmatprep.subr.bf16.mxu0 0
      %1564 = vmatpush1.bf16.msra.mxu0 0
      %1565 = vmatprep.subr.bf16.mxu0 0
      %1566 = vmatpush1.bf16.msra.mxu0 0
      %1567 = vmatprep.subr.bf16.mxu0 0
      %1568 = vmatpush1.bf16.msra.mxu0 0
      %1569 = vmatprep.subr.bf16.mxu0 0
      %1570 = vmatpush1.bf16.msra.mxu0 0
      %1571 = vmatprep.subr.bf16.mxu0 0
      %1572 = vmatpush1.bf16.msra.mxu0 0
      %1573 = vmatprep.subr.bf16.mxu0 0
      %1574 = vmatpush1.bf16.msra.mxu0 0
      %1575 = vmatprep.subr.bf16.mxu0 0
      %1576 = vmatpush1.bf16.msra.mxu0 0
      %1577 = vmatprep.subr.bf16.mxu0 0
      %1578 = vmatpush1.bf16.msra.mxu0 0
      %1579 = vmatprep.subr.bf16.mxu0 0
      %1580 = vmatpush1.bf16.msra.mxu0 0
      %1581 = vmatprep.mubr.bf16.mxu0 0
      %1582 = vmatmul.mubr.bf16.gmra.mrb[0].mxu0 %v1538
      %v1583 = vpop.f32.mrb[0].mxu0
      %v1584 = vadd.f32 %v1523, %v1583
      %v1585 = vpop.f32.mrb[0].mxu0
      %v1586 = vpop.f32.mrb[0].mxu0
      %v1587 = vadd.f32 %v1523, %v1586
      %v1588 = vpop.f32.mrb[0].mxu0
      %1589 = vmatprep.mubr.bf16.mxu0 0
      %1590 = vmatmul.mubr.bf16.gmra.mrb[0].mxu0 %v1541
      %v1591 = vpop.f32.mrb[0].mxu0
      %v1592 = vadd.f32 %v1523, %v1591
      %v1593 = vpop.f32.mrb[0].mxu0
      %v1594 = vpop.f32.mrb[0].mxu0
      %v1595 = vadd.f32 %v1523, %v1594
      %v1596 = vpop.f32.mrb[0].mxu0
      %1597 = vmatprep.mubr.bf16.mxu0 0
      %1598 = vmatmul.mubr.bf16.gmra.mrb[0].mxu0 %v1544
      %v1599 = vpop.f32.mrb[0].mxu0
      %v1600 = vadd.f32 %v1523, %v1599
      %v1601 = vpop.f32.mrb[0].mxu0
      %v1602 = vpop.f32.mrb[0].mxu0
      %v1603 = vadd.f32 %v1523, %v1602
      %v1604 = vpop.f32.mrb[0].mxu0
      %1605 = vmatprep.mubr.bf16.mxu0 0
      %1606 = vmatmul.mubr.bf16.gmra.mrb[0].mxu0 %v1547
      %v1607 = vpop.f32.mrb[0].mxu0
      %v1608 = vadd.f32 %v1523, %v1607
      %v1609 = vpop.f32.mrb[0].mxu0
      %v1610 = vpop.f32.mrb[0].mxu0
      %v1611 = vadd.f32 %v1523, %v1610
      %v1612 = vpop.f32.mrb[0].mxu0
      %1613 = vdwg.mxu0
      %v1614 = vmax.f32 %v1584, 0.0
      %v1615 = vmax.f32 %v1587, 0.0
      %v1616 = vmax.f32 %v1592, 0.0
      %v1617 = vmax.f32 %v1595, 0.0
      %v1618 = vmax.f32 %v1600, 0.0
      %v1619 = vmax.f32 %v1603, 0.0
      %v1620 = vmax.f32 %v1608, 0.0
      %v1621 = vmax.f32 %v1611, 0.0
      %v1622 = vpack.c.bf16 %v1615, %v1614
      %v1623 = vpack.c.bf16 %v1617, %v1616
      %v1624 = vpack.c.bf16 %v1619, %v1618
      %v1625 = vpack.c.bf16 %v1621, %v1620
      %s1626 = scalar_lea.vmem %s5, 16
      %v1627 = vld [vmem:[%s1626] sm:$0xf]
      %v1628 = vld [vmem:[%s1626 + $0x4] sm:$0xf]
      %v1629 = vld [vmem:[%s1626 + $0x8] sm:$0xf]
      %v1630 = vld [vmem:[%s1626 + $0xc] sm:$0xf]
      %s1631 = scalar_lea.vmem %s6, 1
      %v1632 = vld [vmem:[%s1631] sm:$0x1]
      %v1634 = vlaneseq
      %v1635 = vshrl.u32 %v1634, 7
      %v1636 = vsub.s32 0, %v1635
      %v1637 = vrot.slane %v1632, %v1636
      %v1643 = vunpack.c.l.b16 %v1627
      %v1644 = vunpack.c.l.b16 %v1628
      %v1645 = vunpack.c.l.b16 %v1629
      %v1646 = vunpack.c.l.b16 %v1630
      %v1647 = vpack.c.b16 %v1644, %v1643
      %v1648 = vpack.c.b16 %v1646, %v1645
      %v1652 = vsel %vm570, %v1622, 0
      %v1655 = vsel %vm570, %v1623, 0
      %v1658 = vsel %vm570, %v1624, 0
      %v1661 = vsel %vm570, %v1625, 0
      %1663 = vmatprep.subr.bf16.mxu0 0
      %1664 = vmatpush1.bf16.msra.mxu0 %v1647
      %1665 = vmatprep.subr.bf16.mxu0 0
      %1666 = vmatpush1.bf16.msra.mxu0 %v1648
      %1667 = vmatprep.subr.bf16.mxu0 0
      %1668 = vmatpush1.bf16.msra.mxu0 0
      %1669 = vmatprep.subr.bf16.mxu0 0
      %1670 = vmatpush1.bf16.msra.mxu0 0
      %1671 = vmatprep.subr.bf16.mxu0 0
      %1672 = vmatpush1.bf16.msra.mxu0 0
      %1673 = vmatprep.subr.bf16.mxu0 0
      %1674 = vmatpush1.bf16.msra.mxu0 0
      %1675 = vmatprep.subr.bf16.mxu0 0
      %1676 = vmatpush1.bf16.msra.mxu0 0
      %1677 = vmatprep.subr.bf16.mxu0 0
      %1678 = vmatpush1.bf16.msra.mxu0 0
      %1679 = vmatprep.subr.bf16.mxu0 0
      %1680 = vmatpush1.bf16.msra.mxu0 0
      %1681 = vmatprep.subr.bf16.mxu0 0
      %1682 = vmatpush1.bf16.msra.mxu0 0
      %1683 = vmatprep.subr.bf16.mxu0 0
      %1684 = vmatpush1.bf16.msra.mxu0 0
      %1685 = vmatprep.subr.bf16.mxu0 0
      %1686 = vmatpush1.bf16.msra.mxu0 0
      %1687 = vmatprep.subr.bf16.mxu0 0
      %1688 = vmatpush1.bf16.msra.mxu0 0
      %1689 = vmatprep.subr.bf16.mxu0 0
      %1690 = vmatpush1.bf16.msra.mxu0 0
      %1691 = vmatprep.subr.bf16.mxu0 0
      %1692 = vmatpush1.bf16.msra.mxu0 0
      %1693 = vmatprep.subr.bf16.mxu0 0
      %1694 = vmatpush1.bf16.msra.mxu0 0
      %1695 = vmatprep.mubr.bf16.mxu0 0
      %1696 = vmatmul.mubr.bf16.gmra.mrb[0].mxu0 %v1652
      %v1697 = vpop.f32.mrb[0].mxu0
      %v1698 = vadd.f32 %v1637, %v1697
      %v1699 = vpop.f32.mrb[0].mxu0
      %v1700 = vpop.f32.mrb[0].mxu0
      %v1701 = vadd.f32 %v1637, %v1700
      %v1702 = vpop.f32.mrb[0].mxu0
      %1703 = vmatprep.mubr.bf16.mxu0 0
      %1704 = vmatmul.mubr.bf16.gmra.mrb[0].mxu0 %v1655
      %v1705 = vpop.f32.mrb[0].mxu0
      %v1706 = vadd.f32 %v1637, %v1705
      %v1707 = vpop.f32.mrb[0].mxu0
      %v1708 = vpop.f32.mrb[0].mxu0
      %v1709 = vadd.f32 %v1637, %v1708
      %v1710 = vpop.f32.mrb[0].mxu0
      %1711 = vmatprep.mubr.bf16.mxu0 0
      %1712 = vmatmul.mubr.bf16.gmra.mrb[0].mxu0 %v1658
      %v1713 = vpop.f32.mrb[0].mxu0
      %v1714 = vadd.f32 %v1637, %v1713
      %v1715 = vpop.f32.mrb[0].mxu0
      %v1716 = vpop.f32.mrb[0].mxu0
      %v1717 = vadd.f32 %v1637, %v1716
      %v1718 = vpop.f32.mrb[0].mxu0
      %1719 = vmatprep.mubr.bf16.mxu0 0
      %1720 = vmatmul.mubr.bf16.gmra.mrb[0].mxu0 %v1661
      %v1721 = vpop.f32.mrb[0].mxu0
      %v1722 = vadd.f32 %v1637, %v1721
      %v1723 = vpop.f32.mrb[0].mxu0
      %v1724 = vpop.f32.mrb[0].mxu0
      %v1725 = vadd.f32 %v1637, %v1724
      %v1726 = vpop.f32.mrb[0].mxu0
      %1727 = vdwg.mxu0
      %v1728 = vadd.f32 %v1050, %v1698
      %v1729 = vadd.f32 %v1051, %v1701
      %v1730 = vadd.f32 %v1052, %v1706
      %v1731 = vadd.f32 %v1053, %v1709
      %v1732 = vadd.f32 %v1054, %v1714
      %v1733 = vadd.f32 %v1055, %v1717
      %v1734 = vadd.f32 %v1056, %v1722
      %v1735 = vadd.f32 %v1057, %v1725
      %v1736 = vadd.f32 %v356, %v1728
      %v1737 = vadd.f32 %v357, %v1729
      %s1738 = scalar_lea.vmem %s351, 48
      %1739 = vst.msk [vmem:[%s1738] sm:$0xff] %vm570, %v1736
      %1740 = vst.msk [vmem:[%s1738 + $0x8] sm:$0xff] %vm570, %v1737
      %v1741 = vadd.f32 %v356, %v1730
      %v1742 = vadd.f32 %v357, %v1731
      %s1743 = scalar_lea.vmem %s351, 32
      %1744 = vst.msk [vmem:[%s1743] sm:$0xff] %vm570, %v1741
      %1745 = vst.msk [vmem:[%s1743 + $0x8] sm:$0xff] %vm570, %v1742
      %v1746 = vadd.f32 %v356, %v1732
      %v1747 = vadd.f32 %v357, %v1733
      %s1748 = scalar_lea.vmem %s351, 16
      %1749 = vst.msk [vmem:[%s1748] sm:$0xff] %vm570, %v1746
      %1750 = vst.msk [vmem:[%s1748 + $0x8] sm:$0xff] %vm570, %v1747
      %v1751 = vadd.f32 %v356, %v1734
      %v1752 = vadd.f32 %v357, %v1735
      %1753 = vst.msk [vmem:[%s351] sm:$0xff] %vm570, %v1751
      %1754 = vst.msk [vmem:[%s351 + $0x8] sm:$0xff] %vm570, %v1752
      %s1755 = smul.u32 4, %s23
      %p1756 = scmp.lt.s32.totalorder %s22, 1
      %s1757 = scalar_select %p1756, %s22, 1
      %p1758 = scmp.lt.s32.totalorder %s1755, 3
      %s1759 = scalar_select %p1758, %s1755, 3
      %s1760 = smul.addr %s1759, 2
      %s1761 = smul.addr %s1757, 8
      %s1762 = sadd.s32 %s1760, %s1761
      %s1763 = smul.addr %s1762, 8
      %s1764 = scalar_lea.vmem %s7, %s1763
      // Predicated region
      $region49: #{graph_nbeats_forward.6} parent=47 // pred_check
        %p1765 = pneg %p211
      $region50: #{graph_nbeats_forward.6} parent=47 // pred_check_branch
        %1767 = sbr.rel (%p1765) target = $region52
      $region51: #{graph_nbeats_forward.6} parent=47 // pred_region
        %s1768 = smul.u32 4, %s23
      $region52: #{graph_nbeats_forward.6} parent=47 // pred_fallthru
        _
    $region48: #{graph_nbeats_forward.6} parent=5 // pred_fallthru
      _
    %p1769 = scmp.le.s32.totalorder 2, %s13
    // Predicated region
    $region53: #{graph_nbeats_forward.6} parent=5 // pred_check
      %p1770 = pneg %p1769
    $region54: #{graph_nbeats_forward.6} parent=5 // pred_check_branch
      %1772 = sbr.rel (%p1770) target = $region56
    $region55: #{graph_nbeats_forward.6} parent=5 // pred_region
      %s1773 = ssub.s32 %s13, 2
      // Predicated region
      $region57: #{graph_nbeats_forward.6} parent=55 // pred_check
        %p1774 = pneg %p217
      $region58: #{graph_nbeats_forward.6} parent=55 // pred_check_branch
        %1776 = sbr.rel (%p1774) target = $region60
      $region59: #{graph_nbeats_forward.6} parent=55 // pred_region
        %s1777 = smul.u32 4, %s25
        %p1778 = scmp.lt.s32.totalorder %s24, 1
        %s1779 = scalar_select %p1778, %s24, 1
        %p1780 = scmp.lt.s32.totalorder %s1777, 3
        %s1781 = scalar_select %p1780, %s1777, 3
        %s1782 = smul.addr %s1781, 2
        %s1783 = smul.addr %s1779, 8
        %s1784 = sadd.s32 %s1782, %s1783
        %s1785 = smul.addr %s1784, 8
        %s1786 = scalar_lea.vmem %s7, %s1785
      $region60: #{graph_nbeats_forward.6} parent=55 // pred_fallthru
        _
    $region56: #{graph_nbeats_forward.6} parent=5 // pred_fallthru
      _
  $region6: #{graph_nbeats_forward.6} parent=0 // loop_footer
    %s17 = sadd.s32 1, %s13
  $region7: #{graph_nbeats_forward.6} parent=0 // loop_footer_branch
    %12 = sbr.rel target = $region3
  $region8: #{graph_nbeats_forward.6} parent=0 // loop_exit
    _

// kernel: graph_nbeats_forward.7
$region0: #{graph_nbeats_forward.7}
  #allocation0 [shape = 'u32[]', space=smem, size = 0x4, offset = 0x4, fixed_abs, tag = 'smem constant byte address 0x4 - core index']
  #allocation1 [shape = 'u32[144,128]{1,0:T(1,128)}', space=vmem, size = 0x12000, scoped, tag = 'internal scratch']
  %s0 = inlined_call_operand.vmem [shape: f32[32,128], index: 0, kind: input, shape index: {}]
  %s1 = inlined_call_operand.vmem [shape: bf16[128,64], index: 1, kind: input, shape index: {}]
  %s2 = inlined_call_operand.vmem [shape: f32[1,64], index: 2, kind: input, shape index: {}]
  %s3 = inlined_call_operand.vmem [shape: bf16[64,64], index: 3, kind: input, shape index: {}]
  %s4 = inlined_call_operand.vmem [shape: f32[1,64], index: 4, kind: input, shape index: {}]
  %s5 = inlined_call_operand.vmem [shape: bf16[64,64], index: 5, kind: input, shape index: {}]
  %s6 = inlined_call_operand.vmem [shape: f32[1,64], index: 6, kind: input, shape index: {}]
  %s7 = inlined_call_operand.vmem [shape: bf16[64,64], index: 7, kind: input, shape index: {}]
  %s8 = inlined_call_operand.vmem [shape: f32[1,64], index: 8, kind: input, shape index: {}]
  %s9 = inlined_call_operand.vmem [shape: bf16[64,64], index: 9, kind: input, shape index: {}]
  %s10 = inlined_call_operand.vmem [shape: f32[1,64], index: 10, kind: input, shape index: {}]
  %s11 = inlined_call_operand.vmem [shape: bf16[64,128], index: 11, kind: input, shape index: {}]
  %s12 = inlined_call_operand.vmem [shape: f32[1,128], index: 12, kind: input, shape index: {}]
  %s13 = inlined_call_operand.vmem [shape: f32[32,128], index: 13, kind: output, shape index: {}]
  %s14 = sld [smem:[#allocation0]]
  $region62: #{graph_nbeats_forward.7} parent=0
    _
  %s16 = ssub.s32 1, %s14
  %s17 = scalar_select 0, %s16, %s14
  // Predicated region
  $region2: #{graph_nbeats_forward.7} parent=0 // pred_check
    _
  $region3: #{graph_nbeats_forward.7} parent=0 // pred_check_branch
    %19 = sbr.rel (0) target = $region5
  $region4: #{graph_nbeats_forward.7} parent=0 // pred_region
    _
  $region5: #{graph_nbeats_forward.7} parent=0 // pred_fallthru
    _
  // Predicated region
  $region6: #{graph_nbeats_forward.7} parent=0 // pred_check
    _
  $region7: #{graph_nbeats_forward.7} parent=0 // pred_check_branch
    %21 = sbr.rel (0) target = $region9
  $region8: #{graph_nbeats_forward.7} parent=0 // pred_region
    _
  $region9: #{graph_nbeats_forward.7} parent=0 // pred_fallthru
    _
  // Predicated region
  $region10: #{graph_nbeats_forward.7} parent=0 // pred_check
    _
  $region11: #{graph_nbeats_forward.7} parent=0 // pred_check_branch
    %23 = sbr.rel (0) target = $region13
  $region12: #{graph_nbeats_forward.7} parent=0 // pred_region
    _
  $region13: #{graph_nbeats_forward.7} parent=0 // pred_fallthru
    _
  // Predicated region
  $region14: #{graph_nbeats_forward.7} parent=0 // pred_check
    _
  $region15: #{graph_nbeats_forward.7} parent=0 // pred_check_branch
    %25 = sbr.rel (0) target = $region17
  $region16: #{graph_nbeats_forward.7} parent=0 // pred_region
    _
  $region17: #{graph_nbeats_forward.7} parent=0 // pred_fallthru
    _
  // Predicated region
  $region18: #{graph_nbeats_forward.7} parent=0 // pred_check
    _
  $region19: #{graph_nbeats_forward.7} parent=0 // pred_check_branch
    %27 = sbr.rel (0) target = $region21
  $region20: #{graph_nbeats_forward.7} parent=0 // pred_region
    _
  $region21: #{graph_nbeats_forward.7} parent=0 // pred_fallthru
    _
  // Predicated region
  $region22: #{graph_nbeats_forward.7} parent=0 // pred_check
    _
  $region23: #{graph_nbeats_forward.7} parent=0 // pred_check_branch
    %29 = sbr.rel (0) target = $region25
  $region24: #{graph_nbeats_forward.7} parent=0 // pred_region
    _
  $region25: #{graph_nbeats_forward.7} parent=0 // pred_fallthru
    _
  // Predicated region
  $region26: #{graph_nbeats_forward.7} parent=0 // pred_check
    _
  $region27: #{graph_nbeats_forward.7} parent=0 // pred_check_branch
    %31 = sbr.rel (0) target = $region29
  $region28: #{graph_nbeats_forward.7} parent=0 // pred_region
    _
  $region29: #{graph_nbeats_forward.7} parent=0 // pred_fallthru
    _
  // Predicated region
  $region30: #{graph_nbeats_forward.7} parent=0 // pred_check
    _
  $region31: #{graph_nbeats_forward.7} parent=0 // pred_check_branch
    %33 = sbr.rel (0) target = $region33
  $region32: #{graph_nbeats_forward.7} parent=0 // pred_region
    _
  $region33: #{graph_nbeats_forward.7} parent=0 // pred_fallthru
    _
  // Predicated region
  $region34: #{graph_nbeats_forward.7} parent=0 // pred_check
    _
  $region35: #{graph_nbeats_forward.7} parent=0 // pred_check_branch
    %35 = sbr.rel (0) target = $region37
  $region36: #{graph_nbeats_forward.7} parent=0 // pred_region
    _
  $region37: #{graph_nbeats_forward.7} parent=0 // pred_fallthru
    _
  // Predicated region
  $region38: #{graph_nbeats_forward.7} parent=0 // pred_check
    _
  $region39: #{graph_nbeats_forward.7} parent=0 // pred_check_branch
    %37 = sbr.rel (0) target = $region41
  $region40: #{graph_nbeats_forward.7} parent=0 // pred_region
    _
  $region41: #{graph_nbeats_forward.7} parent=0 // pred_fallthru
    _
  // Predicated region
  $region42: #{graph_nbeats_forward.7} parent=0 // pred_check
    _
  $region43: #{graph_nbeats_forward.7} parent=0 // pred_check_branch
    %39 = sbr.rel (0) target = $region45
  $region44: #{graph_nbeats_forward.7} parent=0 // pred_region
    _
  $region45: #{graph_nbeats_forward.7} parent=0 // pred_fallthru
    _
  // Predicated region
  $region46: #{graph_nbeats_forward.7} parent=0 // pred_check
    _
  $region47: #{graph_nbeats_forward.7} parent=0 // pred_check_branch
    %41 = sbr.rel (0) target = $region49
  $region48: #{graph_nbeats_forward.7} parent=0 // pred_region
    _
  $region49: #{graph_nbeats_forward.7} parent=0 // pred_fallthru
    _
  // Predicated region
  $region50: #{graph_nbeats_forward.7} parent=0 // pred_check
    _
  $region51: #{graph_nbeats_forward.7} parent=0 // pred_check_branch
    %43 = sbr.rel (0) target = $region53
  $region52: #{graph_nbeats_forward.7} parent=0 // pred_region
    _
  $region53: #{graph_nbeats_forward.7} parent=0 // pred_fallthru
    _
  %v45 = vld [vmem:[%s0] sm:$0xff]
  %v46 = vld [vmem:[%s0 + $0x8] sm:$0xff]
  %v47 = vld [vmem:[%s0 + $0x10] sm:$0xff]
  %v48 = vld [vmem:[%s0 + $0x18] sm:$0xff]
  %v49 = vpack.c.bf16 %v46, %v45
  %v50 = vpack.c.bf16 %v48, %v47
  %v51 = vld [vmem:[%s1] sm:$0xf]
  %v52 = vld [vmem:[%s1 + $0x4] sm:$0xf]
  %v53 = vld [vmem:[%s1 + $0x8] sm:$0xf]
  %v54 = vld [vmem:[%s1 + $0xc] sm:$0xf]
  %v55 = vld [vmem:[%s1 + $0x10] sm:$0xf]
  %v56 = vld [vmem:[%s1 + $0x14] sm:$0xf]
  %v57 = vld [vmem:[%s1 + $0x18] sm:$0xf]
  %v58 = vld [vmem:[%s1 + $0x1c] sm:$0xf]
  %v59 = vld [vmem:[%s1 + $0x20] sm:$0xf]
  %v60 = vld [vmem:[%s1 + $0x24] sm:$0xf]
  %v61 = vld [vmem:[%s1 + $0x28] sm:$0xf]
  %v62 = vld [vmem:[%s1 + $0x2c] sm:$0xf]
  %v63 = vld [vmem:[%s1 + $0x30] sm:$0xf]
  %v64 = vld [vmem:[%s1 + $0x34] sm:$0xf]
  %v65 = vld [vmem:[%s1 + $0x38] sm:$0xf]
  %v66 = vld [vmem:[%s1 + $0x3c] sm:$0xf]
  %v67 = vld [vmem:[%s2] sm:$0x1]
  %v69 = vlaneseq
  %v70 = vshrl.u32 %v69, 7
  %v71 = vsub.s32 0, %v70
  %v72 = vrot.slane %v67, %v71
  %v90 = vunpack.c.l.b16 %v51
  %v91 = vunpack.c.l.b16 %v52
  %v92 = vunpack.c.l.b16 %v53
  %v93 = vunpack.c.l.b16 %v54
  %v94 = vunpack.c.l.b16 %v55
  %v95 = vunpack.c.l.b16 %v56
  %v96 = vunpack.c.l.b16 %v57
  %v97 = vunpack.c.l.b16 %v58
  %v98 = vunpack.c.l.b16 %v59
  %v99 = vunpack.c.l.b16 %v60
  %v100 = vunpack.c.l.b16 %v61
  %v101 = vunpack.c.l.b16 %v62
  %v102 = vunpack.c.l.b16 %v63
  %v103 = vunpack.c.l.b16 %v64
  %v104 = vunpack.c.l.b16 %v65
  %v105 = vunpack.c.l.b16 %v66
  %v106 = vpack.c.b16 %v91, %v90
  %v107 = vpack.c.b16 %v93, %v92
  %v108 = vpack.c.b16 %v95, %v94
  %v109 = vpack.c.b16 %v97, %v96
  %v110 = vpack.c.b16 %v99, %v98
  %v111 = vpack.c.b16 %v101, %v100
  %v112 = vpack.c.b16 %v103, %v102
  %v113 = vpack.c.b16 %v105, %v104
  %122 = vmatprep.subr.bf16.mxu0 0
  %123 = vmatpush1.bf16.msra.mxu0 %v106
  %124 = vmatprep.subr.bf16.mxu0 0
  %125 = vmatpush1.bf16.msra.mxu0 %v107
  %126 = vmatprep.subr.bf16.mxu0 0
  %127 = vmatpush1.bf16.msra.mxu0 %v108
  %128 = vmatprep.subr.bf16.mxu0 0
  %129 = vmatpush1.bf16.msra.mxu0 %v109
  %130 = vmatprep.subr.bf16.mxu0 0
  %131 = vmatpush1.bf16.msra.mxu0 %v110
  %132 = vmatprep.subr.bf16.mxu0 0
  %133 = vmatpush1.bf16.msra.mxu0 %v111
  %134 = vmatprep.subr.bf16.mxu0 0
  %135 = vmatpush1.bf16.msra.mxu0 %v112
  %136 = vmatprep.subr.bf16.mxu0 0
  %137 = vmatpush1.bf16.msra.mxu0 %v113
  %138 = vmatprep.subr.bf16.mxu0 0
  %139 = vmatpush1.bf16.msra.mxu0 0
  %140 = vmatprep.subr.bf16.mxu0 0
  %141 = vmatpush1.bf16.msra.mxu0 0
  %142 = vmatprep.subr.bf16.mxu0 0
  %143 = vmatpush1.bf16.msra.mxu0 0
  %144 = vmatprep.subr.bf16.mxu0 0
  %145 = vmatpush1.bf16.msra.mxu0 0
  %146 = vmatprep.subr.bf16.mxu0 0
  %147 = vmatpush1.bf16.msra.mxu0 0
  %148 = vmatprep.subr.bf16.mxu0 0
  %149 = vmatpush1.bf16.msra.mxu0 0
  %150 = vmatprep.subr.bf16.mxu0 0
  %151 = vmatpush1.bf16.msra.mxu0 0
  %152 = vmatprep.subr.bf16.mxu0 0
  %153 = vmatpush1.bf16.msra.mxu0 0
  %154 = vmatprep.mubr.bf16.mxu0 0
  %155 = vmatmul.mubr.bf16.gmra.mrb[0].mxu0 %v49
  %v156 = vpop.f32.mrb[0].mxu0
  %v157 = vadd.f32 %v72, %v156
  %v158 = vpop.f32.mrb[0].mxu0
  %v159 = vpop.f32.mrb[0].mxu0
  %v160 = vadd.f32 %v72, %v159
  %v161 = vpop.f32.mrb[0].mxu0
  %162 = vmatprep.mubr.bf16.mxu0 0
  %163 = vmatmul.mubr.bf16.gmra.mrb[0].mxu0 %v50
  %v164 = vpop.f32.mrb[0].mxu0
  %v165 = vadd.f32 %v72, %v164
  %v166 = vpop.f32.mrb[0].mxu0
  %v167 = vpop.f32.mrb[0].mxu0
  %v168 = vadd.f32 %v72, %v167
  %v169 = vpop.f32.mrb[0].mxu0
  %170 = vdwg.mxu0
  %v171 = vmax.f32 %v157, 0.0
  %v172 = vmax.f32 %v160, 0.0
  %v173 = vmax.f32 %v165, 0.0
  %v174 = vmax.f32 %v168, 0.0
  %v175 = vpack.c.bf16 %v172, %v171
  %v176 = vpack.c.bf16 %v174, %v173
  %v177 = vld [vmem:[%s3] sm:$0xf]
  %v178 = vld [vmem:[%s3 + $0x4] sm:$0xf]
  %v179 = vld [vmem:[%s3 + $0x8] sm:$0xf]
  %v180 = vld [vmem:[%s3 + $0xc] sm:$0xf]
  %v181 = vld [vmem:[%s3 + $0x10] sm:$0xf]
  %v182 = vld [vmem:[%s3 + $0x14] sm:$0xf]
  %v183 = vld [vmem:[%s3 + $0x18] sm:$0xf]
  %v184 = vld [vmem:[%s3 + $0x1c] sm:$0xf]
  %v185 = vld [vmem:[%s4] sm:$0x1]
  %v187 = vlaneseq
  %v188 = vshrl.u32 %v187, 7
  %v189 = vsub.s32 0, %v188
  %v190 = vrot.slane %v185, %v189
  %v200 = vunpack.c.l.b16 %v177
  %v201 = vunpack.c.l.b16 %v178
  %v202 = vunpack.c.l.b16 %v179
  %v203 = vunpack.c.l.b16 %v180
  %v204 = vunpack.c.l.b16 %v181
  %v205 = vunpack.c.l.b16 %v182
  %v206 = vunpack.c.l.b16 %v183
  %v207 = vunpack.c.l.b16 %v184
  %v208 = vpack.c.b16 %v201, %v200
  %v209 = vpack.c.b16 %v203, %v202
  %v210 = vpack.c.b16 %v205, %v204
  %v211 = vpack.c.b16 %v207, %v206
  %vm216 = vcmask 523264
  %v218 = vsel %vm216, %v175, 0
  %v221 = vsel %vm216, %v176, 0
  %223 = vmatprep.subr.bf16.mxu0 0
  %224 = vmatpush1.bf16.msra.mxu0 %v208
  %225 = vmatprep.subr.bf16.mxu0 0
  %226 = vmatpush1.bf16.msra.mxu0 %v209
  %227 = vmatprep.subr.bf16.mxu0 0
  %228 = vmatpush1.bf16.msra.mxu0 %v210
  %229 = vmatprep.subr.bf16.mxu0 0
  %230 = vmatpush1.bf16.msra.mxu0 %v211
  %231 = vmatprep.subr.bf16.mxu0 0
  %232 = vmatpush1.bf16.msra.mxu0 0
  %233 = vmatprep.subr.bf16.mxu0 0
  %234 = vmatpush1.bf16.msra.mxu0 0
  %235 = vmatprep.subr.bf16.mxu0 0
  %236 = vmatpush1.bf16.msra.mxu0 0
  %237 = vmatprep.subr.bf16.mxu0 0
  %238 = vmatpush1.bf16.msra.mxu0 0
  %239 = vmatprep.subr.bf16.mxu0 0
  %240 = vmatpush1.bf16.msra.mxu0 0
  %241 = vmatprep.subr.bf16.mxu0 0
  %242 = vmatpush1.bf16.msra.mxu0 0
  %243 = vmatprep.subr.bf16.mxu0 0
  %244 = vmatpush1.bf16.msra.mxu0 0
  %245 = vmatprep.subr.bf16.mxu0 0
  %246 = vmatpush1.bf16.msra.mxu0 0
  %247 = vmatprep.subr.bf16.mxu0 0
  %248 = vmatpush1.bf16.msra.mxu0 0
  %249 = vmatprep.subr.bf16.mxu0 0
  %250 = vmatpush1.bf16.msra.mxu0 0
  %251 = vmatprep.subr.bf16.mxu0 0
  %252 = vmatpush1.bf16.msra.mxu0 0
  %253 = vmatprep.subr.bf16.mxu0 0
  %254 = vmatpush1.bf16.msra.mxu0 0
  %255 = vmatprep.mubr.bf16.mxu0 0
  %256 = vmatmul.mubr.bf16.gmra.mrb[0].mxu0 %v218
  %v257 = vpop.f32.mrb[0].mxu0
  %v258 = vadd.f32 %v190, %v257
  %v259 = vpop.f32.mrb[0].mxu0
  %v260 = vpop.f32.mrb[0].mxu0
  %v261 = vadd.f32 %v190, %v260
  %v262 = vpop.f32.mrb[0].mxu0
  %263 = vmatprep.mubr.bf16.mxu0 0
  %264 = vmatmul.mubr.bf16.gmra.mrb[0].mxu0 %v221
  %v265 = vpop.f32.mrb[0].mxu0
  %v266 = vadd.f32 %v190, %v265
  %v267 = vpop.f32.mrb[0].mxu0
  %v268 = vpop.f32.mrb[0].mxu0
  %v269 = vadd.f32 %v190, %v268
  %v270 = vpop.f32.mrb[0].mxu0
  %271 = vdwg.mxu0
  %v272 = vmax.f32 %v258, 0.0
  %v273 = vmax.f32 %v261, 0.0
  %v274 = vmax.f32 %v266, 0.0
  %v275 = vmax.f32 %v269, 0.0
  %v276 = vpack.c.bf16 %v273, %v272
  %v277 = vpack.c.bf16 %v275, %v274
  %v278 = vld [vmem:[%s5] sm:$0xf]
  %v279 = vld [vmem:[%s5 + $0x4] sm:$0xf]
  %v280 = vld [vmem:[%s5 + $0x8] sm:$0xf]
  %v281 = vld [vmem:[%s5 + $0xc] sm:$0xf]
  %v282 = vld [vmem:[%s5 + $0x10] sm:$0xf]
  %v283 = vld [vmem:[%s5 + $0x14] sm:$0xf]
  %v284 = vld [vmem:[%s5 + $0x18] sm:$0xf]
  %v285 = vld [vmem:[%s5 + $0x1c] sm:$0xf]
  %v286 = vld [vmem:[%s6] sm:$0x1]
  %v288 = vlaneseq
  %v289 = vshrl.u32 %v288, 7
  %v290 = vsub.s32 0, %v289
  %v291 = vrot.slane %v286, %v290
  %v301 = vunpack.c.l.b16 %v278
  %v302 = vunpack.c.l.b16 %v279
  %v303 = vunpack.c.l.b16 %v280
  %v304 = vunpack.c.l.b16 %v281
  %v305 = vunpack.c.l.b16 %v282
  %v306 = vunpack.c.l.b16 %v283
  %v307 = vunpack.c.l.b16 %v284
  %v308 = vunpack.c.l.b16 %v285
  %v309 = vpack.c.b16 %v302, %v301
  %v310 = vpack.c.b16 %v304, %v303
  %v311 = vpack.c.b16 %v306, %v305
  %v312 = vpack.c.b16 %v308, %v307
  %v318 = vsel %vm216, %v276, 0
  %v321 = vsel %vm216, %v277, 0
  %323 = vmatprep.subr.bf16.mxu0 0
  %324 = vmatpush1.bf16.msra.mxu0 %v309
  %325 = vmatprep.subr.bf16.mxu0 0
  %326 = vmatpush1.bf16.msra.mxu0 %v310
  %327 = vmatprep.subr.bf16.mxu0 0
  %328 = vmatpush1.bf16.msra.mxu0 %v311
  %329 = vmatprep.subr.bf16.mxu0 0
  %330 = vmatpush1.bf16.msra.mxu0 %v312
  %331 = vmatprep.subr.bf16.mxu0 0
  %332 = vmatpush1.bf16.msra.mxu0 0
  %333 = vmatprep.subr.bf16.mxu0 0
  %334 = vmatpush1.bf16.msra.mxu0 0
  %335 = vmatprep.subr.bf16.mxu0 0
  %336 = vmatpush1.bf16.msra.mxu0 0
  %337 = vmatprep.subr.bf16.mxu0 0
  %338 = vmatpush1.bf16.msra.mxu0 0
  %339 = vmatprep.subr.bf16.mxu0 0
  %340 = vmatpush1.bf16.msra.mxu0 0
  %341 = vmatprep.subr.bf16.mxu0 0
  %342 = vmatpush1.bf16.msra.mxu0 0
  %343 = vmatprep.subr.bf16.mxu0 0
  %344 = vmatpush1.bf16.msra.mxu0 0
  %345 = vmatprep.subr.bf16.mxu0 0
  %346 = vmatpush1.bf16.msra.mxu0 0
  %347 = vmatprep.subr.bf16.mxu0 0
  %348 = vmatpush1.bf16.msra.mxu0 0
  %349 = vmatprep.subr.bf16.mxu0 0
  %350 = vmatpush1.bf16.msra.mxu0 0
  %351 = vmatprep.subr.bf16.mxu0 0
  %352 = vmatpush1.bf16.msra.mxu0 0
  %353 = vmatprep.subr.bf16.mxu0 0
  %354 = vmatpush1.bf16.msra.mxu0 0
  %355 = vmatprep.mubr.bf16.mxu0 0
  %356 = vmatmul.mubr.bf16.gmra.mrb[0].mxu0 %v318
  %v357 = vpop.f32.mrb[0].mxu0
  %v358 = vadd.f32 %v291, %v357
  %v359 = vpop.f32.mrb[0].mxu0
  %v360 = vpop.f32.mrb[0].mxu0
  %v361 = vadd.f32 %v291, %v360
  %v362 = vpop.f32.mrb[0].mxu0
  %363 = vmatprep.mubr.bf16.mxu0 0
  %364 = vmatmul.mubr.bf16.gmra.mrb[0].mxu0 %v321
  %v365 = vpop.f32.mrb[0].mxu0
  %v366 = vadd.f32 %v291, %v365
  %v367 = vpop.f32.mrb[0].mxu0
  %v368 = vpop.f32.mrb[0].mxu0
  %v369 = vadd.f32 %v291, %v368
  %v370 = vpop.f32.mrb[0].mxu0
  %371 = vdwg.mxu0
  %v372 = vmax.f32 %v358, 0.0
  %v373 = vmax.f32 %v361, 0.0
  %v374 = vmax.f32 %v366, 0.0
  %v375 = vmax.f32 %v369, 0.0
  %v376 = vpack.c.bf16 %v373, %v372
  %v377 = vpack.c.bf16 %v375, %v374
  %v378 = vld [vmem:[%s7] sm:$0xf]
  %v379 = vld [vmem:[%s7 + $0x4] sm:$0xf]
  %v380 = vld [vmem:[%s7 + $0x8] sm:$0xf]
  %v381 = vld [vmem:[%s7 + $0xc] sm:$0xf]
  %v382 = vld [vmem:[%s7 + $0x10] sm:$0xf]
  %v383 = vld [vmem:[%s7 + $0x14] sm:$0xf]
  %v384 = vld [vmem:[%s7 + $0x18] sm:$0xf]
  %v385 = vld [vmem:[%s7 + $0x1c] sm:$0xf]
  %v386 = vld [vmem:[%s8] sm:$0x1]
  %v388 = vlaneseq
  %v389 = vshrl.u32 %v388, 7
  %v390 = vsub.s32 0, %v389
  %v391 = vrot.slane %v386, %v390
  %v401 = vunpack.c.l.b16 %v378
  %v402 = vunpack.c.l.b16 %v379
  %v403 = vunpack.c.l.b16 %v380
  %v404 = vunpack.c.l.b16 %v381
  %v405 = vunpack.c.l.b16 %v382
  %v406 = vunpack.c.l.b16 %v383
  %v407 = vunpack.c.l.b16 %v384
  %v408 = vunpack.c.l.b16 %v385
  %v409 = vpack.c.b16 %v402, %v401
  %v410 = vpack.c.b16 %v404, %v403
  %v411 = vpack.c.b16 %v406, %v405
  %v412 = vpack.c.b16 %v408, %v407
  %v418 = vsel %vm216, %v376, 0
  %v421 = vsel %vm216, %v377, 0
  %423 = vmatprep.subr.bf16.mxu0 0
  %424 = vmatpush1.bf16.msra.mxu0 %v409
  %425 = vmatprep.subr.bf16.mxu0 0
  %426 = vmatpush1.bf16.msra.mxu0 %v410
  %427 = vmatprep.subr.bf16.mxu0 0
  %428 = vmatpush1.bf16.msra.mxu0 %v411
  %429 = vmatprep.subr.bf16.mxu0 0
  %430 = vmatpush1.bf16.msra.mxu0 %v412
  %431 = vmatprep.subr.bf16.mxu0 0
  %432 = vmatpush1.bf16.msra.mxu0 0
  %433 = vmatprep.subr.bf16.mxu0 0
  %434 = vmatpush1.bf16.msra.mxu0 0
  %435 = vmatprep.subr.bf16.mxu0 0
  %436 = vmatpush1.bf16.msra.mxu0 0
  %437 = vmatprep.subr.bf16.mxu0 0
  %438 = vmatpush1.bf16.msra.mxu0 0
  %439 = vmatprep.subr.bf16.mxu0 0
  %440 = vmatpush1.bf16.msra.mxu0 0
  %441 = vmatprep.subr.bf16.mxu0 0
  %442 = vmatpush1.bf16.msra.mxu0 0
  %443 = vmatprep.subr.bf16.mxu0 0
  %444 = vmatpush1.bf16.msra.mxu0 0
  %445 = vmatprep.subr.bf16.mxu0 0
  %446 = vmatpush1.bf16.msra.mxu0 0
  %447 = vmatprep.subr.bf16.mxu0 0
  %448 = vmatpush1.bf16.msra.mxu0 0
  %449 = vmatprep.subr.bf16.mxu0 0
  %450 = vmatpush1.bf16.msra.mxu0 0
  %451 = vmatprep.subr.bf16.mxu0 0
  %452 = vmatpush1.bf16.msra.mxu0 0
  %453 = vmatprep.subr.bf16.mxu0 0
  %454 = vmatpush1.bf16.msra.mxu0 0
  %455 = vmatprep.mubr.bf16.mxu0 0
  %456 = vmatmul.mubr.bf16.gmra.mrb[0].mxu0 %v418
  %v457 = vpop.f32.mrb[0].mxu0
  %v458 = vadd.f32 %v391, %v457
  %v459 = vpop.f32.mrb[0].mxu0
  %v460 = vpop.f32.mrb[0].mxu0
  %v461 = vadd.f32 %v391, %v460
  %v462 = vpop.f32.mrb[0].mxu0
  %463 = vmatprep.mubr.bf16.mxu0 0
  %464 = vmatmul.mubr.bf16.gmra.mrb[0].mxu0 %v421
  %v465 = vpop.f32.mrb[0].mxu0
  %v466 = vadd.f32 %v391, %v465
  %v467 = vpop.f32.mrb[0].mxu0
  %v468 = vpop.f32.mrb[0].mxu0
  %v469 = vadd.f32 %v391, %v468
  %v470 = vpop.f32.mrb[0].mxu0
  %471 = vdwg.mxu0
  %v472 = vmax.f32 %v458, 0.0
  %v473 = vmax.f32 %v461, 0.0
  %v474 = vmax.f32 %v466, 0.0
  %v475 = vmax.f32 %v469, 0.0
  %v476 = vpack.c.bf16 %v473, %v472
  %v477 = vpack.c.bf16 %v475, %v474
  %v478 = vld [vmem:[%s9] sm:$0xf]
  %v479 = vld [vmem:[%s9 + $0x4] sm:$0xf]
  %v480 = vld [vmem:[%s9 + $0x8] sm:$0xf]
  %v481 = vld [vmem:[%s9 + $0xc] sm:$0xf]
  %v482 = vld [vmem:[%s9 + $0x10] sm:$0xf]
  %v483 = vld [vmem:[%s9 + $0x14] sm:$0xf]
  %v484 = vld [vmem:[%s9 + $0x18] sm:$0xf]
  %v485 = vld [vmem:[%s9 + $0x1c] sm:$0xf]
  %v486 = vld [vmem:[%s10] sm:$0x1]
  %v488 = vlaneseq
  %v489 = vshrl.u32 %v488, 7
  %v490 = vsub.s32 0, %v489
  %v491 = vrot.slane %v486, %v490
  %v501 = vunpack.c.l.b16 %v478
  %v502 = vunpack.c.l.b16 %v479
  %v503 = vunpack.c.l.b16 %v480
  %v504 = vunpack.c.l.b16 %v481
  %v505 = vunpack.c.l.b16 %v482
  %v506 = vunpack.c.l.b16 %v483
  %v507 = vunpack.c.l.b16 %v484
  %v508 = vunpack.c.l.b16 %v485
  %v509 = vpack.c.b16 %v502, %v501
  %v510 = vpack.c.b16 %v504, %v503
  %v511 = vpack.c.b16 %v506, %v505
  %v512 = vpack.c.b16 %v508, %v507
  %v518 = vsel %vm216, %v476, 0
  %v521 = vsel %vm216, %v477, 0
  %523 = vmatprep.subr.bf16.mxu0 0
  %524 = vmatpush1.bf16.msra.mxu0 %v509
  %525 = vmatprep.subr.bf16.mxu0 0
  %526 = vmatpush1.bf16.msra.mxu0 %v510
  %527 = vmatprep.subr.bf16.mxu0 0
  %528 = vmatpush1.bf16.msra.mxu0 %v511
  %529 = vmatprep.subr.bf16.mxu0 0
  %530 = vmatpush1.bf16.msra.mxu0 %v512
  %531 = vmatprep.subr.bf16.mxu0 0
  %532 = vmatpush1.bf16.msra.mxu0 0
  %533 = vmatprep.subr.bf16.mxu0 0
  %534 = vmatpush1.bf16.msra.mxu0 0
  %535 = vmatprep.subr.bf16.mxu0 0
  %536 = vmatpush1.bf16.msra.mxu0 0
  %537 = vmatprep.subr.bf16.mxu0 0
  %538 = vmatpush1.bf16.msra.mxu0 0
  %539 = vmatprep.subr.bf16.mxu0 0
  %540 = vmatpush1.bf16.msra.mxu0 0
  %541 = vmatprep.subr.bf16.mxu0 0
  %542 = vmatpush1.bf16.msra.mxu0 0
  %543 = vmatprep.subr.bf16.mxu0 0
  %544 = vmatpush1.bf16.msra.mxu0 0
  %545 = vmatprep.subr.bf16.mxu0 0
  %546 = vmatpush1.bf16.msra.mxu0 0
  %547 = vmatprep.subr.bf16.mxu0 0
  %548 = vmatpush1.bf16.msra.mxu0 0
  %549 = vmatprep.subr.bf16.mxu0 0
  %550 = vmatpush1.bf16.msra.mxu0 0
  %551 = vmatprep.subr.bf16.mxu0 0
  %552 = vmatpush1.bf16.msra.mxu0 0
  %553 = vmatprep.subr.bf16.mxu0 0
  %554 = vmatpush1.bf16.msra.mxu0 0
  %555 = vmatprep.mubr.bf16.mxu0 0
  %556 = vmatmul.mubr.bf16.gmra.mrb[0].mxu0 %v518
  %v557 = vpop.f32.mrb[0].mxu0
  %v558 = vadd.f32 %v491, %v557
  %v559 = vpop.f32.mrb[0].mxu0
  %v560 = vpop.f32.mrb[0].mxu0
  %v561 = vadd.f32 %v491, %v560
  %v562 = vpop.f32.mrb[0].mxu0
  %563 = vmatprep.mubr.bf16.mxu0 0
  %564 = vmatmul.mubr.bf16.gmra.mrb[0].mxu0 %v521
  %v565 = vpop.f32.mrb[0].mxu0
  %v566 = vadd.f32 %v491, %v565
  %v567 = vpop.f32.mrb[0].mxu0
  %v568 = vpop.f32.mrb[0].mxu0
  %v569 = vadd.f32 %v491, %v568
  %v570 = vpop.f32.mrb[0].mxu0
  %571 = vdwg.mxu0
  %v572 = vmax.f32 %v558, 0.0
  %v573 = vmax.f32 %v561, 0.0
  %v574 = vmax.f32 %v566, 0.0
  %v575 = vmax.f32 %v569, 0.0
  %v576 = vpack.c.bf16 %v573, %v572
  %v577 = vpack.c.bf16 %v575, %v574
  %v578 = vld [vmem:[%s11] sm:$0xf]
  %v579 = vld [vmem:[%s11 + $0x4] sm:$0xf]
  %v580 = vld [vmem:[%s11 + $0x8] sm:$0xf]
  %v581 = vld [vmem:[%s11 + $0xc] sm:$0xf]
  %v582 = vld [vmem:[%s11 + $0x10] sm:$0xf]
  %v583 = vld [vmem:[%s11 + $0x14] sm:$0xf]
  %v584 = vld [vmem:[%s11 + $0x18] sm:$0xf]
  %v585 = vld [vmem:[%s11 + $0x1c] sm:$0xf]
  %v586 = vld [vmem:[%s12] sm:$0x1]
  %v588 = vlaneseq
  %v589 = vshrl.u32 %v588, 7
  %v590 = vsub.s32 0, %v589
  %v591 = vrot.slane %v586, %v590
  %v601 = vunpack.c.l.b16 %v578
  %v602 = vunpack.c.l.b16 %v579
  %v603 = vunpack.c.l.b16 %v580
  %v604 = vunpack.c.l.b16 %v581
  %v605 = vunpack.c.l.b16 %v582
  %v606 = vunpack.c.l.b16 %v583
  %v607 = vunpack.c.l.b16 %v584
  %v608 = vunpack.c.l.b16 %v585
  %v609 = vpack.c.b16 %v602, %v601
  %v610 = vpack.c.b16 %v604, %v603
  %v611 = vpack.c.b16 %v606, %v605
  %v612 = vpack.c.b16 %v608, %v607
  %v618 = vsel %vm216, %v576, 0
  %v621 = vsel %vm216, %v577, 0
  %623 = vmatprep.subr.bf16.mxu0 0
  %624 = vmatpush1.bf16.msra.mxu0 %v609
  %625 = vmatprep.subr.bf16.mxu0 0
  %626 = vmatpush1.bf16.msra.mxu0 %v610
  %627 = vmatprep.subr.bf16.mxu0 0
  %628 = vmatpush1.bf16.msra.mxu0 %v611
  %629 = vmatprep.subr.bf16.mxu0 0
  %630 = vmatpush1.bf16.msra.mxu0 %v612
  %631 = vmatprep.subr.bf16.mxu0 0
  %632 = vmatpush1.bf16.msra.mxu0 0
  %633 = vmatprep.subr.bf16.mxu0 0
  %634 = vmatpush1.bf16.msra.mxu0 0
  %635 = vmatprep.subr.bf16.mxu0 0
  %636 = vmatpush1.bf16.msra.mxu0 0
  %637 = vmatprep.subr.bf16.mxu0 0
  %638 = vmatpush1.bf16.msra.mxu0 0
  %639 = vmatprep.subr.bf16.mxu0 0
  %640 = vmatpush1.bf16.msra.mxu0 0
  %641 = vmatprep.subr.bf16.mxu0 0
  %642 = vmatpush1.bf16.msra.mxu0 0
  %643 = vmatprep.subr.bf16.mxu0 0
  %644 = vmatpush1.bf16.msra.mxu0 0
  %645 = vmatprep.subr.bf16.mxu0 0
  %646 = vmatpush1.bf16.msra.mxu0 0
  %647 = vmatprep.subr.bf16.mxu0 0
  %648 = vmatpush1.bf16.msra.mxu0 0
  %649 = vmatprep.subr.bf16.mxu0 0
  %650 = vmatpush1.bf16.msra.mxu0 0
  %651 = vmatprep.subr.bf16.mxu0 0
  %652 = vmatpush1.bf16.msra.mxu0 0
  %653 = vmatprep.subr.bf16.mxu0 0
  %654 = vmatpush1.bf16.msra.mxu0 0
  %655 = vmatprep.mubr.bf16.mxu0 0
  %656 = vmatmul.mubr.bf16.gmra.mrb[0].mxu0 %v618
  %v657 = vpop.f32.mrb[0].mxu0
  %v658 = vadd.f32 %v591, %v657
  %v659 = vpop.f32.mrb[0].mxu0
  %v660 = vpop.f32.mrb[0].mxu0
  %v661 = vadd.f32 %v591, %v660
  %v662 = vpop.f32.mrb[0].mxu0
  %663 = vmatprep.mubr.bf16.mxu0 0
  %664 = vmatmul.mubr.bf16.gmra.mrb[0].mxu0 %v621
  %v665 = vpop.f32.mrb[0].mxu0
  %v666 = vadd.f32 %v591, %v665
  %v667 = vpop.f32.mrb[0].mxu0
  %v668 = vpop.f32.mrb[0].mxu0
  %v669 = vadd.f32 %v591, %v668
  %v670 = vpop.f32.mrb[0].mxu0
  %671 = vdwg.mxu0
  %672 = vst [vmem:[%s13] sm:$0xff] %v658
  %673 = vst [vmem:[%s13 + $0x8] sm:$0xff] %v661
  %674 = vst [vmem:[%s13 + $0x10] sm:$0xff] %v666
  %675 = vst [vmem:[%s13 + $0x18] sm:$0xff] %v669
  // Predicated region
  $region54: #{graph_nbeats_forward.7} parent=0 // pred_check
    _
  $region55: #{graph_nbeats_forward.7} parent=0 // pred_check_branch
    %677 = sbr.rel (0) target = $region57
  $region56: #{graph_nbeats_forward.7} parent=0 // pred_region
    _
  $region57: #{graph_nbeats_forward.7} parent=0 // pred_fallthru
    _
  // Predicated region
  $region58: #{graph_nbeats_forward.7} parent=0 // pred_check
    _
  $region59: #{graph_nbeats_forward.7} parent=0 // pred_check_branch
    %679 = sbr.rel (0) target = $region61
  $region60: #{graph_nbeats_forward.7} parent=0 // pred_region
    _
  $region61: #{graph_nbeats_forward.7} parent=0 // pred_fallthru
    _

</llo_original>
